<compile_context>
chip_gen: v7x
topology: tpu7x:2x2x1
jax: 0.10.0
libtpu: 0.0.40
codegen_flags: <defaults>
</compile_context>

<pallas_src>
import functools

import jax
import jax.numpy as jnp
from jax.experimental import pallas as pl
from jax.experimental.pallas import tpu as pltpu

NEG_BIG = -9e15  # matches torch's -9000000000000000.0 mask value


# ---------------------------------------------------------------------------
# VMEM budget / row-block sizing
# ---------------------------------------------------------------------------
def _vmem_limit_bytes():
    try:
        phys = int(pltpu.get_tpu_info().vmem_capacity_bytes)
    except Exception:
        phys = 64 * 1024 * 1024            # conservative (v7x per-TC physical)
    # stay below physical: headroom for double-buffered windows + Mosaic scratch
    return max(min(phys - 16 * 1024 * 1024, 100 * 1024 * 1024), 32 * 1024 * 1024)


def _pick_row_block(n, fp, vmem_limit):
    """Largest row block (multiple of 128 dividing N, or N itself) whose
    attention working set fits the VMEM budget."""
    if n % 128 != 0:
        # TODO(synk): pad N to a multiple of 128 (masked rows) and/or column-tile
        # adj with an online (flash-style) row softmax for very large graphs.
        return n
    resident = n * fp * 2 + n * 4          # wh (bf16) + s2t (f32), whole graph
    budget = int(vmem_limit * 0.6) - resident
    # per attention row: adj int8 (double-buffered) + ~4 f32 (tr, N) temporaries
    per_row = n * (2 * 1 + 4 * 4) + fp * 4 * 2
    max_tr = max(budget // max(per_row, 1), 128)
    if max_tr >= n:
        return n
    tr = (max_tr // 128) * 128
    while tr > 128 and n % tr != 0:
        tr -= 128
    return max(tr, 128)


# ---------------------------------------------------------------------------
# Kernels
# ---------------------------------------------------------------------------
def _proj_kernel(x_ref, edge_ref, w_ref, wa1_ref, wa2t_ref, c3_ref,
                 wh_ref, u_ref, s2t_ref):
    """Per-(row block, head) projection prologue.

    wh[i, :]  = x[i] @ W_h                              (bf16 MXU, f32 acc)
    u[i]      = x[i] . (W_h a1_h) + edge[i] . (We_h a3_h)   (f32)
    s2t[0, j] = (W_h a2_h) . x[j]                       (lane-wide row, f32)
    """
    x = x_ref[...]                                          # (tr, Fin) f32
    wh = jnp.dot(x.astype(jnp.bfloat16), w_ref[...],
                 preferred_element_type=jnp.float32)        # (tr, Fp)
    wh_ref[...] = wh.astype(wh_ref.dtype)

    u = jnp.dot(x, wa1_ref[...], preferred_element_type=jnp.float32)  # (tr, 1)
    s3 = jnp.sum(edge_ref[...] * c3_ref[...], axis=1, keepdims=True)  # (tr, 1)
    u_ref[...] = u + s3

    # target scores emitted lane-wide: (1, Fin) x (tr, Fin) -> (1, tr)
    s2t_ref[...] = jax.lax.dot_general(
        wa2t_ref[...], x, (((1,), (1,)), ((), ())),
        preferred_element_type=jnp.float32)


def _attn_kernel(u_ref, s2t_ref, adj_ref, wh_ref, out_ref, *, alpha):
    """One (row block, head) step of masked attention + aggregation."""
    e = u_ref[...] + s2t_ref[...]                       # (tr,1)+(1,N) -> (tr,N)
    e = jnp.maximum(e, alpha * e)                       # LeakyReLU (0 < alpha < 1)
    e = jnp.where(adj_ref[...] != 0, e, NEG_BIG)        # int8 mask, single select
    m = jnp.max(e, axis=1, keepdims=True)
    p = jnp.exp(e - m)                                  # masked -> exp(-huge) = 0
    attn = p * pl.reciprocal(jnp.sum(p, axis=1, keepdims=True), approx=True)
    hp = jnp.dot(attn.astype(wh_ref.dtype), wh_ref[...],
                 preferred_element_type=jnp.float32)    # (tr, Fp)
    out_ref[...] = jnp.where(hp > 0, hp, jnp.exp(hp) - 1.0)   # ELU (concat=True)


# ---------------------------------------------------------------------------
# Host-side weight packing + layer wrapper
# ---------------------------------------------------------------------------
def _pack_heads(head_params):
    """Stack per-head weights and fold `a` into the projection:
       W3 (H,Fin,Fp) bf16, wa1 (H,Fin,1), wa2t (H,1,Fin), c3 (H,1,E)."""
    fp = head_params[0]["W"].shape[1]
    Ws, wa1s, wa2s, c3s = [], [], [], []
    for p in head_params:
        W, a, We = p["W"], p["a"], p["We"]
        a1 = a[0 * fp:1 * fp, 0]
        a2 = a[1 * fp:2 * fp, 0]
        a3 = a[2 * fp:3 * fp, 0]
        Ws.append(W)
        wa1s.append(W @ a1)            # (Fin,)
        wa2s.append(W @ a2)            # (Fin,)
        c3s.append(We @ a3)            # (E,)
    W3 = jnp.stack(Ws, axis=0).astype(jnp.bfloat16)      # (H, Fin, Fp)
    wa1 = jnp.stack(wa1s, axis=0)[:, :, None]            # (H, Fin, 1)  f32
    wa2t = jnp.stack(wa2s, axis=0)[:, None, :]           # (H, 1, Fin)  f32
    c3 = jnp.stack(c3s, axis=0)[:, None, :]              # (H, 1, E)    f32
    return W3, wa1, wa2t, c3


def _gat_layer(x, edge, adj_i8, W3, wa1, wa2t, c3, *, alpha, row_block,
               vmem_limit):
    """One GraphAttentionLayer (all heads) -> per-head outputs (H, N, Fp) f32."""
    N, fin = x.shape
    H, _, fp = W3.shape
    E = c3.shape[2]

    tr = _pick_row_block(N, fp, vmem_limit) if row_block is None else min(row_block, N)
    assert N % tr == 0 and (tr == N or tr % 128 == 0), (N, tr)
    R = N // tr

    cparams = pltpu.CompilerParams(
        dimension_semantics=("parallel", "arbitrary"),   # rows split on v7x 2-TC
        vmem_limit_bytes=vmem_limit)

    # --- prologue: Wh / source scores / lane-wide target scores -------------
    wh, u, s2t = pl.pallas_call(
        _proj_kernel,
        out_shape=(jax.ShapeDtypeStruct((H, N, fp), jnp.bfloat16),
                   jax.ShapeDtypeStruct((H, N, 1), jnp.float32),
                   jax.ShapeDtypeStruct((H, 1, N), jnp.float32)),
        grid=(R, H),
        in_specs=[
            pl.BlockSpec((tr, fin), lambda r, h: (r, 0)),      # x row block
            pl.BlockSpec((tr, E), lambda r, h: (r, 0)),        # edge row block
            pl.BlockSpec((None, fin, fp), lambda r, h: (h, 0, 0)),  # W_h
            pl.BlockSpec((None, fin, 1), lambda r, h: (h, 0, 0)),   # W_h a1_h
            pl.BlockSpec((None, 1, fin), lambda r, h: (h, 0, 0)),   # (W_h a2_h)^T
            pl.BlockSpec((None, 1, E), lambda r, h: (h, 0, 0)),     # We_h a3_h
        ],
        out_specs=(
            pl.BlockSpec((None, tr, fp), lambda r, h: (h, r, 0)),   # Wh
            pl.BlockSpec((None, tr, 1), lambda r, h: (h, r, 0)),    # u
            pl.BlockSpec((None, 1, tr), lambda r, h: (h, 0, r)),    # s2t
        ),
        compiler_params=cparams,
    )(x, edge, W3, wa1, wa2t, c3)

    # --- attention: row-blocked adj, head as inner grid axis ----------------
    # adj index_map is independent of h -> the int8 (tr, N) block stays resident
    # across all heads of a row block.
    # TODO(synk): for v5e with exposed adj DMA, add pipeline_mode=pl.Buffered(3).
    hout = pl.pallas_call(
        functools.partial(_attn_kernel, alpha=alpha),
        out_shape=jax.ShapeDtypeStruct((H, N, fp), jnp.float32),
        grid=(R, H),
        in_specs=[
            pl.BlockSpec((None, tr, 1), lambda r, h: (h, r, 0)),    # u rows
            pl.BlockSpec((None, 1, N), lambda r, h: (h, 0, 0)),     # s2t (all cols)
            pl.BlockSpec((tr, N), lambda r, h: (r, 0)),             # adj int8 rows
            pl.BlockSpec((None, N, fp), lambda r, h: (h, 0, 0)),    # Wh (all rows)
        ],
        out_specs=pl.BlockSpec((None, tr, fp), lambda r, h: (h, r, 0)),
        compiler_params=cparams,
    )(u, s2t, adj_i8, wh)
    return hout


def gat_forward(params, x, edge, adj, *, alpha, row_block=None):
    """GAT.forward with dropout = 0.0 (identity).

    TODO(synk): dropout > 0 would need pltpu.prng_* masks inside the kernels.
    """
    N = x.shape[0]
    # adj is only used as a ">0" mask: carry it as int8 (4x less DMA / VMEM).
    adj_i8 = (adj > 0).astype(jnp.int8)
    vmem_limit = _vmem_limit_bytes()

    # ---- layer 1: all attention heads -------------------------------------
    W3, wa1, wa2t, c3 = _pack_heads(params["attentions"])
    h1 = _gat_layer(x, edge, adj_i8, W3, wa1, wa2t, c3,
                    alpha=alpha, row_block=row_block, vmem_limit=vmem_limit)
    H, _, nhid = h1.shape
    x2 = jnp.transpose(h1, (1, 0, 2)).reshape(N, H * nhid)  # head concat (tiny)

    # ---- layer 2: out_att (single head), row-blocked as well ---------------
    W3o, wa1o, wa2to, c3o = _pack_heads([params["out_att"]])
    h2 = _gat_layer(x2, edge, adj_i8, W3o, wa1o, wa2to, c3o,
                    alpha=alpha, row_block=row_block, vmem_limit=vmem_limit)
    y = h2[0]                                                # (N, nclass)

    # ---- GAT epilogue: outer F.elu + Softmax(dim=0) -------------------------
    # O(N*nclass): kept out of the kernel (plain XLA) so layer 2 stays row-blocked.
    y = jnp.where(y > 0, y, jnp.expm1(y))
    return jax.nn.softmax(y, axis=0)


# ---------------------------------------------------------------------------
# Deterministic parameter init (xavier_uniform_, gain=1.414) + JAX reference
# ---------------------------------------------------------------------------
def _xavier_uniform(key, shape, gain=1.414):
    fan_in, fan_out = shape[0], shape[1]
    bound = gain * jnp.sqrt(6.0 / (fan_in + fan_out))
    return jax.random.uniform(key, shape, jnp.float32, -bound, bound)


def init_gat_params(key, nfeat, nhid, nclass, nheads, in_edge_features=1):
    params = {"attentions": [], "out_att": None}
    for _ in range(nheads):
        key, k1, k2, k3 = jax.random.split(key, 4)
        params["attentions"].append({
            "W": _xavier_uniform(k1, (nfeat, nhid)),
            "a": _xavier_uniform(k2, (3 * nhid, 1)),
            "We": _xavier_uniform(k3, (in_edge_features, nhid)),
        })
    key, k1, k2, k3 = jax.random.split(key, 4)
    params["out_att"] = {
        "W": _xavier_uniform(k1, (nhid * nheads, nclass)),
        "a": _xavier_uniform(k2, (3 * nclass, 1)),
        "We": _xavier_uniform(k3, (in_edge_features, nclass)),
    }
    return params


def _layer_ref(h, edge, adj, W, We, a, alpha):
    Fp = W.shape[1]
    Wh = h @ W
    WeE = edge @ We
    a1, a2, a3 = a[:Fp, 0], a[Fp:2 * Fp, 0], a[2 * Fp:, 0]
    e = (Wh @ a1 + WeE @ a3)[:, None] + (Wh @ a2)[None, :]
    e = jnp.where(e > 0, e, alpha * e)
    att = jnp.where(adj > 0, e, NEG_BIG)
    attn = jax.nn.softmax(att, axis=1)
    hp = attn @ Wh
    return jnp.where(hp > 0, hp, jnp.exp(hp) - 1.0)


def _gat_ref(params, x, edge, adj, alpha):
    heads = [_layer_ref(x, edge, adj, p["W"], p["We"], p["a"], alpha)
             for p in params["attentions"]]
    x = jnp.concatenate(heads, axis=1)
    p = params["out_att"]
    x = _layer_ref(x, edge, adj, p["W"], p["We"], p["a"], alpha)
    x = jnp.where(x > 0, x, jnp.exp(x) - 1.0)
    return jax.nn.softmax(x, axis=0)


# ---------------------------------------------------------------------------
if __name__ == "__main__":
    # Small but non-trivial shapes: N=256 with row_block=128 exercises the
    # multi-row-block + multi-head grid (2 x 4 steps per call).
    N, nfeat, nhid, nclass, nheads = 256, 64, 16, 8, 4
    alpha = 0.2
    in_edge_features = 1

    key = jax.random.PRNGKey(0)
    kx, ke, ka, kp = jax.random.split(key, 4)

    x = jax.random.normal(kx, (N, nfeat), jnp.float32)
    edge = jax.random.normal(ke, (N, in_edge_features), jnp.float32)
    adj = (jax.random.uniform(ka, (N, N)) > 0.85).astype(jnp.float32)
    adj = jnp.maximum(adj, jnp.eye(N, dtype=jnp.float32))  # self loops

    params = init_gat_params(kp, nfeat, nhid, nclass, nheads, in_edge_features)

    fwd = jax.jit(functools.partial(gat_forward, alpha=alpha, row_block=128))
    out = jax.block_until_ready(fwd(params, x, edge, adj))

    ref = _gat_ref(params, x, edge, adj, alpha)
    assert out.shape == (N, nclass)
    assert bool(jnp.all(jnp.isfinite(out)))
    assert bool(jnp.allclose(out, ref, rtol=5e-2, atol=5e-3)), (
        "mismatch vs JAX reference: max abs diff = "
        f"{float(jnp.max(jnp.abs(out - ref)))}")

    print("KERNEL_OK")
</pallas_src>

<mosaic_0001>
module attributes {stable_mosaic.version = 11 : i64} {
  func.func @_attn_kernel(%arg0: i32, %arg1: i32, %arg2: memref<1x128x1xf32, #tpu.memory_space<vmem>>, %arg3: memref<1x1x256xf32, #tpu.memory_space<vmem>>, %arg4: memref<128x256xi8, #tpu.memory_space<vmem>>, %arg5: memref<1x256x16xbf16, #tpu.memory_space<vmem>>, %arg6: memref<1x128x16xf32, #tpu.memory_space<vmem>>) attributes {dimension_semantics = [#tpu.dimension_semantics<parallel>, #tpu.dimension_semantics<arbitrary>], iteration_bounds = array<i64: 2, 4>, scalar_prefetch = 0 : i64, scratch_operands = 0 : i64, tpu.core_type = #tpu.core_type<tc>, window_params = [{transform_indices = @transform_0, window_bounds = array<i64: 1, 128, 1>}, {transform_indices = @transform_1, window_bounds = array<i64: 1, 1, 256>}, {transform_indices = @transform_2, window_bounds = array<i64: 128, 256>}, {transform_indices = @transform_3, window_bounds = array<i64: 1, 256, 16>}, {transform_indices = @transform_4, window_bounds = array<i64: 1, 128, 16>}]} {
    %c0 = arith.constant 0 : index
    %c0_0 = arith.constant 0 : index
    %c0_1 = arith.constant 0 : index
    %0 = vector.load %arg2[%c0, %c0_0, %c0_1] : memref<1x128x1xf32, #tpu.memory_space<vmem>>, vector<1x128x1xf32>
    %1 = vector.shape_cast %0 : vector<1x128x1xf32> to vector<128x1xf32>
    %c0_2 = arith.constant 0 : index
    %c0_3 = arith.constant 0 : index
    %c0_4 = arith.constant 0 : index
    %2 = vector.load %arg3[%c0_2, %c0_3, %c0_4] : memref<1x1x256xf32, #tpu.memory_space<vmem>>, vector<1x1x256xf32>
    %3 = vector.shape_cast %2 : vector<1x1x256xf32> to vector<1x256xf32>
    %4 = vector.broadcast %1 : vector<128x1xf32> to vector<128x256xf32>
    %5 = vector.broadcast %3 : vector<1x256xf32> to vector<128x256xf32>
    %6 = arith.addf %4, %5 : vector<128x256xf32>
    %cst = arith.constant 2.000000e-01 : f32
    %7 = vector.broadcast %cst : f32 to vector<128x256xf32>
    %8 = arith.mulf %7, %6 : vector<128x256xf32>
    %9 = arith.maximumf %6, %8 : vector<128x256xf32>
    %c0_5 = arith.constant 0 : index
    %c0_6 = arith.constant 0 : index
    %10 = vector.load %arg4[%c0_5, %c0_6] : memref<128x256xi8, #tpu.memory_space<vmem>>, vector<128x256xi8>
    %c0_i8 = arith.constant 0 : i8
    %11 = vector.broadcast %c0_i8 : i8 to vector<128x256xi8>
    %12 = arith.cmpi ne, %10, %11 : vector<128x256xi8>
    %cst_7 = arith.constant -9.000000e+15 : f32
    %13 = vector.broadcast %cst_7 : f32 to vector<128x256xf32>
    %14 = arith.select %12, %9, %13 : vector<128x256xi1>, vector<128x256xf32>
    %cst_8 = arith.constant dense<0xFF800000> : vector<128xf32>
    %15 = vector.multi_reduction <maximumf>, %14, %cst_8 [1] : vector<128x256xf32> to vector<128xf32>
    %16 = vector.shape_cast %15 : vector<128xf32> to vector<128x1xf32>
    %17 = vector.broadcast %16 : vector<128x1xf32> to vector<128x256xf32>
    %18 = arith.subf %14, %17 : vector<128x256xf32>
    %19 = math.exp %18 : vector<128x256xf32>
    %cst_9 = arith.constant dense<0.000000e+00> : vector<128xf32>
    %20 = vector.multi_reduction <add>, %19, %cst_9 [1] : vector<128x256xf32> to vector<128xf32>
    %21 = vector.shape_cast %20 : vector<128xf32> to vector<128x1xf32>
    %22 = tpu.reciprocal %21 {approx = true} : vector<128x1xf32> -> vector<128x1xf32>
    %23 = vector.broadcast %22 : vector<128x1xf32> to vector<128x256xf32>
    %24 = arith.mulf %19, %23 : vector<128x256xf32>
    %25 = arith.truncf %24 : vector<128x256xf32> to vector<128x256xbf16>
    %c0_10 = arith.constant 0 : index
    %c0_11 = arith.constant 0 : index
    %c0_12 = arith.constant 0 : index
    %26 = vector.load %arg5[%c0_10, %c0_11, %c0_12] : memref<1x256x16xbf16, #tpu.memory_space<vmem>>, vector<1x256x16xbf16>
    %27 = vector.shape_cast %26 : vector<1x256x16xbf16> to vector<256x16xbf16>
    %cst_13 = arith.constant dense<0.000000e+00> : vector<128x16xf32>
    %28 = tpu.matmul %25, %27, %cst_13 {dimension_numbers = #tpu.dot_dimension_numbers<[1], [0], [0], [1], [0, 0, 1, 1], [], []>} : vector<128x256xbf16>, vector<256x16xbf16>, vector<128x16xf32> -> vector<128x16xf32>
    %cst_14 = arith.constant 0.000000e+00 : f32
    %29 = vector.broadcast %cst_14 : f32 to vector<128x16xf32>
    %30 = arith.cmpf ogt, %28, %29 : vector<128x16xf32>
    %31 = math.exp %28 : vector<128x16xf32>
    %cst_15 = arith.constant 1.000000e+00 : f32
    %32 = vector.broadcast %cst_15 : f32 to vector<128x16xf32>
    %33 = arith.subf %31, %32 : vector<128x16xf32>
    %34 = arith.select %30, %28, %33 : vector<128x16xi1>, vector<128x16xf32>
    %c0_16 = arith.constant 0 : index
    %c0_17 = arith.constant 0 : index
    %c0_18 = arith.constant 0 : index
    %35 = vector.load %arg6[%c0_16, %c0_17, %c0_18] : memref<1x128x16xf32, #tpu.memory_space<vmem>>, vector<1x128x16xf32>
    %36 = vector.shape_cast %35 : vector<1x128x16xf32> to vector<128x16xf32>
    %37 = vector.shape_cast %34 : vector<128x16xf32> to vector<1x128x16xf32>
    tpu.vector_store %arg6[%c0_16, %c0_17, %c0_18], %37 {strides = array<i32>} : memref<1x128x16xf32, #tpu.memory_space<vmem>>, vector<1x128x16xf32>,
    return
  }
  func.func @transform_0(%arg0: i32, %arg1: i32) -> (i32, i32, i32) {
    %c0_i32 = arith.constant 0 : i32
    %c0_i32_0 = arith.constant 0 : i32
    return %arg1, %arg0, %c0_i32 : i32, i32, i32
  }
  func.func @transform_1(%arg0: i32, %arg1: i32) -> (i32, i32, i32) {
    %c0_i32 = arith.constant 0 : i32
    %c0_i32_0 = arith.constant 0 : i32
    %c0_i32_1 = arith.constant 0 : i32
    return %arg1, %c0_i32, %c0_i32_0 : i32, i32, i32
  }
  func.func @transform_2(%arg0: i32, %arg1: i32) -> (i32, i32) {
    %c0_i32 = arith.constant 0 : i32
    %c0_i32_0 = arith.constant 0 : i32
    return %arg0, %c0_i32 : i32, i32
  }
  func.func @transform_3(%arg0: i32, %arg1: i32) -> (i32, i32, i32) {
    %c0_i32 = arith.constant 0 : i32
    %c0_i32_0 = arith.constant 0 : i32
    %c0_i32_1 = arith.constant 0 : i32
    return %arg1, %c0_i32, %c0_i32_0 : i32, i32, i32
  }
  func.func @transform_4(%arg0: i32, %arg1: i32) -> (i32, i32, i32) {
    %c0_i32 = arith.constant 0 : i32
    %c0_i32_0 = arith.constant 0 : i32
    return %arg1, %arg0, %c0_i32 : i32, i32, i32
  }
}

module attributes {stable_mosaic.version = 11 : i64} {
  func.func @_proj_kernel(%arg0: i32, %arg1: i32, %arg2: memref<128x64xf32, #tpu.memory_space<vmem>>, %arg3: memref<128x1xf32, #tpu.memory_space<vmem>>, %arg4: memref<1x64x16xbf16, #tpu.memory_space<vmem>>, %arg5: memref<1x64x1xf32, #tpu.memory_space<vmem>>, %arg6: memref<1x1x64xf32, #tpu.memory_space<vmem>>, %arg7: memref<1x1x1xf32, #tpu.memory_space<vmem>>, %arg8: memref<1x128x16xbf16, #tpu.memory_space<vmem>>, %arg9: memref<1x128x1xf32, #tpu.memory_space<vmem>>, %arg10: memref<1x1x128xf32, #tpu.memory_space<vmem>>) attributes {dimension_semantics = [#tpu.dimension_semantics<parallel>, #tpu.dimension_semantics<arbitrary>], iteration_bounds = array<i64: 2, 4>, scalar_prefetch = 0 : i64, scratch_operands = 0 : i64, tpu.core_type = #tpu.core_type<tc>, window_params = [{transform_indices = @transform_0, window_bounds = array<i64: 128, 64>}, {transform_indices = @transform_1, window_bounds = array<i64: 128, 1>}, {transform_indices = @transform_2, window_bounds = array<i64: 1, 64, 16>}, {transform_indices = @transform_3, window_bounds = array<i64: 1, 64, 1>}, {transform_indices = @transform_4, window_bounds = array<i64: 1, 1, 64>}, {transform_indices = @transform_5, window_bounds = array<i64: 1, 1, 1>}, {transform_indices = @transform_6, window_bounds = array<i64: 1, 128, 16>}, {transform_indices = @transform_7, window_bounds = array<i64: 1, 128, 1>}, {transform_indices = @transform_8, window_bounds = array<i64: 1, 1, 128>}]} {
    %c0 = arith.constant 0 : index
    %c0_0 = arith.constant 0 : index
    %0 = vector.load %arg2[%c0, %c0_0] : memref<128x64xf32, #tpu.memory_space<vmem>>, vector<128x64xf32>
    %1 = arith.truncf %0 : vector<128x64xf32> to vector<128x64xbf16>
    %c0_1 = arith.constant 0 : index
    %c0_2 = arith.constant 0 : index
    %c0_3 = arith.constant 0 : index
    %2 = vector.load %arg4[%c0_1, %c0_2, %c0_3] : memref<1x64x16xbf16, #tpu.memory_space<vmem>>, vector<1x64x16xbf16>
    %3 = vector.shape_cast %2 : vector<1x64x16xbf16> to vector<64x16xbf16>
    %cst = arith.constant dense<0.000000e+00> : vector<128x16xf32>
    %4 = tpu.matmul %1, %3, %cst {dimension_numbers = #tpu.dot_dimension_numbers<[1], [0], [0], [1], [0, 0, 1, 1], [], []>} : vector<128x64xbf16>, vector<64x16xbf16>, vector<128x16xf32> -> vector<128x16xf32>
    %5 = arith.truncf %4 : vector<128x16xf32> to vector<128x16xbf16>
    %c0_4 = arith.constant 0 : index
    %c0_5 = arith.constant 0 : index
    %c0_6 = arith.constant 0 : index
    %6 = vector.load %arg8[%c0_4, %c0_5, %c0_6] : memref<1x128x16xbf16, #tpu.memory_space<vmem>>, vector<1x128x16xbf16>
    %7 = vector.shape_cast %6 : vector<1x128x16xbf16> to vector<128x16xbf16>
    %8 = vector.shape_cast %5 : vector<128x16xbf16> to vector<1x128x16xbf16>
    tpu.vector_store %arg8[%c0_4, %c0_5, %c0_6], %8 {strides = array<i32>} : memref<1x128x16xbf16, #tpu.memory_space<vmem>>, vector<1x128x16xbf16>,
    %c0_7 = arith.constant 0 : index
    %c0_8 = arith.constant 0 : index
    %c0_9 = arith.constant 0 : index
    %9 = vector.load %arg5[%c0_7, %c0_8, %c0_9] : memref<1x64x1xf32, #tpu.memory_space<vmem>>, vector<1x64x1xf32>
    %10 = vector.shape_cast %9 : vector<1x64x1xf32> to vector<64x1xf32>
    %cst_10 = arith.constant dense<0.000000e+00> : vector<128x1xf32>
    %11 = tpu.matmul %0, %10, %cst_10 {dimension_numbers = #tpu.dot_dimension_numbers<[1], [0], [0], [1], [0, 0, 1, 1], [], []>} : vector<128x64xf32>, vector<64x1xf32>, vector<128x1xf32> -> vector<128x1xf32>
    %c0_11 = arith.constant 0 : index
    %c0_12 = arith.constant 0 : index
    %12 = vector.load %arg3[%c0_11, %c0_12] : memref<128x1xf32, #tpu.memory_space<vmem>>, vector<128x1xf32>
    %c0_13 = arith.constant 0 : index
    %c0_14 = arith.constant 0 : index
    %c0_15 = arith.constant 0 : index
    %13 = vector.load %arg7[%c0_13, %c0_14, %c0_15] : memref<1x1x1xf32, #tpu.memory_space<vmem>>, vector<1x1x1xf32>
    %14 = vector.shape_cast %13 : vector<1x1x1xf32> to vector<1x1xf32>
    %15 = vector.broadcast %14 : vector<1x1xf32> to vector<128x1xf32>
    %16 = arith.mulf %12, %15 : vector<128x1xf32>
    %cst_16 = arith.constant dense<0.000000e+00> : vector<128xf32>
    %17 = vector.multi_reduction <add>, %16, %cst_16 [1] : vector<128x1xf32> to vector<128xf32>
    %18 = vector.shape_cast %17 : vector<128xf32> to vector<128x1xf32>
    %19 = arith.addf %11, %18 : vector<128x1xf32>
    %c0_17 = arith.constant 0 : index
    %c0_18 = arith.constant 0 : index
    %c0_19 = arith.constant 0 : index
    %20 = vector.load %arg9[%c0_17, %c0_18, %c0_19] : memref<1x128x1xf32, #tpu.memory_space<vmem>>, vector<1x128x1xf32>
    %21 = vector.shape_cast %20 : vector<1x128x1xf32> to vector<128x1xf32>
    %22 = vector.shape_cast %19 : vector<128x1xf32> to vector<1x128x1xf32>
    tpu.vector_store %arg9[%c0_17, %c0_18, %c0_19], %22 {strides = array<i32>} : memref<1x128x1xf32, #tpu.memory_space<vmem>>, vector<1x128x1xf32>,
    %c0_20 = arith.constant 0 : index
    %c0_21 = arith.constant 0 : index
    %c0_22 = arith.constant 0 : index
    %23 = vector.load %arg6[%c0_20, %c0_21, %c0_22] : memref<1x1x64xf32, #tpu.memory_space<vmem>>, vector<1x1x64xf32>
    %24 = vector.shape_cast %23 : vector<1x1x64xf32> to vector<1x64xf32>
    %cst_23 = arith.constant dense<0.000000e+00> : vector<1x128xf32>
    %25 = tpu.matmul %24, %0, %cst_23 {dimension_numbers = #tpu.dot_dimension_numbers<[1], [1], [0], [0], [0, 0, 1, 0], [], []>} : vector<1x64xf32>, vector<128x64xf32>, vector<1x128xf32> -> vector<1x128xf32>
    %c0_24 = arith.constant 0 : index
    %c0_25 = arith.constant 0 : index
    %c0_26 = arith.constant 0 : index
    %26 = vector.load %arg10[%c0_24, %c0_25, %c0_26] : memref<1x1x128xf32, #tpu.memory_space<vmem>>, vector<1x1x128xf32>
    %27 = vector.shape_cast %26 : vector<1x1x128xf32> to vector<1x128xf32>
    %28 = vector.shape_cast %25 : vector<1x128xf32> to vector<1x1x128xf32>
    tpu.vector_store %arg10[%c0_24, %c0_25, %c0_26], %28 {strides = array<i32>} : memref<1x1x128xf32, #tpu.memory_space<vmem>>, vector<1x1x128xf32>,
    return
  }
  func.func @transform_0(%arg0: i32, %arg1: i32) -> (i32, i32) {
    %c0_i32 = arith.constant 0 : i32
    %c0_i32_0 = arith.constant 0 : i32
    return %arg0, %c0_i32 : i32, i32
  }
  func.func @transform_1(%arg0: i32, %arg1: i32) -> (i32, i32) {
    %c0_i32 = arith.constant 0 : i32
    %c0_i32_0 = arith.constant 0 : i32
    return %arg0, %c0_i32 : i32, i32
  }
  func.func @transform_2(%arg0: i32, %arg1: i32) -> (i32, i32, i32) {
    %c0_i32 = arith.constant 0 : i32
    %c0_i32_0 = arith.constant 0 : i32
    %c0_i32_1 = arith.constant 0 : i32
    return %arg1, %c0_i32, %c0_i32_0 : i32, i32, i32
  }
  func.func @transform_3(%arg0: i32, %arg1: i32) -> (i32, i32, i32) {
    %c0_i32 = arith.constant 0 : i32
    %c0_i32_0 = arith.constant 0 : i32
    %c0_i32_1 = arith.constant 0 : i32
    return %arg1, %c0_i32, %c0_i32_0 : i32, i32, i32
  }
  func.func @transform_4(%arg0: i32, %arg1: i32) -> (i32, i32, i32) {
    %c0_i32 = arith.constant 0 : i32
    %c0_i32_0 = arith.constant 0 : i32
    %c0_i32_1 = arith.constant 0 : i32
    return %arg1, %c0_i32, %c0_i32_0 : i32, i32, i32
  }
  func.func @transform_5(%arg0: i32, %arg1: i32) -> (i32, i32, i32) {
    %c0_i32 = arith.constant 0 : i32
    %c0_i32_0 = arith.constant 0 : i32
    %c0_i32_1 = arith.constant 0 : i32
    return %arg1, %c0_i32, %c0_i32_0 : i32, i32, i32
  }
  func.func @transform_6(%arg0: i32, %arg1: i32) -> (i32, i32, i32) {
    %c0_i32 = arith.constant 0 : i32
    %c0_i32_0 = arith.constant 0 : i32
    return %arg1, %arg0, %c0_i32 : i32, i32, i32
  }
  func.func @transform_7(%arg0: i32, %arg1: i32) -> (i32, i32, i32) {
    %c0_i32 = arith.constant 0 : i32
    %c0_i32_0 = arith.constant 0 : i32
    return %arg1, %arg0, %c0_i32 : i32, i32, i32
  }
  func.func @transform_8(%arg0: i32, %arg1: i32) -> (i32, i32, i32) {
    %c0_i32 = arith.constant 0 : i32
    %c0_i32_0 = arith.constant 0 : i32
    return %arg1, %c0_i32, %arg0 : i32, i32, i32
  }
}

module attributes {stable_mosaic.version = 11 : i64} {
  func.func @_attn_kernel(%arg0: i32, %arg1: i32, %arg2: memref<1x128x1xf32, #tpu.memory_space<vmem>>, %arg3: memref<1x1x256xf32, #tpu.memory_space<vmem>>, %arg4: memref<128x256xi8, #tpu.memory_space<vmem>>, %arg5: memref<1x256x8xbf16, #tpu.memory_space<vmem>>, %arg6: memref<1x128x8xf32, #tpu.memory_space<vmem>>) attributes {dimension_semantics = [#tpu.dimension_semantics<parallel>, #tpu.dimension_semantics<arbitrary>], iteration_bounds = array<i64: 2, 1>, scalar_prefetch = 0 : i64, scratch_operands = 0 : i64, tpu.core_type = #tpu.core_type<tc>, window_params = [{transform_indices = @transform_0, window_bounds = array<i64: 1, 128, 1>}, {transform_indices = @transform_1, window_bounds = array<i64: 1, 1, 256>}, {transform_indices = @transform_2, window_bounds = array<i64: 128, 256>}, {transform_indices = @transform_3, window_bounds = array<i64: 1, 256, 8>}, {transform_indices = @transform_4, window_bounds = array<i64: 1, 128, 8>}]} {
    %c0 = arith.constant 0 : index
    %c0_0 = arith.constant 0 : index
    %c0_1 = arith.constant 0 : index
    %0 = vector.load %arg2[%c0, %c0_0, %c0_1] : memref<1x128x1xf32, #tpu.memory_space<vmem>>, vector<1x128x1xf32>
    %1 = vector.shape_cast %0 : vector<1x128x1xf32> to vector<128x1xf32>
    %c0_2 = arith.constant 0 : index
    %c0_3 = arith.constant 0 : index
    %c0_4 = arith.constant 0 : index
    %2 = vector.load %arg3[%c0_2, %c0_3, %c0_4] : memref<1x1x256xf32, #tpu.memory_space<vmem>>, vector<1x1x256xf32>
    %3 = vector.shape_cast %2 : vector<1x1x256xf32> to vector<1x256xf32>
    %4 = vector.broadcast %1 : vector<128x1xf32> to vector<128x256xf32>
    %5 = vector.broadcast %3 : vector<1x256xf32> to vector<128x256xf32>
    %6 = arith.addf %4, %5 : vector<128x256xf32>
    %cst = arith.constant 2.000000e-01 : f32
    %7 = vector.broadcast %cst : f32 to vector<128x256xf32>
    %8 = arith.mulf %7, %6 : vector<128x256xf32>
    %9 = arith.maximumf %6, %8 : vector<128x256xf32>
    %c0_5 = arith.constant 0 : index
    %c0_6 = arith.constant 0 : index
    %10 = vector.load %arg4[%c0_5, %c0_6] : memref<128x256xi8, #tpu.memory_space<vmem>>, vector<128x256xi8>
    %c0_i8 = arith.constant 0 : i8
    %11 = vector.broadcast %c0_i8 : i8 to vector<128x256xi8>
    %12 = arith.cmpi ne, %10, %11 : vector<128x256xi8>
    %cst_7 = arith.constant -9.000000e+15 : f32
    %13 = vector.broadcast %cst_7 : f32 to vector<128x256xf32>
    %14 = arith.select %12, %9, %13 : vector<128x256xi1>, vector<128x256xf32>
    %cst_8 = arith.constant dense<0xFF800000> : vector<128xf32>
    %15 = vector.multi_reduction <maximumf>, %14, %cst_8 [1] : vector<128x256xf32> to vector<128xf32>
    %16 = vector.shape_cast %15 : vector<128xf32> to vector<128x1xf32>
    %17 = vector.broadcast %16 : vector<128x1xf32> to vector<128x256xf32>
    %18 = arith.subf %14, %17 : vector<128x256xf32>
    %19 = math.exp %18 : vector<128x256xf32>
    %cst_9 = arith.constant dense<0.000000e+00> : vector<128xf32>
    %20 = vector.multi_reduction <add>, %19, %cst_9 [1] : vector<128x256xf32> to vector<128xf32>
    %21 = vector.shape_cast %20 : vector<128xf32> to vector<128x1xf32>
    %22 = tpu.reciprocal %21 {approx = true} : vector<128x1xf32> -> vector<128x1xf32>
    %23 = vector.broadcast %22 : vector<128x1xf32> to vector<128x256xf32>
    %24 = arith.mulf %19, %23 : vector<128x256xf32>
    %25 = arith.truncf %24 : vector<128x256xf32> to vector<128x256xbf16>
    %c0_10 = arith.constant 0 : index
    %c0_11 = arith.constant 0 : index
    %c0_12 = arith.constant 0 : index
    %26 = vector.load %arg5[%c0_10, %c0_11, %c0_12] : memref<1x256x8xbf16, #tpu.memory_space<vmem>>, vector<1x256x8xbf16>
    %27 = vector.shape_cast %26 : vector<1x256x8xbf16> to vector<256x8xbf16>
    %cst_13 = arith.constant dense<0.000000e+00> : vector<128x8xf32>
    %28 = tpu.matmul %25, %27, %cst_13 {dimension_numbers = #tpu.dot_dimension_numbers<[1], [0], [0], [1], [0, 0, 1, 1], [], []>} : vector<128x256xbf16>, vector<256x8xbf16>, vector<128x8xf32> -> vector<128x8xf32>
    %cst_14 = arith.constant 0.000000e+00 : f32
    %29 = vector.broadcast %cst_14 : f32 to vector<128x8xf32>
    %30 = arith.cmpf ogt, %28, %29 : vector<128x8xf32>
    %31 = math.exp %28 : vector<128x8xf32>
    %cst_15 = arith.constant 1.000000e+00 : f32
    %32 = vector.broadcast %cst_15 : f32 to vector<128x8xf32>
    %33 = arith.subf %31, %32 : vector<128x8xf32>
    %34 = arith.select %30, %28, %33 : vector<128x8xi1>, vector<128x8xf32>
    %c0_16 = arith.constant 0 : index
    %c0_17 = arith.constant 0 : index
    %c0_18 = arith.constant 0 : index
    %35 = vector.load %arg6[%c0_16, %c0_17, %c0_18] : memref<1x128x8xf32, #tpu.memory_space<vmem>>, vector<1x128x8xf32>
    %36 = vector.shape_cast %35 : vector<1x128x8xf32> to vector<128x8xf32>
    %37 = vector.shape_cast %34 : vector<128x8xf32> to vector<1x128x8xf32>
    tpu.vector_store %arg6[%c0_16, %c0_17, %c0_18], %37 {strides = array<i32>} : memref<1x128x8xf32, #tpu.memory_space<vmem>>, vector<1x128x8xf32>,
    return
  }
  func.func @transform_0(%arg0: i32, %arg1: i32) -> (i32, i32, i32) {
    %c0_i32 = arith.constant 0 : i32
    %c0_i32_0 = arith.constant 0 : i32
    return %arg1, %arg0, %c0_i32 : i32, i32, i32
  }
  func.func @transform_1(%arg0: i32, %arg1: i32) -> (i32, i32, i32) {
    %c0_i32 = arith.constant 0 : i32
    %c0_i32_0 = arith.constant 0 : i32
    %c0_i32_1 = arith.constant 0 : i32
    return %arg1, %c0_i32, %c0_i32_0 : i32, i32, i32
  }
  func.func @transform_2(%arg0: i32, %arg1: i32) -> (i32, i32) {
    %c0_i32 = arith.constant 0 : i32
    %c0_i32_0 = arith.constant 0 : i32
    return %arg0, %c0_i32 : i32, i32
  }
  func.func @transform_3(%arg0: i32, %arg1: i32) -> (i32, i32, i32) {
    %c0_i32 = arith.constant 0 : i32
    %c0_i32_0 = arith.constant 0 : i32
    %c0_i32_1 = arith.constant 0 : i32
    return %arg1, %c0_i32, %c0_i32_0 : i32, i32, i32
  }
  func.func @transform_4(%arg0: i32, %arg1: i32) -> (i32, i32, i32) {
    %c0_i32 = arith.constant 0 : i32
    %c0_i32_0 = arith.constant 0 : i32
    return %arg1, %arg0, %c0_i32 : i32, i32, i32
  }
}

module attributes {stable_mosaic.version = 11 : i64} {
  func.func @_proj_kernel(%arg0: i32, %arg1: i32, %arg2: memref<128x64xf32, #tpu.memory_space<vmem>>, %arg3: memref<128x1xf32, #tpu.memory_space<vmem>>, %arg4: memref<1x64x8xbf16, #tpu.memory_space<vmem>>, %arg5: memref<1x64x1xf32, #tpu.memory_space<vmem>>, %arg6: memref<1x1x64xf32, #tpu.memory_space<vmem>>, %arg7: memref<1x1x1xf32, #tpu.memory_space<vmem>>, %arg8: memref<1x128x8xbf16, #tpu.memory_space<vmem>>, %arg9: memref<1x128x1xf32, #tpu.memory_space<vmem>>, %arg10: memref<1x1x128xf32, #tpu.memory_space<vmem>>) attributes {dimension_semantics = [#tpu.dimension_semantics<parallel>, #tpu.dimension_semantics<arbitrary>], iteration_bounds = array<i64: 2, 1>, scalar_prefetch = 0 : i64, scratch_operands = 0 : i64, tpu.core_type = #tpu.core_type<tc>, window_params = [{transform_indices = @transform_0, window_bounds = array<i64: 128, 64>}, {transform_indices = @transform_1, window_bounds = array<i64: 128, 1>}, {transform_indices = @transform_2, window_bounds = array<i64: 1, 64, 8>}, {transform_indices = @transform_3, window_bounds = array<i64: 1, 64, 1>}, {transform_indices = @transform_4, window_bounds = array<i64: 1, 1, 64>}, {transform_indices = @transform_5, window_bounds = array<i64: 1, 1, 1>}, {transform_indices = @transform_6, window_bounds = array<i64: 1, 128, 8>}, {transform_indices = @transform_7, window_bounds = array<i64: 1, 128, 1>}, {transform_indices = @transform_8, window_bounds = array<i64: 1, 1, 128>}]} {
    %c0 = arith.constant 0 : index
    %c0_0 = arith.constant 0 : index
    %0 = vector.load %arg2[%c0, %c0_0] : memref<128x64xf32, #tpu.memory_space<vmem>>, vector<128x64xf32>
    %1 = arith.truncf %0 : vector<128x64xf32> to vector<128x64xbf16>
    %c0_1 = arith.constant 0 : index
    %c0_2 = arith.constant 0 : index
    %c0_3 = arith.constant 0 : index
    %2 = vector.load %arg4[%c0_1, %c0_2, %c0_3] : memref<1x64x8xbf16, #tpu.memory_space<vmem>>, vector<1x64x8xbf16>
    %3 = vector.shape_cast %2 : vector<1x64x8xbf16> to vector<64x8xbf16>
    %cst = arith.constant dense<0.000000e+00> : vector<128x8xf32>
    %4 = tpu.matmul %1, %3, %cst {dimension_numbers = #tpu.dot_dimension_numbers<[1], [0], [0], [1], [0, 0, 1, 1], [], []>} : vector<128x64xbf16>, vector<64x8xbf16>, vector<128x8xf32> -> vector<128x8xf32>
    %5 = arith.truncf %4 : vector<128x8xf32> to vector<128x8xbf16>
    %c0_4 = arith.constant 0 : index
    %c0_5 = arith.constant 0 : index
    %c0_6 = arith.constant 0 : index
    %6 = vector.load %arg8[%c0_4, %c0_5, %c0_6] : memref<1x128x8xbf16, #tpu.memory_space<vmem>>, vector<1x128x8xbf16>
    %7 = vector.shape_cast %6 : vector<1x128x8xbf16> to vector<128x8xbf16>
    %8 = vector.shape_cast %5 : vector<128x8xbf16> to vector<1x128x8xbf16>
    tpu.vector_store %arg8[%c0_4, %c0_5, %c0_6], %8 {strides = array<i32>} : memref<1x128x8xbf16, #tpu.memory_space<vmem>>, vector<1x128x8xbf16>,
    %c0_7 = arith.constant 0 : index
    %c0_8 = arith.constant 0 : index
    %c0_9 = arith.constant 0 : index
    %9 = vector.load %arg5[%c0_7, %c0_8, %c0_9] : memref<1x64x1xf32, #tpu.memory_space<vmem>>, vector<1x64x1xf32>
    %10 = vector.shape_cast %9 : vector<1x64x1xf32> to vector<64x1xf32>
    %cst_10 = arith.constant dense<0.000000e+00> : vector<128x1xf32>
    %11 = tpu.matmul %0, %10, %cst_10 {dimension_numbers = #tpu.dot_dimension_numbers<[1], [0], [0], [1], [0, 0, 1, 1], [], []>} : vector<128x64xf32>, vector<64x1xf32>, vector<128x1xf32> -> vector<128x1xf32>
    %c0_11 = arith.constant 0 : index
    %c0_12 = arith.constant 0 : index
    %12 = vector.load %arg3[%c0_11, %c0_12] : memref<128x1xf32, #tpu.memory_space<vmem>>, vector<128x1xf32>
    %c0_13 = arith.constant 0 : index
    %c0_14 = arith.constant 0 : index
    %c0_15 = arith.constant 0 : index
    %13 = vector.load %arg7[%c0_13, %c0_14, %c0_15] : memref<1x1x1xf32, #tpu.memory_space<vmem>>, vector<1x1x1xf32>
    %14 = vector.shape_cast %13 : vector<1x1x1xf32> to vector<1x1xf32>
    %15 = vector.broadcast %14 : vector<1x1xf32> to vector<128x1xf32>
    %16 = arith.mulf %12, %15 : vector<128x1xf32>
    %cst_16 = arith.constant dense<0.000000e+00> : vector<128xf32>
    %17 = vector.multi_reduction <add>, %16, %cst_16 [1] : vector<128x1xf32> to vector<128xf32>
    %18 = vector.shape_cast %17 : vector<128xf32> to vector<128x1xf32>
    %19 = arith.addf %11, %18 : vector<128x1xf32>
    %c0_17 = arith.constant 0 : index
    %c0_18 = arith.constant 0 : index
    %c0_19 = arith.constant 0 : index
    %20 = vector.load %arg9[%c0_17, %c0_18, %c0_19] : memref<1x128x1xf32, #tpu.memory_space<vmem>>, vector<1x128x1xf32>
    %21 = vector.shape_cast %20 : vector<1x128x1xf32> to vector<128x1xf32>
    %22 = vector.shape_cast %19 : vector<128x1xf32> to vector<1x128x1xf32>
    tpu.vector_store %arg9[%c0_17, %c0_18, %c0_19], %22 {strides = array<i32>} : memref<1x128x1xf32, #tpu.memory_space<vmem>>, vector<1x128x1xf32>,
    %c0_20 = arith.constant 0 : index
    %c0_21 = arith.constant 0 : index
    %c0_22 = arith.constant 0 : index
    %23 = vector.load %arg6[%c0_20, %c0_21, %c0_22] : memref<1x1x64xf32, #tpu.memory_space<vmem>>, vector<1x1x64xf32>
    %24 = vector.shape_cast %23 : vector<1x1x64xf32> to vector<1x64xf32>
    %cst_23 = arith.constant dense<0.000000e+00> : vector<1x128xf32>
    %25 = tpu.matmul %24, %0, %cst_23 {dimension_numbers = #tpu.dot_dimension_numbers<[1], [1], [0], [0], [0, 0, 1, 0], [], []>} : vector<1x64xf32>, vector<128x64xf32>, vector<1x128xf32> -> vector<1x128xf32>
    %c0_24 = arith.constant 0 : index
    %c0_25 = arith.constant 0 : index
    %c0_26 = arith.constant 0 : index
    %26 = vector.load %arg10[%c0_24, %c0_25, %c0_26] : memref<1x1x128xf32, #tpu.memory_space<vmem>>, vector<1x1x128xf32>
    %27 = vector.shape_cast %26 : vector<1x1x128xf32> to vector<1x128xf32>
    %28 = vector.shape_cast %25 : vector<1x128xf32> to vector<1x1x128xf32>
    tpu.vector_store %arg10[%c0_24, %c0_25, %c0_26], %28 {strides = array<i32>} : memref<1x1x128xf32, #tpu.memory_space<vmem>>, vector<1x1x128xf32>,
    return
  }
  func.func @transform_0(%arg0: i32, %arg1: i32) -> (i32, i32) {
    %c0_i32 = arith.constant 0 : i32
    %c0_i32_0 = arith.constant 0 : i32
    return %arg0, %c0_i32 : i32, i32
  }
  func.func @transform_1(%arg0: i32, %arg1: i32) -> (i32, i32) {
    %c0_i32 = arith.constant 0 : i32
    %c0_i32_0 = arith.constant 0 : i32
    return %arg0, %c0_i32 : i32, i32
  }
  func.func @transform_2(%arg0: i32, %arg1: i32) -> (i32, i32, i32) {
    %c0_i32 = arith.constant 0 : i32
    %c0_i32_0 = arith.constant 0 : i32
    %c0_i32_1 = arith.constant 0 : i32
    return %arg1, %c0_i32, %c0_i32_0 : i32, i32, i32
  }
  func.func @transform_3(%arg0: i32, %arg1: i32) -> (i32, i32, i32) {
    %c0_i32 = arith.constant 0 : i32
    %c0_i32_0 = arith.constant 0 : i32
    %c0_i32_1 = arith.constant 0 : i32
    return %arg1, %c0_i32, %c0_i32_0 : i32, i32, i32
  }
  func.func @transform_4(%arg0: i32, %arg1: i32) -> (i32, i32, i32) {
    %c0_i32 = arith.constant 0 : i32
    %c0_i32_0 = arith.constant 0 : i32
    %c0_i32_1 = arith.constant 0 : i32
    return %arg1, %c0_i32, %c0_i32_0 : i32, i32, i32
  }
  func.func @transform_5(%arg0: i32, %arg1: i32) -> (i32, i32, i32) {
    %c0_i32 = arith.constant 0 : i32
    %c0_i32_0 = arith.constant 0 : i32
    %c0_i32_1 = arith.constant 0 : i32
    return %arg1, %c0_i32, %c0_i32_0 : i32, i32, i32
  }
  func.func @transform_6(%arg0: i32, %arg1: i32) -> (i32, i32, i32) {
    %c0_i32 = arith.constant 0 : i32
    %c0_i32_0 = arith.constant 0 : i32
    return %arg1, %arg0, %c0_i32 : i32, i32, i32
  }
  func.func @transform_7(%arg0: i32, %arg1: i32) -> (i32, i32, i32) {
    %c0_i32 = arith.constant 0 : i32
    %c0_i32_0 = arith.constant 0 : i32
    return %arg1, %arg0, %c0_i32 : i32, i32, i32
  }
  func.func @transform_8(%arg0: i32, %arg1: i32) -> (i32, i32, i32) {
    %c0_i32 = arith.constant 0 : i32
    %c0_i32_0 = arith.constant 0 : i32
    return %arg1, %c0_i32, %arg0 : i32, i32, i32
  }
}

</mosaic_0001>

<llo_original>
// kernel: gat_forward.4
$region0: #{gat_forward.4}
  #allocation0 [shape = 'u32[]', space=smem, size = 0x4, offset = 0x4, fixed_abs, tag = 'smem constant byte address 0x4 - core index']
  #allocation1 [shape = 'u32[144,128]{1,0:T(1,128)}', space=vmem, size = 0x12000, scoped, tag = 'internal scratch']
  %s0 = inlined_call_operand.vmem [shape: f32[256,64], index: 0, kind: input, shape index: {}]
  %s1 = inlined_call_operand.vmem [shape: f32[256,1], index: 1, kind: input, shape index: {}]
  %s2 = inlined_call_operand.vmem [shape: bf16[4,64,16], index: 2, kind: input, shape index: {}]
  %s3 = inlined_call_operand.vmem [shape: f32[4,64,1], index: 3, kind: input, shape index: {}]
  %s4 = inlined_call_operand.vmem [shape: f32[4,1,64], index: 4, kind: input, shape index: {}]
  %s5 = inlined_call_operand.vmem [shape: f32[4,1,1], index: 5, kind: input, shape index: {}]
  %s6 = inlined_call_operand.vmem [shape: bf16[4,256,16], index: 6, kind: output, shape index: {0}]
  %s7 = inlined_call_operand.vmem [shape: f32[4,256,1], index: 7, kind: output, shape index: {1}]
  %s8 = inlined_call_operand.vmem [shape: f32[4,1,256], index: 8, kind: output, shape index: {2}]
  %9 = xla_tuple %s6, %s7, %s8
  %s10 = sld [smem:[#allocation0]]
  $region73: #{gat_forward.4} parent=0
    _
  %s12 = ssub.s32 1, %s10
  %s13 = scalar_select 0, %s12, %s10
  loop: start=0, step=1, limit=10
  $region2: #{gat_forward.4} parent=0 // loop_pre_header
    _
  $region3: #{gat_forward.4} parent=0 // loop_header
    %s15 = sphi 0, %s19
    %p16 = scmp.ge.s32.totalorder %s15, 10
    %s22 = sphi 0, %s34
    %s23 = sphi 0, %s30
    %s24 = sphi 0, %s22
    %s25 = sphi 0, %s23
    %s26 = sphi 0, %s24
    %s27 = sphi 0, %s25
    %s37 = sphi 0, %s39
    %s40 = sphi 0, %s37
    %s41 = sphi 0, %s40
    %s57 = sphi 0, %s41
    %s63 = sphi 0, %s65
    %s66 = sphi 0, %s63
    %s67 = sphi 0, %s66
    %s83 = sphi 0, %s67
    %s89 = sphi 0, %s91
    %s92 = sphi 0, %s89
    %s93 = sphi 0, %s92
    %s109 = sphi 0, %s93
    %s115 = sphi 0, %s117
    %s118 = sphi 0, %s115
    %s119 = sphi 0, %s118
    %s135 = sphi 0, %s119
    %s141 = sphi 0, %s143
    %s144 = sphi 0, %s141
    %s145 = sphi 0, %s144
    %s161 = sphi 0, %s145
    %s167 = sphi 0, %s169
    %s170 = sphi 0, %s167
    %s171 = sphi 0, %s170
    %s187 = sphi 0, %s171
    %s195 = sphi 0, %s197
    %s198 = sphi 0, %s195
    %s199 = sphi 0, %s198
    %s215 = sphi 0, %s199
    %s223 = sphi 0, %s225
    %s226 = sphi 0, %s223
    %s227 = sphi 0, %s226
    %s243 = sphi 0, %s227
    %s251 = sphi 0, %s253
    %s254 = sphi 0, %s251
    %s255 = sphi 0, %s254
    %s271 = sphi 0, %s255
  $region4: #{gat_forward.4} parent=0 // loop_header_branch
    %18 = sbr.rel (%p16) target = $region8
  $region5: #{gat_forward.4} parent=0 // loop_body
    %s20 = ssub.s32 %s15, 1
    %s21 = ssub.s32 %s15, 2
    %s28 = sadd.s32 1, %s23
    %p29 = scmp.ge.s32.totalorder %s28, 4
    %s30 = scalar_select %p29, 0, %s28
    %s31 = sadd.s32 1, %s22
    %s32 = scalar_select %p29, %s31, %s22
    %p33 = scmp.ge.s32.totalorder %s32, 2
    %s34 = scalar_select %p33, 0, %s32
    %s35 = ssub.s32 %s22, %s34
    %p36 = scmp.eq.s32.totalorder %s35, 0
    %s38 = sadd.s32 %s37, 1
    %s39 = scalar_select %p36, %s37, %s38
    %p42 = pneg %p36
    %p43 = scmp.eq.s32.totalorder %s15, 7
    %p44 = por %p42, %p43
    %p45 = scmp.ne.s32.totalorder %s37, %s40
    %p46 = scmp.eq.s32.totalorder %s15, 0
    %p47 = por %p45, %p46
    %p48 = scmp.ne.s32.totalorder %s37, %s40
    %p49 = scmp.eq.s32.totalorder %s20, 7
    %p50 = por %p48, %p49
    %p51 = scmp.ne.s32.totalorder %s40, %s41
    %p52 = scmp.eq.s32.totalorder %s20, 0
    %p53 = por %p51, %p52
    %p54 = scmp.ne.s32.totalorder %s40, %s41
    %p55 = scmp.eq.s32.totalorder %s21, 7
    %p56 = por %p54, %p55
    %p58 = scmp.ne.s32.totalorder %s41, %s57
    %p59 = scmp.eq.s32.totalorder %s21, 0
    %p60 = por %p58, %p59
    %s61 = ssub.s32 %s22, %s34
    %p62 = scmp.eq.s32.totalorder %s61, 0
    %s64 = sadd.s32 %s63, 1
    %s65 = scalar_select %p62, %s63, %s64
    %p68 = pneg %p62
    %p69 = scmp.eq.s32.totalorder %s15, 7
    %p70 = por %p68, %p69
    %p71 = scmp.ne.s32.totalorder %s63, %s66
    %p72 = scmp.eq.s32.totalorder %s15, 0
    %p73 = por %p71, %p72
    %p74 = scmp.ne.s32.totalorder %s63, %s66
    %p75 = scmp.eq.s32.totalorder %s20, 7
    %p76 = por %p74, %p75
    %p77 = scmp.ne.s32.totalorder %s66, %s67
    %p78 = scmp.eq.s32.totalorder %s20, 0
    %p79 = por %p77, %p78
    %p80 = scmp.ne.s32.totalorder %s66, %s67
    %p81 = scmp.eq.s32.totalorder %s21, 7
    %p82 = por %p80, %p81
    %p84 = scmp.ne.s32.totalorder %s67, %s83
    %p85 = scmp.eq.s32.totalorder %s21, 0
    %p86 = por %p84, %p85
    %s87 = ssub.s32 %s23, %s30
    %p88 = scmp.eq.s32.totalorder %s87, 0
    %s90 = sadd.s32 %s89, 1
    %s91 = scalar_select %p88, %s89, %s90
    %p94 = pneg %p88
    %p95 = scmp.eq.s32.totalorder %s15, 7
    %p96 = por %p94, %p95
    %p97 = scmp.ne.s32.totalorder %s89, %s92
    %p98 = scmp.eq.s32.totalorder %s15, 0
    %p99 = por %p97, %p98
    %p100 = scmp.ne.s32.totalorder %s89, %s92
    %p101 = scmp.eq.s32.totalorder %s20, 7
    %p102 = por %p100, %p101
    %p103 = scmp.ne.s32.totalorder %s92, %s93
    %p104 = scmp.eq.s32.totalorder %s20, 0
    %p105 = por %p103, %p104
    %p106 = scmp.ne.s32.totalorder %s92, %s93
    %p107 = scmp.eq.s32.totalorder %s21, 7
    %p108 = por %p106, %p107
    %p110 = scmp.ne.s32.totalorder %s93, %s109
    %p111 = scmp.eq.s32.totalorder %s21, 0
    %p112 = por %p110, %p111
    %s113 = ssub.s32 %s23, %s30
    %p114 = scmp.eq.s32.totalorder %s113, 0
    %s116 = sadd.s32 %s115, 1
    %s117 = scalar_select %p114, %s115, %s116
    %p120 = pneg %p114
    %p121 = scmp.eq.s32.totalorder %s15, 7
    %p122 = por %p120, %p121
    %p123 = scmp.ne.s32.totalorder %s115, %s118
    %p124 = scmp.eq.s32.totalorder %s15, 0
    %p125 = por %p123, %p124
    %p126 = scmp.ne.s32.totalorder %s115, %s118
    %p127 = scmp.eq.s32.totalorder %s20, 7
    %p128 = por %p126, %p127
    %p129 = scmp.ne.s32.totalorder %s118, %s119
    %p130 = scmp.eq.s32.totalorder %s20, 0
    %p131 = por %p129, %p130
    %p132 = scmp.ne.s32.totalorder %s118, %s119
    %p133 = scmp.eq.s32.totalorder %s21, 7
    %p134 = por %p132, %p133
    %p136 = scmp.ne.s32.totalorder %s119, %s135
    %p137 = scmp.eq.s32.totalorder %s21, 0
    %p138 = por %p136, %p137
    %s139 = ssub.s32 %s23, %s30
    %p140 = scmp.eq.s32.totalorder %s139, 0
    %s142 = sadd.s32 %s141, 1
    %s143 = scalar_select %p140, %s141, %s142
    %p146 = pneg %p140
    %p147 = scmp.eq.s32.totalorder %s15, 7
    %p148 = por %p146, %p147
    %p149 = scmp.ne.s32.totalorder %s141, %s144
    %p150 = scmp.eq.s32.totalorder %s15, 0
    %p151 = por %p149, %p150
    %p152 = scmp.ne.s32.totalorder %s141, %s144
    %p153 = scmp.eq.s32.totalorder %s20, 7
    %p154 = por %p152, %p153
    %p155 = scmp.ne.s32.totalorder %s144, %s145
    %p156 = scmp.eq.s32.totalorder %s20, 0
    %p157 = por %p155, %p156
    %p158 = scmp.ne.s32.totalorder %s144, %s145
    %p159 = scmp.eq.s32.totalorder %s21, 7
    %p160 = por %p158, %p159
    %p162 = scmp.ne.s32.totalorder %s145, %s161
    %p163 = scmp.eq.s32.totalorder %s21, 0
    %p164 = por %p162, %p163
    %s165 = ssub.s32 %s23, %s30
    %p166 = scmp.eq.s32.totalorder %s165, 0
    %s168 = sadd.s32 %s167, 1
    %s169 = scalar_select %p166, %s167, %s168
    %p172 = pneg %p166
    %p173 = scmp.eq.s32.totalorder %s15, 7
    %p174 = por %p172, %p173
    %p175 = scmp.ne.s32.totalorder %s167, %s170
    %p176 = scmp.eq.s32.totalorder %s15, 0
    %p177 = por %p175, %p176
    %p178 = scmp.ne.s32.totalorder %s167, %s170
    %p179 = scmp.eq.s32.totalorder %s20, 7
    %p180 = por %p178, %p179
    %p181 = scmp.ne.s32.totalorder %s170, %s171
    %p182 = scmp.eq.s32.totalorder %s20, 0
    %p183 = por %p181, %p182
    %p184 = scmp.ne.s32.totalorder %s170, %s171
    %p185 = scmp.eq.s32.totalorder %s21, 7
    %p186 = por %p184, %p185
    %p188 = scmp.ne.s32.totalorder %s171, %s187
    %p189 = scmp.eq.s32.totalorder %s21, 0
    %p190 = por %p188, %p189
    %s191 = ssub.s32 %s23, %s30
    %s192 = ssub.s32 %s22, %s34
    %s193 = sor.u32 %s191, %s192
    %p194 = scmp.eq.s32.totalorder %s193, 0
    %s196 = sadd.s32 %s195, 1
    %s197 = scalar_select %p194, %s195, %s196
    %p200 = pneg %p194
    %p201 = scmp.eq.s32.totalorder %s15, 7
    %p202 = por %p200, %p201
    %p203 = scmp.ne.s32.totalorder %s195, %s198
    %p204 = scmp.eq.s32.totalorder %s15, 0
    %p205 = por %p203, %p204
    %p206 = scmp.ne.s32.totalorder %s195, %s198
    %p207 = scmp.eq.s32.totalorder %s20, 7
    %p208 = por %p206, %p207
    %p209 = scmp.ne.s32.totalorder %s198, %s199
    %p210 = scmp.eq.s32.totalorder %s20, 0
    %p211 = por %p209, %p210
    %p212 = scmp.ne.s32.totalorder %s198, %s199
    %p213 = scmp.eq.s32.totalorder %s21, 7
    %p214 = por %p212, %p213
    %p216 = scmp.ne.s32.totalorder %s199, %s215
    %p217 = scmp.eq.s32.totalorder %s21, 0
    %p218 = por %p216, %p217
    %s219 = ssub.s32 %s23, %s30
    %s220 = ssub.s32 %s22, %s34
    %s221 = sor.u32 %s219, %s220
    %p222 = scmp.eq.s32.totalorder %s221, 0
    %s224 = sadd.s32 %s223, 1
    %s225 = scalar_select %p222, %s223, %s224
    %p228 = pneg %p222
    %p229 = scmp.eq.s32.totalorder %s15, 7
    %p230 = por %p228, %p229
    %p231 = scmp.ne.s32.totalorder %s223, %s226
    %p232 = scmp.eq.s32.totalorder %s15, 0
    %p233 = por %p231, %p232
    %p234 = scmp.ne.s32.totalorder %s223, %s226
    %p235 = scmp.eq.s32.totalorder %s20, 7
    %p236 = por %p234, %p235
    %p237 = scmp.ne.s32.totalorder %s226, %s227
    %p238 = scmp.eq.s32.totalorder %s20, 0
    %p239 = por %p237, %p238
    %p240 = scmp.ne.s32.totalorder %s226, %s227
    %p241 = scmp.eq.s32.totalorder %s21, 7
    %p242 = por %p240, %p241
    %p244 = scmp.ne.s32.totalorder %s227, %s243
    %p245 = scmp.eq.s32.totalorder %s21, 0
    %p246 = por %p244, %p245
    %s247 = ssub.s32 %s23, %s30
    %s248 = ssub.s32 %s22, %s34
    %s249 = sor.u32 %s247, %s248
    %p250 = scmp.eq.s32.totalorder %s249, 0
    %s252 = sadd.s32 %s251, 1
    %s253 = scalar_select %p250, %s251, %s252
    %p256 = pneg %p250
    %p257 = scmp.eq.s32.totalorder %s15, 7
    %p258 = por %p256, %p257
    %p259 = scmp.ne.s32.totalorder %s251, %s254
    %p260 = scmp.eq.s32.totalorder %s15, 0
    %p261 = por %p259, %p260
    %p262 = scmp.ne.s32.totalorder %s251, %s254
    %p263 = scmp.eq.s32.totalorder %s20, 7
    %p264 = por %p262, %p263
    %p265 = scmp.ne.s32.totalorder %s254, %s255
    %p266 = scmp.eq.s32.totalorder %s20, 0
    %p267 = por %p265, %p266
    %p268 = scmp.ne.s32.totalorder %s254, %s255
    %p269 = scmp.eq.s32.totalorder %s21, 7
    %p270 = por %p268, %p269
    %p272 = scmp.ne.s32.totalorder %s255, %s271
    %p273 = scmp.eq.s32.totalorder %s21, 0
    %p274 = por %p272, %p273
    %p275 = scmp.le.s32.totalorder 1, %s15
    %p276 = scmp.lt.s32.totalorder %s15, 9
    %p277 = pnand %p275, %p276
    %p278 = pneg %p277
    // Predicated region
    $region9: #{gat_forward.4} parent=5 // pred_check
      _
    $region10: #{gat_forward.4} parent=5 // pred_check_branch
      %280 = sbr.rel (%p277) target = $region12
    $region11: #{gat_forward.4} parent=5 // pred_region
      %s281 = ssub.s32 %s15, 1
    $region12: #{gat_forward.4} parent=5 // pred_fallthru
      _
    %p282 = scmp.lt.s32.totalorder %s15, 8
    // Predicated region
    $region13: #{gat_forward.4} parent=5 // pred_check
      %p283 = pneg %p282
    $region14: #{gat_forward.4} parent=5 // pred_check_branch
      %285 = sbr.rel (%p283) target = $region16
    $region15: #{gat_forward.4} parent=5 // pred_region
      // Predicated region
      $region17: #{gat_forward.4} parent=15 // pred_check
        %p286 = pneg %p47
      $region18: #{gat_forward.4} parent=15 // pred_check_branch
        %288 = sbr.rel (%p286) target = $region20
      $region19: #{gat_forward.4} parent=15 // pred_region
        %s289 = smul.u32 16, %s22
        %p290 = scmp.lt.s32.totalorder %s289, 31
        %s291 = scalar_select %p290, %s289, 31
        %s292 = smul.addr %s291, 8
        %s293 = scalar_lea.vmem %s0, %s292
        %s294 = smul.u32 16, %s22
      $region20: #{gat_forward.4} parent=15 // pred_fallthru
        _
      // Predicated region
      $region21: #{gat_forward.4} parent=15 // pred_check
        %p295 = pneg %p73
      $region22: #{gat_forward.4} parent=15 // pred_check_branch
        %297 = sbr.rel (%p295) target = $region24
      $region23: #{gat_forward.4} parent=15 // pred_region
        %s298 = smul.u32 16, %s22
        %p299 = scmp.lt.s32.totalorder %s298, 31
        %s300 = scalar_select %p299, %s298, 31
        %s301 = smul.addr %s300, 8
        %s302 = scalar_lea.vmem %s1, %s301
        %s303 = smul.u32 16, %s22
      $region24: #{gat_forward.4} parent=15 // pred_fallthru
        _
      // Predicated region
      $region25: #{gat_forward.4} parent=15 // pred_check
        %p304 = pneg %p99
      $region26: #{gat_forward.4} parent=15 // pred_check_branch
        %306 = sbr.rel (%p304) target = $region28
      $region27: #{gat_forward.4} parent=15 // pred_region
        %p307 = scmp.lt.s32.totalorder %s23, 3
        %s308 = scalar_select %p307, %s23, 3
        %s309 = smul.addr %s308, 8
        %s310 = smul.addr %s309, 4
        %s311 = scalar_lea.vmem %s2, %s310
      $region28: #{gat_forward.4} parent=15 // pred_fallthru
        _
      // Predicated region
      $region29: #{gat_forward.4} parent=15 // pred_check
        %p312 = pneg %p125
      $region30: #{gat_forward.4} parent=15 // pred_check_branch
        %314 = sbr.rel (%p312) target = $region32
      $region31: #{gat_forward.4} parent=15 // pred_region
        %p315 = scmp.lt.s32.totalorder %s23, 3
        %s316 = scalar_select %p315, %s23, 3
        %s317 = smul.addr %s316, 8
        %s318 = smul.addr %s317, 8
        %s319 = scalar_lea.vmem %s3, %s318
      $region32: #{gat_forward.4} parent=15 // pred_fallthru
        _
      // Predicated region
      $region33: #{gat_forward.4} parent=15 // pred_check
        %p320 = pneg %p151
      $region34: #{gat_forward.4} parent=15 // pred_check_branch
        %322 = sbr.rel (%p320) target = $region36
      $region35: #{gat_forward.4} parent=15 // pred_region
        %p323 = scmp.lt.s32.totalorder %s23, 3
        %s324 = scalar_select %p323, %s23, 3
        %s325 = scalar_lea.vmem %s4, %s324
      $region36: #{gat_forward.4} parent=15 // pred_fallthru
        _
      // Predicated region
      $region37: #{gat_forward.4} parent=15 // pred_check
        %p326 = pneg %p177
      $region38: #{gat_forward.4} parent=15 // pred_check_branch
        %328 = sbr.rel (%p326) target = $region40
      $region39: #{gat_forward.4} parent=15 // pred_region
        %p329 = scmp.lt.s32.totalorder %s23, 3
        %s330 = scalar_select %p329, %s23, 3
        %s331 = scalar_lea.vmem %s5, %s330
      $region40: #{gat_forward.4} parent=15 // pred_fallthru
        _
    $region16: #{gat_forward.4} parent=5 // pred_fallthru
      _
    %p332 = scmp.le.s32.totalorder 1, %s15
    %p333 = scmp.lt.s32.totalorder %s15, 9
    %p334 = pnand %p332, %p333
    %p335 = pneg %p334
    // Predicated region
    $region41: #{gat_forward.4} parent=5 // pred_check
      _
    $region42: #{gat_forward.4} parent=5 // pred_check_branch
      %337 = sbr.rel (%p334) target = $region44
    $region43: #{gat_forward.4} parent=5 // pred_region
      %s338 = ssub.s32 %s15, 1
      %s339 = smul.u32 16, %s24
      %p340 = scmp.lt.s32.totalorder %s339, 31
      %s341 = scalar_select %p340, %s339, 31
      %s342 = smul.addr %s341, 8
      %s343 = scalar_lea.vmem %s0, %s342
      %p344 = pneg %p53
      %p345 = pneg %p50
      %s346 = smul.u32 16, %s24
      %p347 = scmp.lt.s32.totalorder %s346, 31
      %s348 = scalar_select %p347, %s346, 31
      %s349 = smul.addr %s348, 8
      %s350 = scalar_lea.vmem %s1, %s349
      %p351 = pneg %p79
      %p352 = pneg %p76
      %p353 = scmp.lt.s32.totalorder %s25, 3
      %s354 = scalar_select %p353, %s25, 3
      %s355 = smul.addr %s354, 8
      %s356 = smul.addr %s355, 4
      %s357 = scalar_lea.vmem %s2, %s356
      %p358 = pneg %p105
      %p359 = pneg %p102
      %p360 = scmp.lt.s32.totalorder %s25, 3
      %s361 = scalar_select %p360, %s25, 3
      %s362 = smul.addr %s361, 8
      %s363 = smul.addr %s362, 8
      %s364 = scalar_lea.vmem %s3, %s363
      %p365 = pneg %p131
      %p366 = pneg %p128
      %p367 = scmp.lt.s32.totalorder %s25, 3
      %s368 = scalar_select %p367, %s25, 3
      %s369 = scalar_lea.vmem %s4, %s368
      %p370 = pneg %p157
      %p371 = pneg %p154
      %p372 = scmp.lt.s32.totalorder %s25, 3
      %s373 = scalar_select %p372, %s25, 3
      %s374 = scalar_lea.vmem %s5, %s373
      %p375 = pneg %p183
      %p376 = pneg %p180
      %p377 = pneg %p211
      %p378 = pneg %p208
      %s379 = smul.u32 16, %s24
      %p380 = scmp.lt.s32.totalorder %s25, 3
      %s381 = scalar_select %p380, %s25, 3
      %p382 = scmp.lt.s32.totalorder %s379, 31
      %s383 = scalar_select %p382, %s379, 31
      %s384 = smul.addr %s381, 32
      %s385 = sadd.s32 %s383, %s384
      %s386 = smul.addr %s385, 4
      %s387 = scalar_lea.vmem %s6, %s386
      %p388 = pneg %p239
      %p389 = pneg %p236
      %s390 = smul.u32 16, %s24
      %p391 = scmp.lt.s32.totalorder %s25, 3
      %s392 = scalar_select %p391, %s25, 3
      %p393 = scmp.lt.s32.totalorder %s390, 31
      %s394 = scalar_select %p393, %s390, 31
      %s395 = smul.addr %s392, 32
      %s396 = sadd.s32 %s394, %s395
      %s397 = smul.addr %s396, 8
      %s398 = scalar_lea.vmem %s7, %s397
      %p399 = pneg %p267
      %p400 = pneg %p264
      %p401 = scmp.lt.s32.totalorder %s25, 3
      %s402 = scalar_select %p401, %s25, 3
      %p403 = scmp.lt.s32.totalorder %s24, 1
      %s404 = scalar_select %p403, %s24, 1
      %s405 = smul.addr %s402, 2
      %s406 = sadd.s32 %s404, %s405
      %s407 = scalar_lea.vmem %s8, %s406
      %s408 = smul.u32 16, %s24
      %p409 = scmp.lt.s32.totalorder %s408, 31
      %s410 = scalar_select %p409, %s408, 31
      %s411 = smul.addr %s410, 8
      %s412 = scalar_lea.vmem %s0, %s411
      %s413 = smul.u32 16, %s24
      %s414 = smul.u32 16, %s24
      %p415 = scmp.lt.s32.totalorder %s414, 31
      %s416 = scalar_select %p415, %s414, 31
      %s417 = smul.addr %s416, 8
      %s418 = scalar_lea.vmem %s1, %s417
      %s419 = smul.u32 16, %s24
      %p420 = scmp.lt.s32.totalorder %s25, 3
      %s421 = scalar_select %p420, %s25, 3
      %s422 = smul.addr %s421, 8
      %s423 = smul.addr %s422, 4
      %s424 = scalar_lea.vmem %s2, %s423
      %p425 = scmp.lt.s32.totalorder %s25, 3
      %s426 = scalar_select %p425, %s25, 3
      %s427 = smul.addr %s426, 8
      %s428 = smul.addr %s427, 8
      %s429 = scalar_lea.vmem %s3, %s428
      %p430 = scmp.lt.s32.totalorder %s25, 3
      %s431 = scalar_select %p430, %s25, 3
      %s432 = scalar_lea.vmem %s4, %s431
      %p433 = scmp.lt.s32.totalorder %s25, 3
      %s434 = scalar_select %p433, %s25, 3
      %s435 = scalar_lea.vmem %s5, %s434
      %s436 = smul.u32 16, %s24
      %p437 = scmp.lt.s32.totalorder %s25, 3
      %s438 = scalar_select %p437, %s25, 3
      %p439 = scmp.lt.s32.totalorder %s436, 31
      %s440 = scalar_select %p439, %s436, 31
      %s441 = smul.addr %s438, 32
      %s442 = sadd.s32 %s440, %s441
      %s443 = smul.addr %s442, 4
      %s444 = scalar_lea.vmem %s6, %s443
      %s445 = smul.u32 16, %s24
      %s446 = smul.u32 16, %s24
      %p447 = scmp.lt.s32.totalorder %s25, 3
      %s448 = scalar_select %p447, %s25, 3
      %p449 = scmp.lt.s32.totalorder %s446, 31
      %s450 = scalar_select %p449, %s446, 31
      %s451 = smul.addr %s448, 32
      %s452 = sadd.s32 %s450, %s451
      %s453 = smul.addr %s452, 8
      %s454 = scalar_lea.vmem %s7, %s453
      %s455 = smul.u32 16, %s24
      %p456 = scmp.lt.s32.totalorder %s25, 3
      %s457 = scalar_select %p456, %s25, 3
      %p458 = scmp.lt.s32.totalorder %s24, 1
      %s459 = scalar_select %p458, %s24, 1
      %s460 = smul.addr %s457, 2
      %s461 = sadd.s32 %s459, %s460
      %s462 = scalar_lea.vmem %s8, %s461
      %v464 = vld [vmem:[%s412] sm:$0xff]
      %v465 = vld [vmem:[%s412 + $0x8] sm:$0xff]
      %v466 = vld [vmem:[%s412 + $0x10] sm:$0xff]
      %v467 = vld [vmem:[%s412 + $0x18] sm:$0xff]
      %v468 = vld [vmem:[%s412 + $0x20] sm:$0xff]
      %v469 = vld [vmem:[%s412 + $0x28] sm:$0xff]
      %v470 = vld [vmem:[%s412 + $0x30] sm:$0xff]
      %v471 = vld [vmem:[%s412 + $0x38] sm:$0xff]
      %v472 = vld [vmem:[%s412 + $0x40] sm:$0xff]
      %v473 = vld [vmem:[%s412 + $0x48] sm:$0xff]
      %v474 = vld [vmem:[%s412 + $0x50] sm:$0xff]
      %v475 = vld [vmem:[%s412 + $0x58] sm:$0xff]
      %v476 = vld [vmem:[%s412 + $0x60] sm:$0xff]
      %v477 = vld [vmem:[%s412 + $0x68] sm:$0xff]
      %v478 = vld [vmem:[%s412 + $0x70] sm:$0xff]
      %v479 = vld [vmem:[%s412 + $0x78] sm:$0xff]
      %v480 = vpack.c.bf16 %v465, %v464
      %v481 = vpack.c.bf16 %v467, %v466
      %v482 = vpack.c.bf16 %v469, %v468
      %v483 = vpack.c.bf16 %v471, %v470
      %v484 = vpack.c.bf16 %v473, %v472
      %v485 = vpack.c.bf16 %v475, %v474
      %v486 = vpack.c.bf16 %v477, %v476
      %v487 = vpack.c.bf16 %v479, %v478
      %v488 = vld [vmem:[%s424] sm:$0xf]
      %v489 = vld [vmem:[%s424 + $0x4] sm:$0xf]
      %v490 = vld [vmem:[%s424 + $0x8] sm:$0xf]
      %v491 = vld [vmem:[%s424 + $0xc] sm:$0xf]
      %v492 = vld [vmem:[%s424 + $0x10] sm:$0xf]
      %v493 = vld [vmem:[%s424 + $0x14] sm:$0xf]
      %v494 = vld [vmem:[%s424 + $0x18] sm:$0xf]
      %v495 = vld [vmem:[%s424 + $0x1c] sm:$0xf]
      %v504 = vunpack.c.l.b16 %v488
      %v505 = vunpack.c.l.b16 %v489
      %v506 = vunpack.c.l.b16 %v490
      %v507 = vunpack.c.l.b16 %v491
      %v508 = vunpack.c.l.b16 %v492
      %v509 = vunpack.c.l.b16 %v493
      %v510 = vunpack.c.l.b16 %v494
      %v511 = vunpack.c.l.b16 %v495
      %v512 = vpack.c.b16 %v505, %v504
      %v513 = vpack.c.b16 %v507, %v506
      %v514 = vpack.c.b16 %v509, %v508
      %v515 = vpack.c.b16 %v511, %v510
      %vm520 = vcmask 523264
      %v522 = vsel %vm520, %v480, 0
      %v525 = vsel %vm520, %v481, 0
      %v528 = vsel %vm520, %v482, 0
      %v531 = vsel %vm520, %v483, 0
      %v534 = vsel %vm520, %v484, 0
      %v537 = vsel %vm520, %v485, 0
      %v540 = vsel %vm520, %v486, 0
      %v543 = vsel %vm520, %v487, 0
      %545 = vmatprep.subr.bf16.mxu0 0
      %546 = vmatpush1.bf16.msra.mxu0 %v512
      %547 = vmatprep.subr.bf16.mxu0 0
      %548 = vmatpush1.bf16.msra.mxu0 %v513
      %549 = vmatprep.subr.bf16.mxu0 0
      %550 = vmatpush1.bf16.msra.mxu0 %v514
      %551 = vmatprep.subr.bf16.mxu0 0
      %552 = vmatpush1.bf16.msra.mxu0 %v515
      %553 = vmatprep.subr.bf16.mxu0 0
      %554 = vmatpush1.bf16.msra.mxu0 0
      %555 = vmatprep.subr.bf16.mxu0 0
      %556 = vmatpush1.bf16.msra.mxu0 0
      %557 = vmatprep.subr.bf16.mxu0 0
      %558 = vmatpush1.bf16.msra.mxu0 0
      %559 = vmatprep.subr.bf16.mxu0 0
      %560 = vmatpush1.bf16.msra.mxu0 0
      %561 = vmatprep.subr.bf16.mxu0 0
      %562 = vmatpush1.bf16.msra.mxu0 0
      %563 = vmatprep.subr.bf16.mxu0 0
      %564 = vmatpush1.bf16.msra.mxu0 0
      %565 = vmatprep.subr.bf16.mxu0 0
      %566 = vmatpush1.bf16.msra.mxu0 0
      %567 = vmatprep.subr.bf16.mxu0 0
      %568 = vmatpush1.bf16.msra.mxu0 0
      %569 = vmatprep.subr.bf16.mxu0 0
      %570 = vmatpush1.bf16.msra.mxu0 0
      %571 = vmatprep.subr.bf16.mxu0 0
      %572 = vmatpush1.bf16.msra.mxu0 0
      %573 = vmatprep.subr.bf16.mxu0 0
      %574 = vmatpush1.bf16.msra.mxu0 0
      %575 = vmatprep.subr.bf16.mxu0 0
      %576 = vmatpush1.bf16.msra.mxu0 0
      %577 = vmatprep.mubr.bf16.mxu0 0
      %578 = vmatmul.mubr.bf16.gmra.mrb[0].mxu0 %v522
      %v579 = vpop.f32.mrb[0].mxu0
      %v580 = vadd.f32 0.0, %v579
      %v581 = vpop.f32.mrb[0].mxu0
      %v582 = vpop.f32.mrb[0].mxu0
      %v583 = vadd.f32 0.0, %v582
      %v584 = vpop.f32.mrb[0].mxu0
      %585 = vmatprep.mubr.bf16.mxu0 0
      %586 = vmatmul.mubr.bf16.gmra.mrb[0].mxu0 %v525
      %v587 = vpop.f32.mrb[0].mxu0
      %v588 = vadd.f32 0.0, %v587
      %v589 = vpop.f32.mrb[0].mxu0
      %v590 = vpop.f32.mrb[0].mxu0
      %v591 = vadd.f32 0.0, %v590
      %v592 = vpop.f32.mrb[0].mxu0
      %593 = vmatprep.mubr.bf16.mxu0 0
      %594 = vmatmul.mubr.bf16.gmra.mrb[0].mxu0 %v528
      %v595 = vpop.f32.mrb[0].mxu0
      %v596 = vadd.f32 0.0, %v595
      %v597 = vpop.f32.mrb[0].mxu0
      %v598 = vpop.f32.mrb[0].mxu0
      %v599 = vadd.f32 0.0, %v598
      %v600 = vpop.f32.mrb[0].mxu0
      %601 = vmatprep.mubr.bf16.mxu0 0
      %602 = vmatmul.mubr.bf16.gmra.mrb[0].mxu0 %v531
      %v603 = vpop.f32.mrb[0].mxu0
      %v604 = vadd.f32 0.0, %v603
      %v605 = vpop.f32.mrb[0].mxu0
      %v606 = vpop.f32.mrb[0].mxu0
      %v607 = vadd.f32 0.0, %v606
      %v608 = vpop.f32.mrb[0].mxu0
      %609 = vmatprep.mubr.bf16.mxu0 0
      %610 = vmatmul.mubr.bf16.gmra.mrb[0].mxu0 %v534
      %v611 = vpop.f32.mrb[0].mxu0
      %v612 = vadd.f32 0.0, %v611
      %v613 = vpop.f32.mrb[0].mxu0
      %v614 = vpop.f32.mrb[0].mxu0
      %v615 = vadd.f32 0.0, %v614
      %v616 = vpop.f32.mrb[0].mxu0
      %617 = vmatprep.mubr.bf16.mxu0 0
      %618 = vmatmul.mubr.bf16.gmra.mrb[0].mxu0 %v537
      %v619 = vpop.f32.mrb[0].mxu0
      %v620 = vadd.f32 0.0, %v619
      %v621 = vpop.f32.mrb[0].mxu0
      %v622 = vpop.f32.mrb[0].mxu0
      %v623 = vadd.f32 0.0, %v622
      %v624 = vpop.f32.mrb[0].mxu0
      %625 = vmatprep.mubr.bf16.mxu0 0
      %626 = vmatmul.mubr.bf16.gmra.mrb[0].mxu0 %v540
      %v627 = vpop.f32.mrb[0].mxu0
      %v628 = vadd.f32 0.0, %v627
      %v629 = vpop.f32.mrb[0].mxu0
      %v630 = vpop.f32.mrb[0].mxu0
      %v631 = vadd.f32 0.0, %v630
      %v632 = vpop.f32.mrb[0].mxu0
      %633 = vmatprep.mubr.bf16.mxu0 0
      %634 = vmatmul.mubr.bf16.gmra.mrb[0].mxu0 %v543
      %v635 = vpop.f32.mrb[0].mxu0
      %v636 = vadd.f32 0.0, %v635
      %v637 = vpop.f32.mrb[0].mxu0
      %v638 = vpop.f32.mrb[0].mxu0
      %v639 = vadd.f32 0.0, %v638
      %v640 = vpop.f32.mrb[0].mxu0
      %641 = vdwg.mxu0
      %v642 = vpack.c.bf16 %v583, %v580
      %v643 = vpack.c.bf16 %v591, %v588
      %v644 = vpack.c.bf16 %v599, %v596
      %v645 = vpack.c.bf16 %v607, %v604
      %v646 = vpack.c.bf16 %v615, %v612
      %v647 = vpack.c.bf16 %v623, %v620
      %v648 = vpack.c.bf16 %v631, %v628
      %v649 = vpack.c.bf16 %v639, %v636
      %v658 = vunpack.c.l.b16 %v642
      %v659 = vunpack.c.h.b16 %v642
      %v660 = vunpack.c.l.b16 %v643
      %v661 = vunpack.c.h.b16 %v643
      %v662 = vunpack.c.l.b16 %v644
      %v663 = vunpack.c.h.b16 %v644
      %v664 = vunpack.c.l.b16 %v645
      %v665 = vunpack.c.h.b16 %v645
      %v666 = vunpack.c.l.b16 %v646
      %v667 = vunpack.c.h.b16 %v646
      %v668 = vunpack.c.l.b16 %v647
      %v669 = vunpack.c.h.b16 %v647
      %v670 = vunpack.c.l.b16 %v648
      %v671 = vunpack.c.h.b16 %v648
      %v672 = vunpack.c.l.b16 %v649
      %v673 = vunpack.c.h.b16 %v649
      %v674 = vpack.c.b16 %v658, %v658
      %v675 = vpack.c.b16 %v659, %v659
      %v676 = vpack.c.b16 %v660, %v660
      %v677 = vpack.c.b16 %v661, %v661
      %v678 = vpack.c.b16 %v662, %v662
      %v679 = vpack.c.b16 %v663, %v663
      %v680 = vpack.c.b16 %v664, %v664
      %v681 = vpack.c.b16 %v665, %v665
      %v682 = vpack.c.b16 %v666, %v666
      %v683 = vpack.c.b16 %v667, %v667
      %v684 = vpack.c.b16 %v668, %v668
      %v685 = vpack.c.b16 %v669, %v669
      %v686 = vpack.c.b16 %v670, %v670
      %v687 = vpack.c.b16 %v671, %v671
      %v688 = vpack.c.b16 %v672, %v672
      %v689 = vpack.c.b16 %v673, %v673
      %vm706 = vcmask 125952
      %707 = vst.msk [vmem:[%s444] sm:$0xf] %vm706, %v674
      %708 = vst.msk [vmem:[%s444 + $0x4] sm:$0xf] %vm706, %v675
      %709 = vst.msk [vmem:[%s444 + $0x8] sm:$0xf] %vm706, %v676
      %710 = vst.msk [vmem:[%s444 + $0xc] sm:$0xf] %vm706, %v677
      %711 = vst.msk [vmem:[%s444 + $0x10] sm:$0xf] %vm706, %v678
      %712 = vst.msk [vmem:[%s444 + $0x14] sm:$0xf] %vm706, %v679
      %713 = vst.msk [vmem:[%s444 + $0x18] sm:$0xf] %vm706, %v680
      %714 = vst.msk [vmem:[%s444 + $0x1c] sm:$0xf] %vm706, %v681
      %715 = vst.msk [vmem:[%s444 + $0x20] sm:$0xf] %vm706, %v682
      %716 = vst.msk [vmem:[%s444 + $0x24] sm:$0xf] %vm706, %v683
      %717 = vst.msk [vmem:[%s444 + $0x28] sm:$0xf] %vm706, %v684
      %718 = vst.msk [vmem:[%s444 + $0x2c] sm:$0xf] %vm706, %v685
      %719 = vst.msk [vmem:[%s444 + $0x30] sm:$0xf] %vm706, %v686
      %720 = vst.msk [vmem:[%s444 + $0x34] sm:$0xf] %vm706, %v687
      %721 = vst.msk [vmem:[%s444 + $0x38] sm:$0xf] %vm706, %v688
      %722 = vst.msk [vmem:[%s444 + $0x3c] sm:$0xf] %vm706, %v689
      %v723 = vld [vmem:[%s429] sm:$0xff]
      %v724 = vld [vmem:[%s429 + $0x8] sm:$0xff]
      %v725 = vld [vmem:[%s429 + $0x10] sm:$0xff]
      %v726 = vld [vmem:[%s429 + $0x18] sm:$0xff]
      %v727 = vld [vmem:[%s429 + $0x20] sm:$0xff]
      %v728 = vld [vmem:[%s429 + $0x28] sm:$0xff]
      %v729 = vld [vmem:[%s429 + $0x30] sm:$0xff]
      %v730 = vld [vmem:[%s429 + $0x38] sm:$0xff]
      %v731 = vld [vmem:[%s418] sm:$0xff]
      %v732 = vld [vmem:[%s418 + $0x8] sm:$0xff]
      %v733 = vld [vmem:[%s418 + $0x10] sm:$0xff]
      %v734 = vld [vmem:[%s418 + $0x18] sm:$0xff]
      %v735 = vld [vmem:[%s418 + $0x20] sm:$0xff]
      %v736 = vld [vmem:[%s418 + $0x28] sm:$0xff]
      %v737 = vld [vmem:[%s418 + $0x30] sm:$0xff]
      %v738 = vld [vmem:[%s418 + $0x38] sm:$0xff]
      %v739 = vld [vmem:[%s418 + $0x40] sm:$0xff]
      %v740 = vld [vmem:[%s418 + $0x48] sm:$0xff]
      %v741 = vld [vmem:[%s418 + $0x50] sm:$0xff]
      %v742 = vld [vmem:[%s418 + $0x58] sm:$0xff]
      %v743 = vld [vmem:[%s418 + $0x60] sm:$0xff]
      %v744 = vld [vmem:[%s418 + $0x68] sm:$0xff]
      %v745 = vld [vmem:[%s418 + $0x70] sm:$0xff]
      %v746 = vld [vmem:[%s418 + $0x78] sm:$0xff]
      %v747 = vld [vmem:[%s435] sm:$0x1]
      %v749 = vlaneseq
      %v750 = vshrl.u32 %v749, 7
      %v751 = vsub.s32 0, %v750
      %v752 = vrot.slane %v747, %v751
      %v754 = vmul.f32 %v731, %v752
      %v755 = vmul.f32 %v732, %v752
      %v756 = vmul.f32 %v733, %v752
      %v757 = vmul.f32 %v734, %v752
      %v758 = vmul.f32 %v735, %v752
      %v759 = vmul.f32 %v736, %v752
      %v760 = vmul.f32 %v737, %v752
      %v761 = vmul.f32 %v738, %v752
      %v762 = vmul.f32 %v739, %v752
      %v763 = vmul.f32 %v740, %v752
      %v764 = vmul.f32 %v741, %v752
      %v765 = vmul.f32 %v742, %v752
      %v766 = vmul.f32 %v743, %v752
      %v767 = vmul.f32 %v744, %v752
      %v768 = vmul.f32 %v745, %v752
      %v769 = vmul.f32 %v746, %v752
      %v770 = vadd.f32 %v754, 0.0
      %v771 = vadd.f32 %v755, 0.0
      %v772 = vadd.f32 %v756, 0.0
      %v773 = vadd.f32 %v757, 0.0
      %v774 = vadd.f32 %v758, 0.0
      %v775 = vadd.f32 %v759, 0.0
      %v776 = vadd.f32 %v760, 0.0
      %v777 = vadd.f32 %v761, 0.0
      %v778 = vadd.f32 %v762, 0.0
      %v779 = vadd.f32 %v763, 0.0
      %v780 = vadd.f32 %v764, 0.0
      %v781 = vadd.f32 %v765, 0.0
      %v782 = vadd.f32 %v766, 0.0
      %v783 = vadd.f32 %v767, 0.0
      %v784 = vadd.f32 %v768, 0.0
      %v785 = vadd.f32 %v769, 0.0
      %v787 = vsel %vm520, %v464, 0
      %v790 = vsel %vm520, %v465, 0
      %v793 = vsel %vm520, %v466, 0
      %v796 = vsel %vm520, %v467, 0
      %v799 = vsel %vm520, %v468, 0
      %v802 = vsel %vm520, %v469, 0
      %v805 = vsel %vm520, %v470, 0
      %v808 = vsel %vm520, %v471, 0
      %v811 = vsel %vm520, %v472, 0
      %v814 = vsel %vm520, %v473, 0
      %v817 = vsel %vm520, %v474, 0
      %v820 = vsel %vm520, %v475, 0
      %v823 = vsel %vm520, %v476, 0
      %v826 = vsel %vm520, %v477, 0
      %v829 = vsel %vm520, %v478, 0
      %v832 = vsel %vm520, %v479, 0
      %834 = vmatprep.subr.mxu0 0.0
      %835 = vmatpush1.msra.mxu0 %v723
      %836 = vmatprep.subr.mxu0 0.0
      %837 = vmatpush1.msra.mxu0 %v724
      %838 = vmatprep.subr.mxu0 0.0
      %839 = vmatpush1.msra.mxu0 %v725
      %840 = vmatprep.subr.mxu0 0.0
      %841 = vmatpush1.msra.mxu0 %v726
      %842 = vmatprep.subr.mxu0 0.0
      %843 = vmatpush1.msra.mxu0 %v727
      %844 = vmatprep.subr.mxu0 0.0
      %845 = vmatpush1.msra.mxu0 %v728
      %846 = vmatprep.subr.mxu0 0.0
      %847 = vmatpush1.msra.mxu0 %v729
      %848 = vmatprep.subr.mxu0 0.0
      %849 = vmatpush1.msra.mxu0 %v730
      %850 = vmatprep.subr.mxu0 0.0
      %851 = vmatpush1.msra.mxu0 0.0
      %852 = vmatprep.subr.mxu0 0.0
      %853 = vmatpush1.msra.mxu0 0.0
      %854 = vmatprep.subr.mxu0 0.0
      %855 = vmatpush1.msra.mxu0 0.0
      %856 = vmatprep.subr.mxu0 0.0
      %857 = vmatpush1.msra.mxu0 0.0
      %858 = vmatprep.subr.mxu0 0.0
      %859 = vmatpush1.msra.mxu0 0.0
      %860 = vmatprep.subr.mxu0 0.0
      %861 = vmatpush1.msra.mxu0 0.0
      %862 = vmatprep.subr.mxu0 0.0
      %863 = vmatpush1.msra.mxu0 0.0
      %864 = vmatprep.subr.mxu0 0.0
      %865 = vmatpush1.msra.mxu0 0.0
      %866 = vmatprep.subr.mxu0 0.0
      %867 = vmatpush1.msra.mxu0 0.0
      %868 = vmatprep.subr.mxu0 0.0
      %869 = vmatpush1.msra.mxu0 0.0
      %870 = vmatprep.subr.mxu0 0.0
      %871 = vmatpush1.msra.mxu0 0.0
      %872 = vmatprep.subr.mxu0 0.0
      %873 = vmatpush1.msra.mxu0 0.0
      %874 = vmatprep.subr.mxu0 0.0
      %875 = vmatpush1.msra.mxu0 0.0
      %876 = vmatprep.subr.mxu0 0.0
      %877 = vmatpush1.msra.mxu0 0.0
      %878 = vmatprep.subr.mxu0 0.0
      %879 = vmatpush1.msra.mxu0 0.0
      %880 = vmatprep.subr.mxu0 0.0
      %881 = vmatpush1.msra.mxu0 0.0
      %882 = vmatprep.subr.mxu0 0.0
      %883 = vmatpush1.msra.mxu0 0.0
      %884 = vmatprep.subr.mxu0 0.0
      %885 = vmatpush1.msra.mxu0 0.0
      %886 = vmatprep.subr.mxu0 0.0
      %887 = vmatpush1.msra.mxu0 0.0
      %888 = vmatprep.subr.mxu0 0.0
      %889 = vmatpush1.msra.mxu0 0.0
      %890 = vmatprep.subr.mxu0 0.0
      %891 = vmatpush1.msra.mxu0 0.0
      %892 = vmatprep.subr.mxu0 0.0
      %893 = vmatpush1.msra.mxu0 0.0
      %894 = vmatprep.subr.mxu0 0.0
      %895 = vmatpush1.msra.mxu0 0.0
      %896 = vmatprep.subr.mxu0 0.0
      %897 = vmatpush1.msra.mxu0 0.0
      %898 = vmatprep.mubr.f32.mxu0 0.0
      %899 = vmatmul.mubr.f32.gmra.mrb[0].mxu0 %v787
      %v900 = vpop.f32.mrb[0].mxu0
      %v901 = vadd.f32 %v770, %v900
      %v902 = vpop.f32.mrb[0].mxu0
      %903 = vmatprep.mubr.f32.mxu0 0.0
      %904 = vmatmul.mubr.f32.gmra.mrb[0].mxu0 %v790
      %v905 = vpop.f32.mrb[0].mxu0
      %v906 = vadd.f32 %v771, %v905
      %v907 = vpop.f32.mrb[0].mxu0
      %908 = vmatprep.mubr.f32.mxu0 0.0
      %909 = vmatmul.mubr.f32.gmra.mrb[0].mxu0 %v793
      %v910 = vpop.f32.mrb[0].mxu0
      %v911 = vadd.f32 %v772, %v910
      %v912 = vpop.f32.mrb[0].mxu0
      %913 = vmatprep.mubr.f32.mxu0 0.0
      %914 = vmatmul.mubr.f32.gmra.mrb[0].mxu0 %v796
      %v915 = vpop.f32.mrb[0].mxu0
      %v916 = vadd.f32 %v773, %v915
      %v917 = vpop.f32.mrb[0].mxu0
      %918 = vmatprep.mubr.f32.mxu0 0.0
      %919 = vmatmul.mubr.f32.gmra.mrb[0].mxu0 %v799
      %v920 = vpop.f32.mrb[0].mxu0
      %v921 = vadd.f32 %v774, %v920
      %v922 = vpop.f32.mrb[0].mxu0
      %923 = vmatprep.mubr.f32.mxu0 0.0
      %924 = vmatmul.mubr.f32.gmra.mrb[0].mxu0 %v802
      %v925 = vpop.f32.mrb[0].mxu0
      %v926 = vadd.f32 %v775, %v925
      %v927 = vpop.f32.mrb[0].mxu0
      %928 = vmatprep.mubr.f32.mxu0 0.0
      %929 = vmatmul.mubr.f32.gmra.mrb[0].mxu0 %v805
      %v930 = vpop.f32.mrb[0].mxu0
      %v931 = vadd.f32 %v776, %v930
      %v932 = vpop.f32.mrb[0].mxu0
      %933 = vmatprep.mubr.f32.mxu0 0.0
      %934 = vmatmul.mubr.f32.gmra.mrb[0].mxu0 %v808
      %v935 = vpop.f32.mrb[0].mxu0
      %v936 = vadd.f32 %v777, %v935
      %v937 = vpop.f32.mrb[0].mxu0
      %938 = vmatprep.mubr.f32.mxu0 0.0
      %939 = vmatmul.mubr.f32.gmra.mrb[0].mxu0 %v811
      %v940 = vpop.f32.mrb[0].mxu0
      %v941 = vadd.f32 %v778, %v940
      %v942 = vpop.f32.mrb[0].mxu0
      %943 = vmatprep.mubr.f32.mxu0 0.0
      %944 = vmatmul.mubr.f32.gmra.mrb[0].mxu0 %v814
      %v945 = vpop.f32.mrb[0].mxu0
      %v946 = vadd.f32 %v779, %v945
      %v947 = vpop.f32.mrb[0].mxu0
      %948 = vmatprep.mubr.f32.mxu0 0.0
      %949 = vmatmul.mubr.f32.gmra.mrb[0].mxu0 %v817
      %v950 = vpop.f32.mrb[0].mxu0
      %v951 = vadd.f32 %v780, %v950
      %v952 = vpop.f32.mrb[0].mxu0
      %953 = vmatprep.mubr.f32.mxu0 0.0
      %954 = vmatmul.mubr.f32.gmra.mrb[0].mxu0 %v820
      %v955 = vpop.f32.mrb[0].mxu0
      %v956 = vadd.f32 %v781, %v955
      %v957 = vpop.f32.mrb[0].mxu0
      %958 = vmatprep.mubr.f32.mxu0 0.0
      %959 = vmatmul.mubr.f32.gmra.mrb[0].mxu0 %v823
      %v960 = vpop.f32.mrb[0].mxu0
      %v961 = vadd.f32 %v782, %v960
      %v962 = vpop.f32.mrb[0].mxu0
      %963 = vmatprep.mubr.f32.mxu0 0.0
      %964 = vmatmul.mubr.f32.gmra.mrb[0].mxu0 %v826
      %v965 = vpop.f32.mrb[0].mxu0
      %v966 = vadd.f32 %v783, %v965
      %v967 = vpop.f32.mrb[0].mxu0
      %968 = vmatprep.mubr.f32.mxu0 0.0
      %969 = vmatmul.mubr.f32.gmra.mrb[0].mxu0 %v829
      %v970 = vpop.f32.mrb[0].mxu0
      %v971 = vadd.f32 %v784, %v970
      %v972 = vpop.f32.mrb[0].mxu0
      %973 = vmatprep.mubr.f32.mxu0 0.0
      %974 = vmatmul.mubr.f32.gmra.mrb[0].mxu0 %v832
      %v975 = vpop.f32.mrb[0].mxu0
      %v976 = vadd.f32 %v785, %v975
      %v977 = vpop.f32.mrb[0].mxu0
      %978 = vdwg.mxu0
      %vm979 = vcmask 7168
      %980 = vst.msk [vmem:[%s454] sm:$0xff] %vm979, %v901
      %981 = vst.msk [vmem:[%s454 + $0x8] sm:$0xff] %vm979, %v906
      %982 = vst.msk [vmem:[%s454 + $0x10] sm:$0xff] %vm979, %v911
      %983 = vst.msk [vmem:[%s454 + $0x18] sm:$0xff] %vm979, %v916
      %984 = vst.msk [vmem:[%s454 + $0x20] sm:$0xff] %vm979, %v921
      %985 = vst.msk [vmem:[%s454 + $0x28] sm:$0xff] %vm979, %v926
      %986 = vst.msk [vmem:[%s454 + $0x30] sm:$0xff] %vm979, %v931
      %987 = vst.msk [vmem:[%s454 + $0x38] sm:$0xff] %vm979, %v936
      %988 = vst.msk [vmem:[%s454 + $0x40] sm:$0xff] %vm979, %v941
      %989 = vst.msk [vmem:[%s454 + $0x48] sm:$0xff] %vm979, %v946
      %990 = vst.msk [vmem:[%s454 + $0x50] sm:$0xff] %vm979, %v951
      %991 = vst.msk [vmem:[%s454 + $0x58] sm:$0xff] %vm979, %v956
      %992 = vst.msk [vmem:[%s454 + $0x60] sm:$0xff] %vm979, %v961
      %993 = vst.msk [vmem:[%s454 + $0x68] sm:$0xff] %vm979, %v966
      %994 = vst.msk [vmem:[%s454 + $0x70] sm:$0xff] %vm979, %v971
      %995 = vst.msk [vmem:[%s454 + $0x78] sm:$0xff] %vm979, %v976
      %v996 = vld [vmem:[%s432] sm:$0x1]
      %v998 = vsel %vm520, %v996, 0
      %1000 = vmatprep.subr.mxu0 0.0
      %1001 = vmatpush1.xpose.msra.mxu0 %v787
      %1002 = vmatprep.subr.mxu0 0.0
      %1003 = vmatpush1.xpose.msra.mxu0 %v790
      %1004 = vmatprep.subr.mxu0 0.0
      %1005 = vmatpush1.xpose.msra.mxu0 %v793
      %1006 = vmatprep.subr.mxu0 0.0
      %1007 = vmatpush1.xpose.msra.mxu0 %v796
      %1008 = vmatprep.subr.mxu0 0.0
      %1009 = vmatpush1.xpose.msra.mxu0 %v799
      %1010 = vmatprep.subr.mxu0 0.0
      %1011 = vmatpush1.xpose.msra.mxu0 %v802
      %1012 = vmatprep.subr.mxu0 0.0
      %1013 = vmatpush1.xpose.msra.mxu0 %v805
      %1014 = vmatprep.subr.mxu0 0.0
      %1015 = vmatpush1.xpose.msra.mxu0 %v808
      %1016 = vmatprep.subr.mxu0 0.0
      %1017 = vmatpush1.xpose.msra.mxu0 %v811
      %1018 = vmatprep.subr.mxu0 0.0
      %1019 = vmatpush1.xpose.msra.mxu0 %v814
      %1020 = vmatprep.subr.mxu0 0.0
      %1021 = vmatpush1.xpose.msra.mxu0 %v817
      %1022 = vmatprep.subr.mxu0 0.0
      %1023 = vmatpush1.xpose.msra.mxu0 %v820
      %1024 = vmatprep.subr.mxu0 0.0
      %1025 = vmatpush1.xpose.msra.mxu0 %v823
      %1026 = vmatprep.subr.mxu0 0.0
      %1027 = vmatpush1.xpose.msra.mxu0 %v826
      %1028 = vmatprep.subr.mxu0 0.0
      %1029 = vmatpush1.xpose.msra.mxu0 %v829
      %1030 = vmatprep.subr.mxu0 0.0
      %1031 = vmatpush1.xpose.msra.mxu0 %v832
      %1032 = vmatprep.subr.mxu0 0.0
      %1033 = vmatpush1.xpose.msra.mxu0 0.0
      %1034 = vmatprep.subr.mxu0 0.0
      %1035 = vmatpush1.xpose.msra.mxu0 0.0
      %1036 = vmatprep.subr.mxu0 0.0
      %1037 = vmatpush1.xpose.msra.mxu0 0.0
      %1038 = vmatprep.subr.mxu0 0.0
      %1039 = vmatpush1.xpose.msra.mxu0 0.0
      %1040 = vmatprep.subr.mxu0 0.0
      %1041 = vmatpush1.xpose.msra.mxu0 0.0
      %1042 = vmatprep.subr.mxu0 0.0
      %1043 = vmatpush1.xpose.msra.mxu0 0.0
      %1044 = vmatprep.subr.mxu0 0.0
      %1045 = vmatpush1.xpose.msra.mxu0 0.0
      %1046 = vmatprep.subr.mxu0 0.0
      %1047 = vmatpush1.xpose.msra.mxu0 0.0
      %1048 = vmatprep.subr.mxu0 0.0
      %1049 = vmatpush1.xpose.msra.mxu0 0.0
      %1050 = vmatprep.subr.mxu0 0.0
      %1051 = vmatpush1.xpose.msra.mxu0 0.0
      %1052 = vmatprep.subr.mxu0 0.0
      %1053 = vmatpush1.xpose.msra.mxu0 0.0
      %1054 = vmatprep.subr.mxu0 0.0
      %1055 = vmatpush1.xpose.msra.mxu0 0.0
      %1056 = vmatprep.subr.mxu0 0.0
      %1057 = vmatpush1.xpose.msra.mxu0 0.0
      %1058 = vmatprep.subr.mxu0 0.0
      %1059 = vmatpush1.xpose.msra.mxu0 0.0
      %1060 = vmatprep.subr.mxu0 0.0
      %1061 = vmatpush1.xpose.msra.mxu0 0.0
      %1062 = vmatprep.subr.mxu0 0.0
      %1063 = vmatpush1.xpose.msra.mxu0 0.0
      %1064 = vmatprep.mubr.f32.mxu0 0.0
      %1065 = vmatmul.mubr.f32.gmra.mrb[0].mxu0 %v998
      %v1066 = vpop.f32.mrb[0].mxu0
      %v1067 = vadd.f32 0.0, %v1066
      %v1068 = vpop.f32.mrb[0].mxu0
      %1069 = vdwg.mxu0
      %1070 = vst [vmem:[%s462] sm:$0x1] %v1067
      %s1071 = smul.u32 16, %s24
      %p1072 = scmp.lt.s32.totalorder %s25, 3
      %s1073 = scalar_select %p1072, %s25, 3
      %p1074 = scmp.lt.s32.totalorder %s1071, 31
      %s1075 = scalar_select %p1074, %s1071, 31
      %s1076 = smul.addr %s1073, 32
      %s1077 = sadd.s32 %s1075, %s1076
      %s1078 = smul.addr %s1077, 4
      %s1079 = scalar_lea.vmem %s6, %s1078
      %s1080 = smul.u32 16, %s24
      %p1081 = scmp.lt.s32.totalorder %s25, 3
      %s1082 = scalar_select %p1081, %s25, 3
      %p1083 = scmp.lt.s32.totalorder %s1080, 31
      %s1084 = scalar_select %p1083, %s1080, 31
      %s1085 = smul.addr %s1082, 32
      %s1086 = sadd.s32 %s1084, %s1085
      %s1087 = smul.addr %s1086, 8
      %s1088 = scalar_lea.vmem %s7, %s1087
      %p1089 = scmp.lt.s32.totalorder %s25, 3
      %s1090 = scalar_select %p1089, %s25, 3
      %p1091 = scmp.lt.s32.totalorder %s24, 1
      %s1092 = scalar_select %p1091, %s24, 1
      %s1093 = smul.addr %s1090, 2
      %s1094 = sadd.s32 %s1092, %s1093
      %s1095 = scalar_lea.vmem %s8, %s1094
      // Predicated region
      $region45: #{gat_forward.4} parent=43 // pred_check
        %p1096 = pneg %p208
      $region46: #{gat_forward.4} parent=43 // pred_check_branch
        %1098 = sbr.rel (%p1096) target = $region48
      $region47: #{gat_forward.4} parent=43 // pred_region
        %s1099 = smul.u32 16, %s24
      $region48: #{gat_forward.4} parent=43 // pred_fallthru
        _
      // Predicated region
      $region49: #{gat_forward.4} parent=43 // pred_check
        %p1100 = pneg %p236
      $region50: #{gat_forward.4} parent=43 // pred_check_branch
        %1102 = sbr.rel (%p1100) target = $region52
      $region51: #{gat_forward.4} parent=43 // pred_region
        %s1103 = smul.u32 16, %s24
      $region52: #{gat_forward.4} parent=43 // pred_fallthru
        _
      // Predicated region
      $region53: #{gat_forward.4} parent=43 // pred_check
        %p1104 = pneg %p264
      $region54: #{gat_forward.4} parent=43 // pred_check_branch
        %1106 = sbr.rel (%p1104) target = $region56
      $region55: #{gat_forward.4} parent=43 // pred_region
        _
      $region56: #{gat_forward.4} parent=43 // pred_fallthru
        _
    $region44: #{gat_forward.4} parent=5 // pred_fallthru
      _
    %p1107 = scmp.le.s32.totalorder 2, %s15
    // Predicated region
    $region57: #{gat_forward.4} parent=5 // pred_check
      %p1108 = pneg %p1107
    $region58: #{gat_forward.4} parent=5 // pred_check_branch
      %1110 = sbr.rel (%p1108) target = $region60
    $region59: #{gat_forward.4} parent=5 // pred_region
      %s1111 = ssub.s32 %s15, 2
      // Predicated region
      $region61: #{gat_forward.4} parent=59 // pred_check
        %p1112 = pneg %p214
      $region62: #{gat_forward.4} parent=59 // pred_check_branch
        %1114 = sbr.rel (%p1112) target = $region64
      $region63: #{gat_forward.4} parent=59 // pred_region
        %s1115 = smul.u32 16, %s26
        %p1116 = scmp.lt.s32.totalorder %s27, 3
        %s1117 = scalar_select %p1116, %s27, 3
        %p1118 = scmp.lt.s32.totalorder %s1115, 31
        %s1119 = scalar_select %p1118, %s1115, 31
        %s1120 = smul.addr %s1117, 32
        %s1121 = sadd.s32 %s1119, %s1120
        %s1122 = smul.addr %s1121, 4
        %s1123 = scalar_lea.vmem %s6, %s1122
      $region64: #{gat_forward.4} parent=59 // pred_fallthru
        _
      // Predicated region
      $region65: #{gat_forward.4} parent=59 // pred_check
        %p1124 = pneg %p242
      $region66: #{gat_forward.4} parent=59 // pred_check_branch
        %1126 = sbr.rel (%p1124) target = $region68
      $region67: #{gat_forward.4} parent=59 // pred_region
        %s1127 = smul.u32 16, %s26
        %p1128 = scmp.lt.s32.totalorder %s27, 3
        %s1129 = scalar_select %p1128, %s27, 3
        %p1130 = scmp.lt.s32.totalorder %s1127, 31
        %s1131 = scalar_select %p1130, %s1127, 31
        %s1132 = smul.addr %s1129, 32
        %s1133 = sadd.s32 %s1131, %s1132
        %s1134 = smul.addr %s1133, 8
        %s1135 = scalar_lea.vmem %s7, %s1134
      $region68: #{gat_forward.4} parent=59 // pred_fallthru
        _
      // Predicated region
      $region69: #{gat_forward.4} parent=59 // pred_check
        %p1136 = pneg %p270
      $region70: #{gat_forward.4} parent=59 // pred_check_branch
        %1138 = sbr.rel (%p1136) target = $region72
      $region71: #{gat_forward.4} parent=59 // pred_region
        %p1139 = scmp.lt.s32.totalorder %s27, 3
        %s1140 = scalar_select %p1139, %s27, 3
        %p1141 = scmp.lt.s32.totalorder %s26, 1
        %s1142 = scalar_select %p1141, %s26, 1
        %s1143 = smul.addr %s1140, 2
        %s1144 = sadd.s32 %s1142, %s1143
        %s1145 = scalar_lea.vmem %s8, %s1144
      $region72: #{gat_forward.4} parent=59 // pred_fallthru
        _
    $region60: #{gat_forward.4} parent=5 // pred_fallthru
      _
  $region6: #{gat_forward.4} parent=0 // loop_footer
    %s19 = sadd.s32 1, %s15
  $region7: #{gat_forward.4} parent=0 // loop_footer_branch
    %14 = sbr.rel target = $region3
  $region8: #{gat_forward.4} parent=0 // loop_exit
    _

// kernel: gat_forward.5
$region0: #{gat_forward.5}
  #allocation0 [shape = 'u32[]', space=smem, size = 0x4, offset = 0x4, fixed_abs, tag = 'smem constant byte address 0x4 - core index']
  #allocation1 [shape = 'u32[144,128]{1,0:T(1,128)}', space=vmem, size = 0x12000, scoped, tag = 'internal scratch']
  %s0 = inlined_call_operand.vmem [shape: f32[4,256,1], index: 0, kind: input, shape index: {}]
  %s1 = inlined_call_operand.vmem [shape: f32[4,1,256], index: 1, kind: input, shape index: {}]
  %s2 = inlined_call_operand.vmem [shape: s8[256,256], index: 2, kind: input, shape index: {}]
  %s3 = inlined_call_operand.vmem [shape: bf16[4,256,16], index: 3, kind: input, shape index: {}]
  %s4 = inlined_call_operand.vmem [shape: f32[4,256,16], index: 4, kind: output, shape index: {}]
  %s5 = sld [smem:[#allocation0]]
  $region49: #{gat_forward.5} parent=0
    _
  %s7 = ssub.s32 1, %s5
  %s8 = scalar_select 0, %s7, %s5
  loop: start=0, step=1, limit=10
  $region2: #{gat_forward.5} parent=0 // loop_pre_header
    _
  $region3: #{gat_forward.5} parent=0 // loop_header
    %s10 = sphi 0, %s14
    %p11 = scmp.ge.s32.totalorder %s10, 10
    %s17 = sphi 0, %s29
    %s18 = sphi 0, %s25
    %s19 = sphi 0, %s17
    %s20 = sphi 0, %s18
    %s21 = sphi 0, %s19
    %s22 = sphi 0, %s20
    %s34 = sphi 0, %s36
    %s37 = sphi 0, %s34
    %s38 = sphi 0, %s37
    %s54 = sphi 0, %s38
    %s60 = sphi 0, %s62
    %s63 = sphi 0, %s60
    %s64 = sphi 0, %s63
    %s80 = sphi 0, %s64
    %s86 = sphi 0, %s88
    %s89 = sphi 0, %s86
    %s90 = sphi 0, %s89
    %s106 = sphi 0, %s90
    %s112 = sphi 0, %s114
    %s115 = sphi 0, %s112
    %s116 = sphi 0, %s115
    %s132 = sphi 0, %s116
    %s140 = sphi 0, %s142
    %s143 = sphi 0, %s140
    %s144 = sphi 0, %s143
    %s160 = sphi 0, %s144
  $region4: #{gat_forward.5} parent=0 // loop_header_branch
    %13 = sbr.rel (%p11) target = $region8
  $region5: #{gat_forward.5} parent=0 // loop_body
    %s15 = ssub.s32 %s10, 1
    %s16 = ssub.s32 %s10, 2
    %s23 = sadd.s32 1, %s18
    %p24 = scmp.ge.s32.totalorder %s23, 4
    %s25 = scalar_select %p24, 0, %s23
    %s26 = sadd.s32 1, %s17
    %s27 = scalar_select %p24, %s26, %s17
    %p28 = scmp.ge.s32.totalorder %s27, 2
    %s29 = scalar_select %p28, 0, %s27
    %s30 = ssub.s32 %s18, %s25
    %s31 = ssub.s32 %s17, %s29
    %s32 = sor.u32 %s30, %s31
    %p33 = scmp.eq.s32.totalorder %s32, 0
    %s35 = sadd.s32 %s34, 1
    %s36 = scalar_select %p33, %s34, %s35
    %p39 = pneg %p33
    %p40 = scmp.eq.s32.totalorder %s10, 7
    %p41 = por %p39, %p40
    %p42 = scmp.ne.s32.totalorder %s34, %s37
    %p43 = scmp.eq.s32.totalorder %s10, 0
    %p44 = por %p42, %p43
    %p45 = scmp.ne.s32.totalorder %s34, %s37
    %p46 = scmp.eq.s32.totalorder %s15, 7
    %p47 = por %p45, %p46
    %p48 = scmp.ne.s32.totalorder %s37, %s38
    %p49 = scmp.eq.s32.totalorder %s15, 0
    %p50 = por %p48, %p49
    %p51 = scmp.ne.s32.totalorder %s37, %s38
    %p52 = scmp.eq.s32.totalorder %s16, 7
    %p53 = por %p51, %p52
    %p55 = scmp.ne.s32.totalorder %s38, %s54
    %p56 = scmp.eq.s32.totalorder %s16, 0
    %p57 = por %p55, %p56
    %s58 = ssub.s32 %s18, %s25
    %p59 = scmp.eq.s32.totalorder %s58, 0
    %s61 = sadd.s32 %s60, 1
    %s62 = scalar_select %p59, %s60, %s61
    %p65 = pneg %p59
    %p66 = scmp.eq.s32.totalorder %s10, 7
    %p67 = por %p65, %p66
    %p68 = scmp.ne.s32.totalorder %s60, %s63
    %p69 = scmp.eq.s32.totalorder %s10, 0
    %p70 = por %p68, %p69
    %p71 = scmp.ne.s32.totalorder %s60, %s63
    %p72 = scmp.eq.s32.totalorder %s15, 7
    %p73 = por %p71, %p72
    %p74 = scmp.ne.s32.totalorder %s63, %s64
    %p75 = scmp.eq.s32.totalorder %s15, 0
    %p76 = por %p74, %p75
    %p77 = scmp.ne.s32.totalorder %s63, %s64
    %p78 = scmp.eq.s32.totalorder %s16, 7
    %p79 = por %p77, %p78
    %p81 = scmp.ne.s32.totalorder %s64, %s80
    %p82 = scmp.eq.s32.totalorder %s16, 0
    %p83 = por %p81, %p82
    %s84 = ssub.s32 %s17, %s29
    %p85 = scmp.eq.s32.totalorder %s84, 0
    %s87 = sadd.s32 %s86, 1
    %s88 = scalar_select %p85, %s86, %s87
    %p91 = pneg %p85
    %p92 = scmp.eq.s32.totalorder %s10, 7
    %p93 = por %p91, %p92
    %p94 = scmp.ne.s32.totalorder %s86, %s89
    %p95 = scmp.eq.s32.totalorder %s10, 0
    %p96 = por %p94, %p95
    %p97 = scmp.ne.s32.totalorder %s86, %s89
    %p98 = scmp.eq.s32.totalorder %s15, 7
    %p99 = por %p97, %p98
    %p100 = scmp.ne.s32.totalorder %s89, %s90
    %p101 = scmp.eq.s32.totalorder %s15, 0
    %p102 = por %p100, %p101
    %p103 = scmp.ne.s32.totalorder %s89, %s90
    %p104 = scmp.eq.s32.totalorder %s16, 7
    %p105 = por %p103, %p104
    %p107 = scmp.ne.s32.totalorder %s90, %s106
    %p108 = scmp.eq.s32.totalorder %s16, 0
    %p109 = por %p107, %p108
    %s110 = ssub.s32 %s18, %s25
    %p111 = scmp.eq.s32.totalorder %s110, 0
    %s113 = sadd.s32 %s112, 1
    %s114 = scalar_select %p111, %s112, %s113
    %p117 = pneg %p111
    %p118 = scmp.eq.s32.totalorder %s10, 7
    %p119 = por %p117, %p118
    %p120 = scmp.ne.s32.totalorder %s112, %s115
    %p121 = scmp.eq.s32.totalorder %s10, 0
    %p122 = por %p120, %p121
    %p123 = scmp.ne.s32.totalorder %s112, %s115
    %p124 = scmp.eq.s32.totalorder %s15, 7
    %p125 = por %p123, %p124
    %p126 = scmp.ne.s32.totalorder %s115, %s116
    %p127 = scmp.eq.s32.totalorder %s15, 0
    %p128 = por %p126, %p127
    %p129 = scmp.ne.s32.totalorder %s115, %s116
    %p130 = scmp.eq.s32.totalorder %s16, 7
    %p131 = por %p129, %p130
    %p133 = scmp.ne.s32.totalorder %s116, %s132
    %p134 = scmp.eq.s32.totalorder %s16, 0
    %p135 = por %p133, %p134
    %s136 = ssub.s32 %s18, %s25
    %s137 = ssub.s32 %s17, %s29
    %s138 = sor.u32 %s136, %s137
    %p139 = scmp.eq.s32.totalorder %s138, 0
    %s141 = sadd.s32 %s140, 1
    %s142 = scalar_select %p139, %s140, %s141
    %p145 = pneg %p139
    %p146 = scmp.eq.s32.totalorder %s10, 7
    %p147 = por %p145, %p146
    %p148 = scmp.ne.s32.totalorder %s140, %s143
    %p149 = scmp.eq.s32.totalorder %s10, 0
    %p150 = por %p148, %p149
    %p151 = scmp.ne.s32.totalorder %s140, %s143
    %p152 = scmp.eq.s32.totalorder %s15, 7
    %p153 = por %p151, %p152
    %p154 = scmp.ne.s32.totalorder %s143, %s144
    %p155 = scmp.eq.s32.totalorder %s15, 0
    %p156 = por %p154, %p155
    %p157 = scmp.ne.s32.totalorder %s143, %s144
    %p158 = scmp.eq.s32.totalorder %s16, 7
    %p159 = por %p157, %p158
    %p161 = scmp.ne.s32.totalorder %s144, %s160
    %p162 = scmp.eq.s32.totalorder %s16, 0
    %p163 = por %p161, %p162
    %p164 = scmp.le.s32.totalorder 1, %s10
    %p165 = scmp.lt.s32.totalorder %s10, 9
    %p166 = pnand %p164, %p165
    %p167 = pneg %p166
    // Predicated region
    $region9: #{gat_forward.5} parent=5 // pred_check
      _
    $region10: #{gat_forward.5} parent=5 // pred_check_branch
      %169 = sbr.rel (%p166) target = $region12
    $region11: #{gat_forward.5} parent=5 // pred_region
      %s170 = ssub.s32 %s10, 1
    $region12: #{gat_forward.5} parent=5 // pred_fallthru
      _
    %p171 = scmp.lt.s32.totalorder %s10, 8
    // Predicated region
    $region13: #{gat_forward.5} parent=5 // pred_check
      %p172 = pneg %p171
    $region14: #{gat_forward.5} parent=5 // pred_check_branch
      %174 = sbr.rel (%p172) target = $region16
    $region15: #{gat_forward.5} parent=5 // pred_region
      // Predicated region
      $region17: #{gat_forward.5} parent=15 // pred_check
        %p175 = pneg %p44
      $region18: #{gat_forward.5} parent=15 // pred_check_branch
        %177 = sbr.rel (%p175) target = $region20
      $region19: #{gat_forward.5} parent=15 // pred_region
        %s178 = smul.u32 16, %s17
        %p179 = scmp.lt.s32.totalorder %s18, 3
        %s180 = scalar_select %p179, %s18, 3
        %p181 = scmp.lt.s32.totalorder %s178, 31
        %s182 = scalar_select %p181, %s178, 31
        %s183 = smul.addr %s180, 32
        %s184 = sadd.s32 %s182, %s183
        %s185 = smul.addr %s184, 8
        %s186 = scalar_lea.vmem %s0, %s185
        %s187 = smul.u32 16, %s17
      $region20: #{gat_forward.5} parent=15 // pred_fallthru
        _
      // Predicated region
      $region21: #{gat_forward.5} parent=15 // pred_check
        %p188 = pneg %p70
      $region22: #{gat_forward.5} parent=15 // pred_check_branch
        %190 = sbr.rel (%p188) target = $region24
      $region23: #{gat_forward.5} parent=15 // pred_region
        %p191 = scmp.lt.s32.totalorder %s18, 3
        %s192 = scalar_select %p191, %s18, 3
        %s193 = smul.addr %s192, 2
        %s194 = scalar_lea.vmem %s1, %s193
      $region24: #{gat_forward.5} parent=15 // pred_fallthru
        _
      // Predicated region
      $region25: #{gat_forward.5} parent=15 // pred_check
        %p195 = pneg %p96
      $region26: #{gat_forward.5} parent=15 // pred_check_branch
        %197 = sbr.rel (%p195) target = $region28
      $region27: #{gat_forward.5} parent=15 // pred_region
        %s198 = smul.u32 4, %s17
        %p199 = scmp.lt.s32.totalorder %s198, 7
        %s200 = scalar_select %p199, %s198, 7
        %s201 = smul.addr %s200, 2
        %s202 = smul.addr %s201, 8
        %s203 = scalar_lea.vmem %s2, %s202
        %s204 = smul.u32 4, %s17
      $region28: #{gat_forward.5} parent=15 // pred_fallthru
        _
      // Predicated region
      $region29: #{gat_forward.5} parent=15 // pred_check
        %p205 = pneg %p122
      $region30: #{gat_forward.5} parent=15 // pred_check_branch
        %207 = sbr.rel (%p205) target = $region32
      $region31: #{gat_forward.5} parent=15 // pred_region
        %p208 = scmp.lt.s32.totalorder %s18, 3
        %s209 = scalar_select %p208, %s18, 3
        %s210 = smul.addr %s209, 32
        %s211 = smul.addr %s210, 4
        %s212 = scalar_lea.vmem %s3, %s211
      $region32: #{gat_forward.5} parent=15 // pred_fallthru
        _
    $region16: #{gat_forward.5} parent=5 // pred_fallthru
      _
    %p213 = scmp.le.s32.totalorder 1, %s10
    %p214 = scmp.lt.s32.totalorder %s10, 9
    %p215 = pnand %p213, %p214
    %p216 = pneg %p215
    // Predicated region
    $region33: #{gat_forward.5} parent=5 // pred_check
      _
    $region34: #{gat_forward.5} parent=5 // pred_check_branch
      %218 = sbr.rel (%p215) target = $region36
    $region35: #{gat_forward.5} parent=5 // pred_region
      %s219 = ssub.s32 %s10, 1
      %s220 = smul.u32 16, %s19
      %p221 = scmp.lt.s32.totalorder %s20, 3
      %s222 = scalar_select %p221, %s20, 3
      %p223 = scmp.lt.s32.totalorder %s220, 31
      %s224 = scalar_select %p223, %s220, 31
      %s225 = smul.addr %s222, 32
      %s226 = sadd.s32 %s224, %s225
      %s227 = smul.addr %s226, 8
      %s228 = scalar_lea.vmem %s0, %s227
      %p229 = pneg %p50
      %p230 = pneg %p47
      %p231 = scmp.lt.s32.totalorder %s20, 3
      %s232 = scalar_select %p231, %s20, 3
      %s233 = smul.addr %s232, 2
      %s234 = scalar_lea.vmem %s1, %s233
      %p235 = pneg %p76
      %p236 = pneg %p73
      %s237 = smul.u32 4, %s19
      %p238 = scmp.lt.s32.totalorder %s237, 7
      %s239 = scalar_select %p238, %s237, 7
      %s240 = smul.addr %s239, 2
      %s241 = smul.addr %s240, 8
      %s242 = scalar_lea.vmem %s2, %s241
      %p243 = pneg %p102
      %p244 = pneg %p99
      %p245 = scmp.lt.s32.totalorder %s20, 3
      %s246 = scalar_select %p245, %s20, 3
      %s247 = smul.addr %s246, 32
      %s248 = smul.addr %s247, 4
      %s249 = scalar_lea.vmem %s3, %s248
      %p250 = pneg %p128
      %p251 = pneg %p125
      %p252 = pneg %p156
      %p253 = pneg %p153
      %s254 = smul.u32 16, %s19
      %p255 = scmp.lt.s32.totalorder %s20, 3
      %s256 = scalar_select %p255, %s20, 3
      %p257 = scmp.lt.s32.totalorder %s254, 31
      %s258 = scalar_select %p257, %s254, 31
      %s259 = smul.addr %s256, 32
      %s260 = sadd.s32 %s258, %s259
      %s261 = smul.addr %s260, 8
      %s262 = scalar_lea.vmem %s4, %s261
      %s263 = smul.u32 16, %s19
      %p264 = scmp.lt.s32.totalorder %s20, 3
      %s265 = scalar_select %p264, %s20, 3
      %p266 = scmp.lt.s32.totalorder %s263, 31
      %s267 = scalar_select %p266, %s263, 31
      %s268 = smul.addr %s265, 32
      %s269 = sadd.s32 %s267, %s268
      %s270 = smul.addr %s269, 8
      %s271 = scalar_lea.vmem %s0, %s270
      %s272 = smul.u32 16, %s19
      %p273 = scmp.lt.s32.totalorder %s20, 3
      %s274 = scalar_select %p273, %s20, 3
      %s275 = smul.addr %s274, 2
      %s276 = scalar_lea.vmem %s1, %s275
      %s277 = smul.u32 4, %s19
      %p278 = scmp.lt.s32.totalorder %s277, 7
      %s279 = scalar_select %p278, %s277, 7
      %s280 = smul.addr %s279, 2
      %s281 = smul.addr %s280, 8
      %s282 = scalar_lea.vmem %s2, %s281
      %s283 = smul.u32 4, %s19
      %p284 = scmp.lt.s32.totalorder %s20, 3
      %s285 = scalar_select %p284, %s20, 3
      %s286 = smul.addr %s285, 32
      %s287 = smul.addr %s286, 4
      %s288 = scalar_lea.vmem %s3, %s287
      %s289 = smul.u32 16, %s19
      %p290 = scmp.lt.s32.totalorder %s20, 3
      %s291 = scalar_select %p290, %s20, 3
      %p292 = scmp.lt.s32.totalorder %s289, 31
      %s293 = scalar_select %p292, %s289, 31
      %s294 = smul.addr %s291, 32
      %s295 = sadd.s32 %s293, %s294
      %s296 = smul.addr %s295, 8
      %s297 = scalar_lea.vmem %s4, %s296
      %s298 = smul.u32 16, %s19
      %v302 = vld [vmem:[%s271] sm:$0xff]
      %v303 = vld [vmem:[%s271 + $0x8] sm:$0xff]
      %v304 = vld [vmem:[%s271 + $0x10] sm:$0xff]
      %v305 = vld [vmem:[%s271 + $0x18] sm:$0xff]
      %v306 = vld [vmem:[%s271 + $0x20] sm:$0xff]
      %v307 = vld [vmem:[%s271 + $0x28] sm:$0xff]
      %v308 = vld [vmem:[%s271 + $0x30] sm:$0xff]
      %v309 = vld [vmem:[%s271 + $0x38] sm:$0xff]
      %v310 = vld [vmem:[%s271 + $0x40] sm:$0xff]
      %v311 = vld [vmem:[%s271 + $0x48] sm:$0xff]
      %v312 = vld [vmem:[%s271 + $0x50] sm:$0xff]
      %v313 = vld [vmem:[%s271 + $0x58] sm:$0xff]
      %v314 = vld [vmem:[%s271 + $0x60] sm:$0xff]
      %v315 = vld [vmem:[%s271 + $0x68] sm:$0xff]
      %v316 = vld [vmem:[%s271 + $0x70] sm:$0xff]
      %v317 = vld [vmem:[%s271 + $0x78] sm:$0xff]
      %v318 = vld [vmem:[%s276] sm:$0x3]
      %320 = vset.pattern.permute.xlu0 0
      %321 = vperm.xlu0 %320, %v302
      %v322 = vpop.permute.xlu0 %321
      %325 = vset.pattern.permute.xlu0 0
      %326 = vperm.xlu0 %325, %v303
      %v327 = vpop.permute.xlu0 %326
      %330 = vset.pattern.permute.xlu0 0
      %331 = vperm.xlu0 %330, %v304
      %v332 = vpop.permute.xlu0 %331
      %335 = vset.pattern.permute.xlu0 0
      %336 = vperm.xlu0 %335, %v305
      %v337 = vpop.permute.xlu0 %336
      %340 = vset.pattern.permute.xlu0 0
      %341 = vperm.xlu0 %340, %v306
      %v342 = vpop.permute.xlu0 %341
      %345 = vset.pattern.permute.xlu0 0
      %346 = vperm.xlu0 %345, %v307
      %v347 = vpop.permute.xlu0 %346
      %350 = vset.pattern.permute.xlu0 0
      %351 = vperm.xlu0 %350, %v308
      %v352 = vpop.permute.xlu0 %351
      %355 = vset.pattern.permute.xlu0 0
      %356 = vperm.xlu0 %355, %v309
      %v357 = vpop.permute.xlu0 %356
      %360 = vset.pattern.permute.xlu0 0
      %361 = vperm.xlu0 %360, %v310
      %v362 = vpop.permute.xlu0 %361
      %365 = vset.pattern.permute.xlu0 0
      %366 = vperm.xlu0 %365, %v311
      %v367 = vpop.permute.xlu0 %366
      %370 = vset.pattern.permute.xlu0 0
      %371 = vperm.xlu0 %370, %v312
      %v372 = vpop.permute.xlu0 %371
      %375 = vset.pattern.permute.xlu0 0
      %376 = vperm.xlu0 %375, %v313
      %v377 = vpop.permute.xlu0 %376
      %380 = vset.pattern.permute.xlu0 0
      %381 = vperm.xlu0 %380, %v314
      %v382 = vpop.permute.xlu0 %381
      %385 = vset.pattern.permute.xlu0 0
      %386 = vperm.xlu0 %385, %v315
      %v387 = vpop.permute.xlu0 %386
      %390 = vset.pattern.permute.xlu0 0
      %391 = vperm.xlu0 %390, %v316
      %v392 = vpop.permute.xlu0 %391
      %395 = vset.pattern.permute.xlu0 0
      %396 = vperm.xlu0 %395, %v317
      %v397 = vpop.permute.xlu0 %396
      %v400 = vlaneseq
      %v401 = vshrl.u32 %v400, 7
      %v402 = vsub.s32 0, %v401
      %v403 = vrot.slane %v318, %v402
      %v404 = vlaneseq
      %v405 = vshrl.u32 %v404, 7
      %v406 = vsub.s32 1, %v405
      %v407 = vrot.slane %v318, %v406
      %v410 = vadd.f32 %v322, %v403
      %v411 = vadd.f32 %v322, %v407
      %v412 = vadd.f32 %v327, %v403
      %v413 = vadd.f32 %v327, %v407
      %v414 = vadd.f32 %v332, %v403
      %v415 = vadd.f32 %v332, %v407
      %v416 = vadd.f32 %v337, %v403
      %v417 = vadd.f32 %v337, %v407
      %v418 = vadd.f32 %v342, %v403
      %v419 = vadd.f32 %v342, %v407
      %v420 = vadd.f32 %v347, %v403
      %v421 = vadd.f32 %v347, %v407
      %v422 = vadd.f32 %v352, %v403
      %v423 = vadd.f32 %v352, %v407
      %v424 = vadd.f32 %v357, %v403
      %v425 = vadd.f32 %v357, %v407
      %v426 = vadd.f32 %v362, %v403
      %v427 = vadd.f32 %v362, %v407
      %v428 = vadd.f32 %v367, %v403
      %v429 = vadd.f32 %v367, %v407
      %v430 = vadd.f32 %v372, %v403
      %v431 = vadd.f32 %v372, %v407
      %v432 = vadd.f32 %v377, %v403
      %v433 = vadd.f32 %v377, %v407
      %v434 = vadd.f32 %v382, %v403
      %v435 = vadd.f32 %v382, %v407
      %v436 = vadd.f32 %v387, %v403
      %v437 = vadd.f32 %v387, %v407
      %v438 = vadd.f32 %v392, %v403
      %v439 = vadd.f32 %v392, %v407
      %v440 = vadd.f32 %v397, %v403
      %v441 = vadd.f32 %v397, %v407
      %v442 = vmul.f32 %v410, 0.2
      %v443 = vmul.f32 %v411, 0.2
      %v444 = vmul.f32 %v412, 0.2
      %v445 = vmul.f32 %v413, 0.2
      %v446 = vmul.f32 %v414, 0.2
      %v447 = vmul.f32 %v415, 0.2
      %v448 = vmul.f32 %v416, 0.2
      %v449 = vmul.f32 %v417, 0.2
      %v450 = vmul.f32 %v418, 0.2
      %v451 = vmul.f32 %v419, 0.2
      %v452 = vmul.f32 %v420, 0.2
      %v453 = vmul.f32 %v421, 0.2
      %v454 = vmul.f32 %v422, 0.2
      %v455 = vmul.f32 %v423, 0.2
      %v456 = vmul.f32 %v424, 0.2
      %v457 = vmul.f32 %v425, 0.2
      %v458 = vmul.f32 %v426, 0.2
      %v459 = vmul.f32 %v427, 0.2
      %v460 = vmul.f32 %v428, 0.2
      %v461 = vmul.f32 %v429, 0.2
      %v462 = vmul.f32 %v430, 0.2
      %v463 = vmul.f32 %v431, 0.2
      %v464 = vmul.f32 %v432, 0.2
      %v465 = vmul.f32 %v433, 0.2
      %v466 = vmul.f32 %v434, 0.2
      %v467 = vmul.f32 %v435, 0.2
      %v468 = vmul.f32 %v436, 0.2
      %v469 = vmul.f32 %v437, 0.2
      %v470 = vmul.f32 %v438, 0.2
      %v471 = vmul.f32 %v439, 0.2
      %v472 = vmul.f32 %v440, 0.2
      %v473 = vmul.f32 %v441, 0.2
      %v474 = vmax.f32 %v410, %v442
      %v475 = vmax.f32 %v411, %v443
      %v476 = vmax.f32 %v412, %v444
      %v477 = vmax.f32 %v413, %v445
      %v478 = vmax.f32 %v414, %v446
      %v479 = vmax.f32 %v415, %v447
      %v480 = vmax.f32 %v416, %v448
      %v481 = vmax.f32 %v417, %v449
      %v482 = vmax.f32 %v418, %v450
      %v483 = vmax.f32 %v419, %v451
      %v484 = vmax.f32 %v420, %v452
      %v485 = vmax.f32 %v421, %v453
      %v486 = vmax.f32 %v422, %v454
      %v487 = vmax.f32 %v423, %v455
      %v488 = vmax.f32 %v424, %v456
      %v489 = vmax.f32 %v425, %v457
      %v490 = vmax.f32 %v426, %v458
      %v491 = vmax.f32 %v427, %v459
      %v492 = vmax.f32 %v428, %v460
      %v493 = vmax.f32 %v429, %v461
      %v494 = vmax.f32 %v430, %v462
      %v495 = vmax.f32 %v431, %v463
      %v496 = vmax.f32 %v432, %v464
      %v497 = vmax.f32 %v433, %v465
      %v498 = vmax.f32 %v434, %v466
      %v499 = vmax.f32 %v435, %v467
      %v500 = vmax.f32 %v436, %v468
      %v501 = vmax.f32 %v437, %v469
      %v502 = vmax.f32 %v438, %v470
      %v503 = vmax.f32 %v439, %v471
      %v504 = vmax.f32 %v440, %v472
      %v505 = vmax.f32 %v441, %v473
      %v506 = vld [vmem:[%s282] sm:$0xff]
      %v507 = vld [vmem:[%s282 + $0x8] sm:$0xff]
      %v508 = vld [vmem:[%s282 + $0x10] sm:$0xff]
      %v509 = vld [vmem:[%s282 + $0x18] sm:$0xff]
      %v510 = vld [vmem:[%s282 + $0x20] sm:$0xff]
      %v511 = vld [vmem:[%s282 + $0x28] sm:$0xff]
      %v512 = vld [vmem:[%s282 + $0x30] sm:$0xff]
      %v513 = vld [vmem:[%s282 + $0x38] sm:$0xff]
      %vm514 = vnez %v506
      %vm515 = vnez %v507
      %vm516 = vnez %v508
      %vm517 = vnez %v509
      %vm518 = vnez %v510
      %vm519 = vnez %v511
      %vm520 = vnez %v512
      %vm521 = vnez %v513
      %v522 = vsel %vm514, 16843009, 0
      %v523 = vsel %vm515, 16843009, 0
      %v524 = vsel %vm516, 16843009, 0
      %v525 = vsel %vm517, 16843009, 0
      %v526 = vsel %vm518, 16843009, 0
      %v527 = vsel %vm519, 16843009, 0
      %v528 = vsel %vm520, 16843009, 0
      %v529 = vsel %vm521, 16843009, 0
      %v530 = vunpack.c.0.s8 %v522
      %v531 = vunpack.c.0.s8 %v523
      %v532 = vunpack.c.1.s8 %v522
      %v533 = vunpack.c.1.s8 %v523
      %v534 = vunpack.c.2.s8 %v522
      %v535 = vunpack.c.2.s8 %v523
      %v536 = vunpack.c.3.s8 %v522
      %v537 = vunpack.c.3.s8 %v523
      %v538 = vunpack.c.0.s8 %v524
      %v539 = vunpack.c.0.s8 %v525
      %v540 = vunpack.c.1.s8 %v524
      %v541 = vunpack.c.1.s8 %v525
      %v542 = vunpack.c.2.s8 %v524
      %v543 = vunpack.c.2.s8 %v525
      %v544 = vunpack.c.3.s8 %v524
      %v545 = vunpack.c.3.s8 %v525
      %v546 = vunpack.c.0.s8 %v526
      %v547 = vunpack.c.0.s8 %v527
      %v548 = vunpack.c.1.s8 %v526
      %v549 = vunpack.c.1.s8 %v527
      %v550 = vunpack.c.2.s8 %v526
      %v551 = vunpack.c.2.s8 %v527
      %v552 = vunpack.c.3.s8 %v526
      %v553 = vunpack.c.3.s8 %v527
      %v554 = vunpack.c.0.s8 %v528
      %v555 = vunpack.c.0.s8 %v529
      %v556 = vunpack.c.1.s8 %v528
      %v557 = vunpack.c.1.s8 %v529
      %v558 = vunpack.c.2.s8 %v528
      %v559 = vunpack.c.2.s8 %v529
      %v560 = vunpack.c.3.s8 %v528
      %v561 = vunpack.c.3.s8 %v529
      %v562 = vpack.c.b16 %v531, %v530
      %v563 = vpack.c.b8 %v562, %v562
      %v564 = vpack.c.b16 %v533, %v532
      %v565 = vpack.c.b8 %v564, %v564
      %v566 = vpack.c.b16 %v535, %v534
      %v567 = vpack.c.b8 %v566, %v566
      %v568 = vpack.c.b16 %v537, %v536
      %v569 = vpack.c.b8 %v568, %v568
      %v570 = vpack.c.b16 %v539, %v538
      %v571 = vpack.c.b8 %v570, %v570
      %v572 = vpack.c.b16 %v541, %v540
      %v573 = vpack.c.b8 %v572, %v572
      %v574 = vpack.c.b16 %v543, %v542
      %v575 = vpack.c.b8 %v574, %v574
      %v576 = vpack.c.b16 %v545, %v544
      %v577 = vpack.c.b8 %v576, %v576
      %v578 = vpack.c.b16 %v547, %v546
      %v579 = vpack.c.b8 %v578, %v578
      %v580 = vpack.c.b16 %v549, %v548
      %v581 = vpack.c.b8 %v580, %v580
      %v582 = vpack.c.b16 %v551, %v550
      %v583 = vpack.c.b8 %v582, %v582
      %v584 = vpack.c.b16 %v553, %v552
      %v585 = vpack.c.b8 %v584, %v584
      %v586 = vpack.c.b16 %v555, %v554
      %v587 = vpack.c.b8 %v586, %v586
      %v588 = vpack.c.b16 %v557, %v556
      %v589 = vpack.c.b8 %v588, %v588
      %v590 = vpack.c.b16 %v559, %v558
      %v591 = vpack.c.b8 %v590, %v590
      %v592 = vpack.c.b16 %v561, %v560
      %v593 = vpack.c.b8 %v592, %v592
      %vm594 = vnez %v563
      %vm595 = vnez %v565
      %vm596 = vnez %v567
      %vm597 = vnez %v569
      %vm598 = vnez %v571
      %vm599 = vnez %v573
      %vm600 = vnez %v575
      %vm601 = vnez %v577
      %vm602 = vnez %v579
      %vm603 = vnez %v581
      %vm604 = vnez %v583
      %vm605 = vnez %v585
      %vm606 = vnez %v587
      %vm607 = vnez %v589
      %vm608 = vnez %v591
      %vm609 = vnez %v593
      %v610 = vsel %vm594, 16843009, 0
      %v611 = vsel %vm595, 16843009, 0
      %v612 = vsel %vm596, 16843009, 0
      %v613 = vsel %vm597, 16843009, 0
      %v614 = vsel %vm598, 16843009, 0
      %v615 = vsel %vm599, 16843009, 0
      %v616 = vsel %vm600, 16843009, 0
      %v617 = vsel %vm601, 16843009, 0
      %v618 = vsel %vm602, 16843009, 0
      %v619 = vsel %vm603, 16843009, 0
      %v620 = vsel %vm604, 16843009, 0
      %v621 = vsel %vm605, 16843009, 0
      %v622 = vsel %vm606, 16843009, 0
      %v623 = vsel %vm607, 16843009, 0
      %v624 = vsel %vm608, 16843009, 0
      %v625 = vsel %vm609, 16843009, 0
      %v626 = vunpack.c.0.s8 %v610
      %v627 = vunpack.c.1.s8 %v610
      %v628 = vunpack.c.0.s8 %v611
      %v629 = vunpack.c.1.s8 %v611
      %v630 = vunpack.c.0.s8 %v612
      %v631 = vunpack.c.1.s8 %v612
      %v632 = vunpack.c.0.s8 %v613
      %v633 = vunpack.c.1.s8 %v613
      %v634 = vunpack.c.0.s8 %v614
      %v635 = vunpack.c.1.s8 %v614
      %v636 = vunpack.c.0.s8 %v615
      %v637 = vunpack.c.1.s8 %v615
      %v638 = vunpack.c.0.s8 %v616
      %v639 = vunpack.c.1.s8 %v616
      %v640 = vunpack.c.0.s8 %v617
      %v641 = vunpack.c.1.s8 %v617
      %v642 = vunpack.c.0.s8 %v618
      %v643 = vunpack.c.1.s8 %v618
      %v644 = vunpack.c.0.s8 %v619
      %v645 = vunpack.c.1.s8 %v619
      %v646 = vunpack.c.0.s8 %v620
      %v647 = vunpack.c.1.s8 %v620
      %v648 = vunpack.c.0.s8 %v621
      %v649 = vunpack.c.1.s8 %v621
      %v650 = vunpack.c.0.s8 %v622
      %v651 = vunpack.c.1.s8 %v622
      %v652 = vunpack.c.0.s8 %v623
      %v653 = vunpack.c.1.s8 %v623
      %v654 = vunpack.c.0.s8 %v624
      %v655 = vunpack.c.1.s8 %v624
      %v656 = vunpack.c.0.s8 %v625
      %v657 = vunpack.c.1.s8 %v625
      %vm658 = vcmp.ne.s32.totalorder %v626, 0
      %vm659 = vcmp.ne.s32.totalorder %v627, 0
      %vm660 = vcmp.ne.s32.totalorder %v628, 0
      %vm661 = vcmp.ne.s32.totalorder %v629, 0
      %vm662 = vcmp.ne.s32.totalorder %v630, 0
      %vm663 = vcmp.ne.s32.totalorder %v631, 0
      %vm664 = vcmp.ne.s32.totalorder %v632, 0
      %vm665 = vcmp.ne.s32.totalorder %v633, 0
      %vm666 = vcmp.ne.s32.totalorder %v634, 0
      %vm667 = vcmp.ne.s32.totalorder %v635, 0
      %vm668 = vcmp.ne.s32.totalorder %v636, 0
      %vm669 = vcmp.ne.s32.totalorder %v637, 0
      %vm670 = vcmp.ne.s32.totalorder %v638, 0
      %vm671 = vcmp.ne.s32.totalorder %v639, 0
      %vm672 = vcmp.ne.s32.totalorder %v640, 0
      %vm673 = vcmp.ne.s32.totalorder %v641, 0
      %vm674 = vcmp.ne.s32.totalorder %v642, 0
      %vm675 = vcmp.ne.s32.totalorder %v643, 0
      %vm676 = vcmp.ne.s32.totalorder %v644, 0
      %vm677 = vcmp.ne.s32.totalorder %v645, 0
      %vm678 = vcmp.ne.s32.totalorder %v646, 0
      %vm679 = vcmp.ne.s32.totalorder %v647, 0
      %vm680 = vcmp.ne.s32.totalorder %v648, 0
      %vm681 = vcmp.ne.s32.totalorder %v649, 0
      %vm682 = vcmp.ne.s32.totalorder %v650, 0
      %vm683 = vcmp.ne.s32.totalorder %v651, 0
      %vm684 = vcmp.ne.s32.totalorder %v652, 0
      %vm685 = vcmp.ne.s32.totalorder %v653, 0
      %vm686 = vcmp.ne.s32.totalorder %v654, 0
      %vm687 = vcmp.ne.s32.totalorder %v655, 0
      %vm688 = vcmp.ne.s32.totalorder %v656, 0
      %vm689 = vcmp.ne.s32.totalorder %v657, 0
      %v690 = vsel %vm658, %v474, -9e+15
      %v691 = vsel %vm659, %v475, -9e+15
      %v692 = vsel %vm660, %v476, -9e+15
      %v693 = vsel %vm661, %v477, -9e+15
      %v694 = vsel %vm662, %v478, -9e+15
      %v695 = vsel %vm663, %v479, -9e+15
      %v696 = vsel %vm664, %v480, -9e+15
      %v697 = vsel %vm665, %v481, -9e+15
      %v698 = vsel %vm666, %v482, -9e+15
      %v699 = vsel %vm667, %v483, -9e+15
      %v700 = vsel %vm668, %v484, -9e+15
      %v701 = vsel %vm669, %v485, -9e+15
      %v702 = vsel %vm670, %v486, -9e+15
      %v703 = vsel %vm671, %v487, -9e+15
      %v704 = vsel %vm672, %v488, -9e+15
      %v705 = vsel %vm673, %v489, -9e+15
      %v706 = vsel %vm674, %v490, -9e+15
      %v707 = vsel %vm675, %v491, -9e+15
      %v708 = vsel %vm676, %v492, -9e+15
      %v709 = vsel %vm677, %v493, -9e+15
      %v710 = vsel %vm678, %v494, -9e+15
      %v711 = vsel %vm679, %v495, -9e+15
      %v712 = vsel %vm680, %v496, -9e+15
      %v713 = vsel %vm681, %v497, -9e+15
      %v714 = vsel %vm682, %v498, -9e+15
      %v715 = vsel %vm683, %v499, -9e+15
      %v716 = vsel %vm684, %v500, -9e+15
      %v717 = vsel %vm685, %v501, -9e+15
      %v718 = vsel %vm686, %v502, -9e+15
      %v719 = vsel %vm687, %v503, -9e+15
      %v720 = vsel %vm688, %v504, -9e+15
      %v721 = vsel %vm689, %v505, -9e+15
      %v722 = vmax.f32 %v690, %v691
      %723 = vmax.xlane.f32.xlu0 %v722
      %v724 = vpop.xlane.xlu0 %723
      %v725 = vmax.f32 %v692, %v693
      %726 = vmax.xlane.f32.xlu0 %v725
      %v727 = vpop.xlane.xlu0 %726
      %v728 = vmax.f32 %v694, %v695
      %729 = vmax.xlane.f32.xlu0 %v728
      %v730 = vpop.xlane.xlu0 %729
      %v731 = vmax.f32 %v696, %v697
      %732 = vmax.xlane.f32.xlu0 %v731
      %v733 = vpop.xlane.xlu0 %732
      %v734 = vmax.f32 %v698, %v699
      %735 = vmax.xlane.f32.xlu0 %v734
      %v736 = vpop.xlane.xlu0 %735
      %v737 = vmax.f32 %v700, %v701
      %738 = vmax.xlane.f32.xlu0 %v737
      %v739 = vpop.xlane.xlu0 %738
      %v740 = vmax.f32 %v702, %v703
      %741 = vmax.xlane.f32.xlu0 %v740
      %v742 = vpop.xlane.xlu0 %741
      %v743 = vmax.f32 %v704, %v705
      %744 = vmax.xlane.f32.xlu0 %v743
      %v745 = vpop.xlane.xlu0 %744
      %v746 = vmax.f32 %v706, %v707
      %747 = vmax.xlane.f32.xlu0 %v746
      %v748 = vpop.xlane.xlu0 %747
      %v749 = vmax.f32 %v708, %v709
      %750 = vmax.xlane.f32.xlu0 %v749
      %v751 = vpop.xlane.xlu0 %750
      %v752 = vmax.f32 %v710, %v711
      %753 = vmax.xlane.f32.xlu0 %v752
      %v754 = vpop.xlane.xlu0 %753
      %v755 = vmax.f32 %v712, %v713
      %756 = vmax.xlane.f32.xlu0 %v755
      %v757 = vpop.xlane.xlu0 %756
      %v758 = vmax.f32 %v714, %v715
      %759 = vmax.xlane.f32.xlu0 %v758
      %v760 = vpop.xlane.xlu0 %759
      %v761 = vmax.f32 %v716, %v717
      %762 = vmax.xlane.f32.xlu0 %v761
      %v763 = vpop.xlane.xlu0 %762
      %v764 = vmax.f32 %v718, %v719
      %765 = vmax.xlane.f32.xlu0 %v764
      %v766 = vpop.xlane.xlu0 %765
      %v767 = vmax.f32 %v720, %v721
      %768 = vmax.xlane.f32.xlu0 %v767
      %v769 = vpop.xlane.xlu0 %768
      %v770 = vsub.f32 %v690, %v724
      %v771 = vsub.f32 %v691, %v724
      %v772 = vsub.f32 %v692, %v727
      %v773 = vsub.f32 %v693, %v727
      %v774 = vsub.f32 %v694, %v730
      %v775 = vsub.f32 %v695, %v730
      %v776 = vsub.f32 %v696, %v733
      %v777 = vsub.f32 %v697, %v733
      %v778 = vsub.f32 %v698, %v736
      %v779 = vsub.f32 %v699, %v736
      %v780 = vsub.f32 %v700, %v739
      %v781 = vsub.f32 %v701, %v739
      %v782 = vsub.f32 %v702, %v742
      %v783 = vsub.f32 %v703, %v742
      %v784 = vsub.f32 %v704, %v745
      %v785 = vsub.f32 %v705, %v745
      %v786 = vsub.f32 %v706, %v748
      %v787 = vsub.f32 %v707, %v748
      %v788 = vsub.f32 %v708, %v751
      %v789 = vsub.f32 %v709, %v751
      %v790 = vsub.f32 %v710, %v754
      %v791 = vsub.f32 %v711, %v754
      %v792 = vsub.f32 %v712, %v757
      %v793 = vsub.f32 %v713, %v757
      %v794 = vsub.f32 %v714, %v760
      %v795 = vsub.f32 %v715, %v760
      %v796 = vsub.f32 %v716, %v763
      %v797 = vsub.f32 %v717, %v763
      %v798 = vsub.f32 %v718, %v766
      %v799 = vsub.f32 %v719, %v766
      %v800 = vsub.f32 %v720, %v769
      %v801 = vsub.f32 %v721, %v769
      %v802 = vmul.f32 %v770, 1.442695
      %v803 = vpow.pop %v802
      %v804 = vmul.f32 %v771, 1.442695
      %v805 = vpow.pop %v804
      %v806 = vmul.f32 %v772, 1.442695
      %v807 = vpow.pop %v806
      %v808 = vmul.f32 %v773, 1.442695
      %v809 = vpow.pop %v808
      %v810 = vmul.f32 %v774, 1.442695
      %v811 = vpow.pop %v810
      %v812 = vmul.f32 %v775, 1.442695
      %v813 = vpow.pop %v812
      %v814 = vmul.f32 %v776, 1.442695
      %v815 = vpow.pop %v814
      %v816 = vmul.f32 %v777, 1.442695
      %v817 = vpow.pop %v816
      %v818 = vmul.f32 %v778, 1.442695
      %v819 = vpow.pop %v818
      %v820 = vmul.f32 %v779, 1.442695
      %v821 = vpow.pop %v820
      %v822 = vmul.f32 %v780, 1.442695
      %v823 = vpow.pop %v822
      %v824 = vmul.f32 %v781, 1.442695
      %v825 = vpow.pop %v824
      %v826 = vmul.f32 %v782, 1.442695
      %v827 = vpow.pop %v826
      %v828 = vmul.f32 %v783, 1.442695
      %v829 = vpow.pop %v828
      %v830 = vmul.f32 %v784, 1.442695
      %v831 = vpow.pop %v830
      %v832 = vmul.f32 %v785, 1.442695
      %v833 = vpow.pop %v832
      %v834 = vmul.f32 %v786, 1.442695
      %v835 = vpow.pop %v834
      %v836 = vmul.f32 %v787, 1.442695
      %v837 = vpow.pop %v836
      %v838 = vmul.f32 %v788, 1.442695
      %v839 = vpow.pop %v838
      %v840 = vmul.f32 %v789, 1.442695
      %v841 = vpow.pop %v840
      %v842 = vmul.f32 %v790, 1.442695
      %v843 = vpow.pop %v842
      %v844 = vmul.f32 %v791, 1.442695
      %v845 = vpow.pop %v844
      %v846 = vmul.f32 %v792, 1.442695
      %v847 = vpow.pop %v846
      %v848 = vmul.f32 %v793, 1.442695
      %v849 = vpow.pop %v848
      %v850 = vmul.f32 %v794, 1.442695
      %v851 = vpow.pop %v850
      %v852 = vmul.f32 %v795, 1.442695
      %v853 = vpow.pop %v852
      %v854 = vmul.f32 %v796, 1.442695
      %v855 = vpow.pop %v854
      %v856 = vmul.f32 %v797, 1.442695
      %v857 = vpow.pop %v856
      %v858 = vmul.f32 %v798, 1.442695
      %v859 = vpow.pop %v858
      %v860 = vmul.f32 %v799, 1.442695
      %v861 = vpow.pop %v860
      %v862 = vmul.f32 %v800, 1.442695
      %v863 = vpow.pop %v862
      %v864 = vmul.f32 %v801, 1.442695
      %v865 = vpow.pop %v864
      %v866 = vadd.f32 %v803, %v805
      %867 = vadd.xlane.f32.xlu0 %v866
      %v868 = vpop.xlane.xlu0 %867
      %v869 = vadd.f32 %v807, %v809
      %870 = vadd.xlane.f32.xlu0 %v869
      %v871 = vpop.xlane.xlu0 %870
      %v872 = vadd.f32 %v811, %v813
      %873 = vadd.xlane.f32.xlu0 %v872
      %v874 = vpop.xlane.xlu0 %873
      %v875 = vadd.f32 %v815, %v817
      %876 = vadd.xlane.f32.xlu0 %v875
      %v877 = vpop.xlane.xlu0 %876
      %v878 = vadd.f32 %v819, %v821
      %879 = vadd.xlane.f32.xlu0 %v878
      %v880 = vpop.xlane.xlu0 %879
      %v881 = vadd.f32 %v823, %v825
      %882 = vadd.xlane.f32.xlu0 %v881
      %v883 = vpop.xlane.xlu0 %882
      %v884 = vadd.f32 %v827, %v829
      %885 = vadd.xlane.f32.xlu0 %v884
      %v886 = vpop.xlane.xlu0 %885
      %v887 = vadd.f32 %v831, %v833
      %888 = vadd.xlane.f32.xlu0 %v887
      %v889 = vpop.xlane.xlu0 %888
      %v890 = vadd.f32 %v835, %v837
      %891 = vadd.xlane.f32.xlu0 %v890
      %v892 = vpop.xlane.xlu0 %891
      %v893 = vadd.f32 %v839, %v841
      %894 = vadd.xlane.f32.xlu0 %v893
      %v895 = vpop.xlane.xlu0 %894
      %v896 = vadd.f32 %v843, %v845
      %897 = vadd.xlane.f32.xlu0 %v896
      %v898 = vpop.xlane.xlu0 %897
      %v899 = vadd.f32 %v847, %v849
      %900 = vadd.xlane.f32.xlu0 %v899
      %v901 = vpop.xlane.xlu0 %900
      %v902 = vadd.f32 %v851, %v853
      %903 = vadd.xlane.f32.xlu0 %v902
      %v904 = vpop.xlane.xlu0 %903
      %v905 = vadd.f32 %v855, %v857
      %906 = vadd.xlane.f32.xlu0 %v905
      %v907 = vpop.xlane.xlu0 %906
      %v908 = vadd.f32 %v859, %v861
      %909 = vadd.xlane.f32.xlu0 %v908
      %v910 = vpop.xlane.xlu0 %909
      %v911 = vadd.f32 %v863, %v865
      %912 = vadd.xlane.f32.xlu0 %v911
      %v913 = vpop.xlane.xlu0 %912
      %v914 = vrcp.pop %v868
      %v915 = vrcp.pop %v871
      %v916 = vrcp.pop %v874
      %v917 = vrcp.pop %v877
      %v918 = vrcp.pop %v880
      %v919 = vrcp.pop %v883
      %v920 = vrcp.pop %v886
      %v921 = vrcp.pop %v889
      %v922 = vrcp.pop %v892
      %v923 = vrcp.pop %v895
      %v924 = vrcp.pop %v898
      %v925 = vrcp.pop %v901
      %v926 = vrcp.pop %v904
      %v927 = vrcp.pop %v907
      %v928 = vrcp.pop %v910
      %v929 = vrcp.pop %v913
      %v930 = vmul.f32 %v803, %v914
      %v931 = vmul.f32 %v805, %v914
      %v932 = vmul.f32 %v807, %v915
      %v933 = vmul.f32 %v809, %v915
      %v934 = vmul.f32 %v811, %v916
      %v935 = vmul.f32 %v813, %v916
      %v936 = vmul.f32 %v815, %v917
      %v937 = vmul.f32 %v817, %v917
      %v938 = vmul.f32 %v819, %v918
      %v939 = vmul.f32 %v821, %v918
      %v940 = vmul.f32 %v823, %v919
      %v941 = vmul.f32 %v825, %v919
      %v942 = vmul.f32 %v827, %v920
      %v943 = vmul.f32 %v829, %v920
      %v944 = vmul.f32 %v831, %v921
      %v945 = vmul.f32 %v833, %v921
      %v946 = vmul.f32 %v835, %v922
      %v947 = vmul.f32 %v837, %v922
      %v948 = vmul.f32 %v839, %v923
      %v949 = vmul.f32 %v841, %v923
      %v950 = vmul.f32 %v843, %v924
      %v951 = vmul.f32 %v845, %v924
      %v952 = vmul.f32 %v847, %v925
      %v953 = vmul.f32 %v849, %v925
      %v954 = vmul.f32 %v851, %v926
      %v955 = vmul.f32 %v853, %v926
      %v956 = vmul.f32 %v855, %v927
      %v957 = vmul.f32 %v857, %v927
      %v958 = vmul.f32 %v859, %v928
      %v959 = vmul.f32 %v861, %v928
      %v960 = vmul.f32 %v863, %v929
      %v961 = vmul.f32 %v865, %v929
      %v962 = vpack.c.bf16 %v932, %v930
      %v963 = vpack.c.bf16 %v933, %v931
      %v964 = vpack.c.bf16 %v936, %v934
      %v965 = vpack.c.bf16 %v937, %v935
      %v966 = vpack.c.bf16 %v940, %v938
      %v967 = vpack.c.bf16 %v941, %v939
      %v968 = vpack.c.bf16 %v944, %v942
      %v969 = vpack.c.bf16 %v945, %v943
      %v970 = vpack.c.bf16 %v948, %v946
      %v971 = vpack.c.bf16 %v949, %v947
      %v972 = vpack.c.bf16 %v952, %v950
      %v973 = vpack.c.bf16 %v953, %v951
      %v974 = vpack.c.bf16 %v956, %v954
      %v975 = vpack.c.bf16 %v957, %v955
      %v976 = vpack.c.bf16 %v960, %v958
      %v977 = vpack.c.bf16 %v961, %v959
      %v978 = vld [vmem:[%s288] sm:$0xf]
      %v979 = vld [vmem:[%s288 + $0x4] sm:$0xf]
      %v980 = vld [vmem:[%s288 + $0x8] sm:$0xf]
      %v981 = vld [vmem:[%s288 + $0xc] sm:$0xf]
      %v982 = vld [vmem:[%s288 + $0x10] sm:$0xf]
      %v983 = vld [vmem:[%s288 + $0x14] sm:$0xf]
      %v984 = vld [vmem:[%s288 + $0x18] sm:$0xf]
      %v985 = vld [vmem:[%s288 + $0x1c] sm:$0xf]
      %v986 = vld [vmem:[%s288 + $0x20] sm:$0xf]
      %v987 = vld [vmem:[%s288 + $0x24] sm:$0xf]
      %v988 = vld [vmem:[%s288 + $0x28] sm:$0xf]
      %v989 = vld [vmem:[%s288 + $0x2c] sm:$0xf]
      %v990 = vld [vmem:[%s288 + $0x30] sm:$0xf]
      %v991 = vld [vmem:[%s288 + $0x34] sm:$0xf]
      %v992 = vld [vmem:[%s288 + $0x38] sm:$0xf]
      %v993 = vld [vmem:[%s288 + $0x3c] sm:$0xf]
      %v994 = vld [vmem:[%s288 + $0x40] sm:$0xf]
      %v995 = vld [vmem:[%s288 + $0x44] sm:$0xf]
      %v996 = vld [vmem:[%s288 + $0x48] sm:$0xf]
      %v997 = vld [vmem:[%s288 + $0x4c] sm:$0xf]
      %v998 = vld [vmem:[%s288 + $0x50] sm:$0xf]
      %v999 = vld [vmem:[%s288 + $0x54] sm:$0xf]
      %v1000 = vld [vmem:[%s288 + $0x58] sm:$0xf]
      %v1001 = vld [vmem:[%s288 + $0x5c] sm:$0xf]
      %v1002 = vld [vmem:[%s288 + $0x60] sm:$0xf]
      %v1003 = vld [vmem:[%s288 + $0x64] sm:$0xf]
      %v1004 = vld [vmem:[%s288 + $0x68] sm:$0xf]
      %v1005 = vld [vmem:[%s288 + $0x6c] sm:$0xf]
      %v1006 = vld [vmem:[%s288 + $0x70] sm:$0xf]
      %v1007 = vld [vmem:[%s288 + $0x74] sm:$0xf]
      %v1008 = vld [vmem:[%s288 + $0x78] sm:$0xf]
      %v1009 = vld [vmem:[%s288 + $0x7c] sm:$0xf]
      %v1042 = vunpack.c.l.b16 %v978
      %v1043 = vunpack.c.l.b16 %v979
      %v1044 = vunpack.c.l.b16 %v980
      %v1045 = vunpack.c.l.b16 %v981
      %v1046 = vunpack.c.l.b16 %v982
      %v1047 = vunpack.c.l.b16 %v983
      %v1048 = vunpack.c.l.b16 %v984
      %v1049 = vunpack.c.l.b16 %v985
      %v1050 = vunpack.c.l.b16 %v986
      %v1051 = vunpack.c.l.b16 %v987
      %v1052 = vunpack.c.l.b16 %v988
      %v1053 = vunpack.c.l.b16 %v989
      %v1054 = vunpack.c.l.b16 %v990
      %v1055 = vunpack.c.l.b16 %v991
      %v1056 = vunpack.c.l.b16 %v992
      %v1057 = vunpack.c.l.b16 %v993
      %v1058 = vunpack.c.l.b16 %v994
      %v1059 = vunpack.c.l.b16 %v995
      %v1060 = vunpack.c.l.b16 %v996
      %v1061 = vunpack.c.l.b16 %v997
      %v1062 = vunpack.c.l.b16 %v998
      %v1063 = vunpack.c.l.b16 %v999
      %v1064 = vunpack.c.l.b16 %v1000
      %v1065 = vunpack.c.l.b16 %v1001
      %v1066 = vunpack.c.l.b16 %v1002
      %v1067 = vunpack.c.l.b16 %v1003
      %v1068 = vunpack.c.l.b16 %v1004
      %v1069 = vunpack.c.l.b16 %v1005
      %v1070 = vunpack.c.l.b16 %v1006
      %v1071 = vunpack.c.l.b16 %v1007
      %v1072 = vunpack.c.l.b16 %v1008
      %v1073 = vunpack.c.l.b16 %v1009
      %v1074 = vpack.c.b16 %v1043, %v1042
      %v1075 = vpack.c.b16 %v1045, %v1044
      %v1076 = vpack.c.b16 %v1047, %v1046
      %v1077 = vpack.c.b16 %v1049, %v1048
      %v1078 = vpack.c.b16 %v1051, %v1050
      %v1079 = vpack.c.b16 %v1053, %v1052
      %v1080 = vpack.c.b16 %v1055, %v1054
      %v1081 = vpack.c.b16 %v1057, %v1056
      %v1082 = vpack.c.b16 %v1059, %v1058
      %v1083 = vpack.c.b16 %v1061, %v1060
      %v1084 = vpack.c.b16 %v1063, %v1062
      %v1085 = vpack.c.b16 %v1065, %v1064
      %v1086 = vpack.c.b16 %v1067, %v1066
      %v1087 = vpack.c.b16 %v1069, %v1068
      %v1088 = vpack.c.b16 %v1071, %v1070
      %v1089 = vpack.c.b16 %v1073, %v1072
      %1106 = vmatprep.subr.bf16.mxu0 0
      %1107 = vmatpush1.bf16.msra.mxu0 %v1074
      %1108 = vmatprep.subr.bf16.mxu0 0
      %1109 = vmatpush1.bf16.msra.mxu0 %v1075
      %1110 = vmatprep.subr.bf16.mxu0 0
      %1111 = vmatpush1.bf16.msra.mxu0 %v1076
      %1112 = vmatprep.subr.bf16.mxu0 0
      %1113 = vmatpush1.bf16.msra.mxu0 %v1077
      %1114 = vmatprep.subr.bf16.mxu0 0
      %1115 = vmatpush1.bf16.msra.mxu0 %v1078
      %1116 = vmatprep.subr.bf16.mxu0 0
      %1117 = vmatpush1.bf16.msra.mxu0 %v1079
      %1118 = vmatprep.subr.bf16.mxu0 0
      %1119 = vmatpush1.bf16.msra.mxu0 %v1080
      %1120 = vmatprep.subr.bf16.mxu0 0
      %1121 = vmatpush1.bf16.msra.mxu0 %v1081
      %1122 = vmatprep.subr.bf16.mxu0 0
      %1123 = vmatpush1.bf16.msra.mxu0 %v1082
      %1124 = vmatprep.subr.bf16.mxu0 0
      %1125 = vmatpush1.bf16.msra.mxu0 %v1083
      %1126 = vmatprep.subr.bf16.mxu0 0
      %1127 = vmatpush1.bf16.msra.mxu0 %v1084
      %1128 = vmatprep.subr.bf16.mxu0 0
      %1129 = vmatpush1.bf16.msra.mxu0 %v1085
      %1130 = vmatprep.subr.bf16.mxu0 0
      %1131 = vmatpush1.bf16.msra.mxu0 %v1086
      %1132 = vmatprep.subr.bf16.mxu0 0
      %1133 = vmatpush1.bf16.msra.mxu0 %v1087
      %1134 = vmatprep.subr.bf16.mxu0 0
      %1135 = vmatpush1.bf16.msra.mxu0 %v1088
      %1136 = vmatprep.subr.bf16.mxu0 0
      %1137 = vmatpush1.bf16.msra.mxu0 %v1089
      %1138 = vmatprep.mubr.bf16.mxu0 %v963
      %1139 = vmatmul.mubr.bf16.gmra.mrb[0].mxu0 %v962
      %v1140 = vpop.f32.mrb[0].mxu0
      %v1141 = vadd.f32 0.0, %v1140
      %v1142 = vpop.f32.mrb[0].mxu0
      %v1143 = vpop.f32.mrb[0].mxu0
      %v1144 = vadd.f32 0.0, %v1143
      %v1145 = vpop.f32.mrb[0].mxu0
      %1146 = vmatprep.mubr.bf16.mxu0 %v965
      %1147 = vmatmul.mubr.bf16.gmra.mrb[0].mxu0 %v964
      %v1148 = vpop.f32.mrb[0].mxu0
      %v1149 = vadd.f32 0.0, %v1148
      %v1150 = vpop.f32.mrb[0].mxu0
      %v1151 = vpop.f32.mrb[0].mxu0
      %v1152 = vadd.f32 0.0, %v1151
      %v1153 = vpop.f32.mrb[0].mxu0
      %1154 = vmatprep.mubr.bf16.mxu0 %v967
      %1155 = vmatmul.mubr.bf16.gmra.mrb[0].mxu0 %v966
      %v1156 = vpop.f32.mrb[0].mxu0
      %v1157 = vadd.f32 0.0, %v1156
      %v1158 = vpop.f32.mrb[0].mxu0
      %v1159 = vpop.f32.mrb[0].mxu0
      %v1160 = vadd.f32 0.0, %v1159
      %v1161 = vpop.f32.mrb[0].mxu0
      %1162 = vmatprep.mubr.bf16.mxu0 %v969
      %1163 = vmatmul.mubr.bf16.gmra.mrb[0].mxu0 %v968
      %v1164 = vpop.f32.mrb[0].mxu0
      %v1165 = vadd.f32 0.0, %v1164
      %v1166 = vpop.f32.mrb[0].mxu0
      %v1167 = vpop.f32.mrb[0].mxu0
      %v1168 = vadd.f32 0.0, %v1167
      %v1169 = vpop.f32.mrb[0].mxu0
      %1170 = vmatprep.mubr.bf16.mxu0 %v971
      %1171 = vmatmul.mubr.bf16.gmra.mrb[0].mxu0 %v970
      %v1172 = vpop.f32.mrb[0].mxu0
      %v1173 = vadd.f32 0.0, %v1172
      %v1174 = vpop.f32.mrb[0].mxu0
      %v1175 = vpop.f32.mrb[0].mxu0
      %v1176 = vadd.f32 0.0, %v1175
      %v1177 = vpop.f32.mrb[0].mxu0
      %1178 = vmatprep.mubr.bf16.mxu0 %v973
      %1179 = vmatmul.mubr.bf16.gmra.mrb[0].mxu0 %v972
      %v1180 = vpop.f32.mrb[0].mxu0
      %v1181 = vadd.f32 0.0, %v1180
      %v1182 = vpop.f32.mrb[0].mxu0
      %v1183 = vpop.f32.mrb[0].mxu0
      %v1184 = vadd.f32 0.0, %v1183
      %v1185 = vpop.f32.mrb[0].mxu0
      %1186 = vmatprep.mubr.bf16.mxu0 %v975
      %1187 = vmatmul.mubr.bf16.gmra.mrb[0].mxu0 %v974
      %v1188 = vpop.f32.mrb[0].mxu0
      %v1189 = vadd.f32 0.0, %v1188
      %v1190 = vpop.f32.mrb[0].mxu0
      %v1191 = vpop.f32.mrb[0].mxu0
      %v1192 = vadd.f32 0.0, %v1191
      %v1193 = vpop.f32.mrb[0].mxu0
      %1194 = vmatprep.mubr.bf16.mxu0 %v977
      %1195 = vmatmul.mubr.bf16.gmra.mrb[0].mxu0 %v976
      %v1196 = vpop.f32.mrb[0].mxu0
      %v1197 = vadd.f32 0.0, %v1196
      %v1198 = vpop.f32.mrb[0].mxu0
      %v1199 = vpop.f32.mrb[0].mxu0
      %v1200 = vadd.f32 0.0, %v1199
      %v1201 = vpop.f32.mrb[0].mxu0
      %1202 = vdwg.mxu0
      %vm1203 = vcmp.gt.f32.partialorder %v1141, 0.0
      %vm1204 = vcmp.gt.f32.partialorder %v1144, 0.0
      %vm1205 = vcmp.gt.f32.partialorder %v1149, 0.0
      %vm1206 = vcmp.gt.f32.partialorder %v1152, 0.0
      %vm1207 = vcmp.gt.f32.partialorder %v1157, 0.0
      %vm1208 = vcmp.gt.f32.partialorder %v1160, 0.0
      %vm1209 = vcmp.gt.f32.partialorder %v1165, 0.0
      %vm1210 = vcmp.gt.f32.partialorder %v1168, 0.0
      %vm1211 = vcmp.gt.f32.partialorder %v1173, 0.0
      %vm1212 = vcmp.gt.f32.partialorder %v1176, 0.0
      %vm1213 = vcmp.gt.f32.partialorder %v1181, 0.0
      %vm1214 = vcmp.gt.f32.partialorder %v1184, 0.0
      %vm1215 = vcmp.gt.f32.partialorder %v1189, 0.0
      %vm1216 = vcmp.gt.f32.partialorder %v1192, 0.0
      %vm1217 = vcmp.gt.f32.partialorder %v1197, 0.0
      %vm1218 = vcmp.gt.f32.partialorder %v1200, 0.0
      %v1219 = vmul.f32 %v1141, 1.442695
      %v1220 = vpow.pop %v1219
      %v1221 = vmul.f32 %v1144, 1.442695
      %v1222 = vpow.pop %v1221
      %v1223 = vmul.f32 %v1149, 1.442695
      %v1224 = vpow.pop %v1223
      %v1225 = vmul.f32 %v1152, 1.442695
      %v1226 = vpow.pop %v1225
      %v1227 = vmul.f32 %v1157, 1.442695
      %v1228 = vpow.pop %v1227
      %v1229 = vmul.f32 %v1160, 1.442695
      %v1230 = vpow.pop %v1229
      %v1231 = vmul.f32 %v1165, 1.442695
      %v1232 = vpow.pop %v1231
      %v1233 = vmul.f32 %v1168, 1.442695
      %v1234 = vpow.pop %v1233
      %v1235 = vmul.f32 %v1173, 1.442695
      %v1236 = vpow.pop %v1235
      %v1237 = vmul.f32 %v1176, 1.442695
      %v1238 = vpow.pop %v1237
      %v1239 = vmul.f32 %v1181, 1.442695
      %v1240 = vpow.pop %v1239
      %v1241 = vmul.f32 %v1184, 1.442695
      %v1242 = vpow.pop %v1241
      %v1243 = vmul.f32 %v1189, 1.442695
      %v1244 = vpow.pop %v1243
      %v1245 = vmul.f32 %v1192, 1.442695
      %v1246 = vpow.pop %v1245
      %v1247 = vmul.f32 %v1197, 1.442695
      %v1248 = vpow.pop %v1247
      %v1249 = vmul.f32 %v1200, 1.442695
      %v1250 = vpow.pop %v1249
      %v1251 = vsub.f32 %v1220, 1.0
      %v1252 = vsub.f32 %v1222, 1.0
      %v1253 = vsub.f32 %v1224, 1.0
      %v1254 = vsub.f32 %v1226, 1.0
      %v1255 = vsub.f32 %v1228, 1.0
      %v1256 = vsub.f32 %v1230, 1.0
      %v1257 = vsub.f32 %v1232, 1.0
      %v1258 = vsub.f32 %v1234, 1.0
      %v1259 = vsub.f32 %v1236, 1.0
      %v1260 = vsub.f32 %v1238, 1.0
      %v1261 = vsub.f32 %v1240, 1.0
      %v1262 = vsub.f32 %v1242, 1.0
      %v1263 = vsub.f32 %v1244, 1.0
      %v1264 = vsub.f32 %v1246, 1.0
      %v1265 = vsub.f32 %v1248, 1.0
      %v1266 = vsub.f32 %v1250, 1.0
      %v1267 = vsel %vm1203, %v1141, %v1251
      %v1268 = vsel %vm1204, %v1144, %v1252
      %v1269 = vsel %vm1205, %v1149, %v1253
      %v1270 = vsel %vm1206, %v1152, %v1254
      %v1271 = vsel %vm1207, %v1157, %v1255
      %v1272 = vsel %vm1208, %v1160, %v1256
      %v1273 = vsel %vm1209, %v1165, %v1257
      %v1274 = vsel %vm1210, %v1168, %v1258
      %v1275 = vsel %vm1211, %v1173, %v1259
      %v1276 = vsel %vm1212, %v1176, %v1260
      %v1277 = vsel %vm1213, %v1181, %v1261
      %v1278 = vsel %vm1214, %v1184, %v1262
      %v1279 = vsel %vm1215, %v1189, %v1263
      %v1280 = vsel %vm1216, %v1192, %v1264
      %v1281 = vsel %vm1217, %v1197, %v1265
      %v1282 = vsel %vm1218, %v1200, %v1266
      %vm1283 = vcmask 130048
      %1284 = vst.msk [vmem:[%s297] sm:$0xff] %vm1283, %v1267
      %1285 = vst.msk [vmem:[%s297 + $0x8] sm:$0xff] %vm1283, %v1268
      %1286 = vst.msk [vmem:[%s297 + $0x10] sm:$0xff] %vm1283, %v1269
      %1287 = vst.msk [vmem:[%s297 + $0x18] sm:$0xff] %vm1283, %v1270
      %1288 = vst.msk [vmem:[%s297 + $0x20] sm:$0xff] %vm1283, %v1271
      %1289 = vst.msk [vmem:[%s297 + $0x28] sm:$0xff] %vm1283, %v1272
      %1290 = vst.msk [vmem:[%s297 + $0x30] sm:$0xff] %vm1283, %v1273
      %1291 = vst.msk [vmem:[%s297 + $0x38] sm:$0xff] %vm1283, %v1274
      %1292 = vst.msk [vmem:[%s297 + $0x40] sm:$0xff] %vm1283, %v1275
      %1293 = vst.msk [vmem:[%s297 + $0x48] sm:$0xff] %vm1283, %v1276
      %1294 = vst.msk [vmem:[%s297 + $0x50] sm:$0xff] %vm1283, %v1277
      %1295 = vst.msk [vmem:[%s297 + $0x58] sm:$0xff] %vm1283, %v1278
      %1296 = vst.msk [vmem:[%s297 + $0x60] sm:$0xff] %vm1283, %v1279
      %1297 = vst.msk [vmem:[%s297 + $0x68] sm:$0xff] %vm1283, %v1280
      %1298 = vst.msk [vmem:[%s297 + $0x70] sm:$0xff] %vm1283, %v1281
      %1299 = vst.msk [vmem:[%s297 + $0x78] sm:$0xff] %vm1283, %v1282
      %s1300 = smul.u32 16, %s19
      %p1301 = scmp.lt.s32.totalorder %s20, 3
      %s1302 = scalar_select %p1301, %s20, 3
      %p1303 = scmp.lt.s32.totalorder %s1300, 31
      %s1304 = scalar_select %p1303, %s1300, 31
      %s1305 = smul.addr %s1302, 32
      %s1306 = sadd.s32 %s1304, %s1305
      %s1307 = smul.addr %s1306, 8
      %s1308 = scalar_lea.vmem %s4, %s1307
      // Predicated region
      $region37: #{gat_forward.5} parent=35 // pred_check
        %p1309 = pneg %p153
      $region38: #{gat_forward.5} parent=35 // pred_check_branch
        %1311 = sbr.rel (%p1309) target = $region40
      $region39: #{gat_forward.5} parent=35 // pred_region
        %s1312 = smul.u32 16, %s19
      $region40: #{gat_forward.5} parent=35 // pred_fallthru
        _
    $region36: #{gat_forward.5} parent=5 // pred_fallthru
      _
    %p1313 = scmp.le.s32.totalorder 2, %s10
    // Predicated region
    $region41: #{gat_forward.5} parent=5 // pred_check
      %p1314 = pneg %p1313
    $region42: #{gat_forward.5} parent=5 // pred_check_branch
      %1316 = sbr.rel (%p1314) target = $region44
    $region43: #{gat_forward.5} parent=5 // pred_region
      %s1317 = ssub.s32 %s10, 2
      // Predicated region
      $region45: #{gat_forward.5} parent=43 // pred_check
        %p1318 = pneg %p159
      $region46: #{gat_forward.5} parent=43 // pred_check_branch
        %1320 = sbr.rel (%p1318) target = $region48
      $region47: #{gat_forward.5} parent=43 // pred_region
        %s1321 = smul.u32 16, %s21
        %p1322 = scmp.lt.s32.totalorder %s22, 3
        %s1323 = scalar_select %p1322, %s22, 3
        %p1324 = scmp.lt.s32.totalorder %s1321, 31
        %s1325 = scalar_select %p1324, %s1321, 31
        %s1326 = smul.addr %s1323, 32
        %s1327 = sadd.s32 %s1325, %s1326
        %s1328 = smul.addr %s1327, 8
        %s1329 = scalar_lea.vmem %s4, %s1328
      $region48: #{gat_forward.5} parent=43 // pred_fallthru
        _
    $region44: #{gat_forward.5} parent=5 // pred_fallthru
      _
  $region6: #{gat_forward.5} parent=0 // loop_footer
    %s14 = sadd.s32 1, %s10
  $region7: #{gat_forward.5} parent=0 // loop_footer_branch
    %9 = sbr.rel target = $region3
  $region8: #{gat_forward.5} parent=0 // loop_exit
    _

// kernel: gat_forward.6
$region0: #{gat_forward.6}
  #allocation0 [shape = 'u32[]', space=smem, size = 0x4, offset = 0x4, fixed_abs, tag = 'smem constant byte address 0x4 - core index']
  #allocation1 [shape = 'u32[144,128]{1,0:T(1,128)}', space=vmem, size = 0x12000, scoped, tag = 'internal scratch']
  #allocation2 [shape = 'f32[1,1,1]{2,1,0:T(1,128)S(1)}', space=vmem, size = 0x200, scoped, tag = 'scoped memory for gat_forward.6']
  %s0 = inlined_call_operand.vmem [shape: f32[256,64], index: 0, kind: input, shape index: {}]
  %s1 = inlined_call_operand.vmem [shape: f32[256,1], index: 1, kind: input, shape index: {}]
  %s2 = inlined_call_operand.vmem [shape: bf16[1,64,8], index: 2, kind: input, shape index: {}]
  %s3 = inlined_call_operand.vmem [shape: f32[1,64,1], index: 3, kind: input, shape index: {}]
  %s4 = inlined_call_operand.vmem [shape: f32[1,1,64], index: 4, kind: input, shape index: {}]
  %s5 = inlined_call_operand.<no memory space> [shape: f32[1,1,1], index: 5, kind: input, shape index: {}]
  %s6 = inlined_call_operand.vmem [shape: bf16[1,256,8], index: 6, kind: output, shape index: {0}]
  %s7 = inlined_call_operand.vmem [shape: f32[1,256,1], index: 7, kind: output, shape index: {1}]
  %s8 = inlined_call_operand.vmem [shape: f32[1,1,256], index: 8, kind: output, shape index: {2}]
  %9 = xla_tuple %s6, %s7, %s8
  %s10 = sld [smem:[#allocation0]]
  $region73: #{gat_forward.6} parent=0
    _
  %s12 = ssub.s32 1, %s10
  %s13 = scalar_select 0, %s12, %s10
  %v14 = vstv %s5
  %15 = vst [vmem:[#allocation2] sm:$0x1] %v14
  loop: start=0, step=1, limit=4
  $region2: #{gat_forward.6} parent=0 // loop_pre_header
    _
  $region3: #{gat_forward.6} parent=0 // loop_header
    %s17 = sphi 0, %s21
    %p18 = scmp.ge.s32.totalorder %s17, 4
    %s24 = sphi 0, %s36
    %s25 = sphi 0, %s32
    %s26 = sphi 0, %s24
    %s27 = sphi 0, %s25
    %s28 = sphi 0, %s26
    %s29 = sphi 0, %s27
    %s39 = sphi 0, %s41
    %s42 = sphi 0, %s39
    %s43 = sphi 0, %s42
    %s59 = sphi 0, %s43
    %s65 = sphi 0, %s67
    %s68 = sphi 0, %s65
    %s69 = sphi 0, %s68
    %s85 = sphi 0, %s69
    %s91 = sphi 0, %s93
    %s94 = sphi 0, %s91
    %s95 = sphi 0, %s94
    %s111 = sphi 0, %s95
    %s117 = sphi 0, %s119
    %s120 = sphi 0, %s117
    %s121 = sphi 0, %s120
    %s137 = sphi 0, %s121
    %s143 = sphi 0, %s145
    %s146 = sphi 0, %s143
    %s147 = sphi 0, %s146
    %s163 = sphi 0, %s147
    %s169 = sphi 0, %s171
    %s172 = sphi 0, %s169
    %s173 = sphi 0, %s172
    %s189 = sphi 0, %s173
    %s197 = sphi 0, %s199
    %s200 = sphi 0, %s197
    %s201 = sphi 0, %s200
    %s217 = sphi 0, %s201
    %s225 = sphi 0, %s227
    %s228 = sphi 0, %s225
    %s229 = sphi 0, %s228
    %s245 = sphi 0, %s229
    %s253 = sphi 0, %s255
    %s256 = sphi 0, %s253
    %s257 = sphi 0, %s256
    %s273 = sphi 0, %s257
  $region4: #{gat_forward.6} parent=0 // loop_header_branch
    %20 = sbr.rel (%p18) target = $region8
  $region5: #{gat_forward.6} parent=0 // loop_body
    %s22 = ssub.s32 %s17, 1
    %s23 = ssub.s32 %s17, 2
    %s30 = sadd.s32 1, %s25
    %p31 = scmp.ge.s32.totalorder %s30, 1
    %s32 = scalar_select %p31, 0, %s30
    %s33 = sadd.s32 1, %s24
    %s34 = scalar_select %p31, %s33, %s24
    %p35 = scmp.ge.s32.totalorder %s34, 2
    %s36 = scalar_select %p35, 0, %s34
    %s37 = ssub.s32 %s24, %s36
    %p38 = scmp.eq.s32.totalorder %s37, 0
    %s40 = sadd.s32 %s39, 1
    %s41 = scalar_select %p38, %s39, %s40
    %p44 = pneg %p38
    %p45 = scmp.eq.s32.totalorder %s17, 1
    %p46 = por %p44, %p45
    %p47 = scmp.ne.s32.totalorder %s39, %s42
    %p48 = scmp.eq.s32.totalorder %s17, 0
    %p49 = por %p47, %p48
    %p50 = scmp.ne.s32.totalorder %s39, %s42
    %p51 = scmp.eq.s32.totalorder %s22, 1
    %p52 = por %p50, %p51
    %p53 = scmp.ne.s32.totalorder %s42, %s43
    %p54 = scmp.eq.s32.totalorder %s22, 0
    %p55 = por %p53, %p54
    %p56 = scmp.ne.s32.totalorder %s42, %s43
    %p57 = scmp.eq.s32.totalorder %s23, 1
    %p58 = por %p56, %p57
    %p60 = scmp.ne.s32.totalorder %s43, %s59
    %p61 = scmp.eq.s32.totalorder %s23, 0
    %p62 = por %p60, %p61
    %s63 = ssub.s32 %s24, %s36
    %p64 = scmp.eq.s32.totalorder %s63, 0
    %s66 = sadd.s32 %s65, 1
    %s67 = scalar_select %p64, %s65, %s66
    %p70 = pneg %p64
    %p71 = scmp.eq.s32.totalorder %s17, 1
    %p72 = por %p70, %p71
    %p73 = scmp.ne.s32.totalorder %s65, %s68
    %p74 = scmp.eq.s32.totalorder %s17, 0
    %p75 = por %p73, %p74
    %p76 = scmp.ne.s32.totalorder %s65, %s68
    %p77 = scmp.eq.s32.totalorder %s22, 1
    %p78 = por %p76, %p77
    %p79 = scmp.ne.s32.totalorder %s68, %s69
    %p80 = scmp.eq.s32.totalorder %s22, 0
    %p81 = por %p79, %p80
    %p82 = scmp.ne.s32.totalorder %s68, %s69
    %p83 = scmp.eq.s32.totalorder %s23, 1
    %p84 = por %p82, %p83
    %p86 = scmp.ne.s32.totalorder %s69, %s85
    %p87 = scmp.eq.s32.totalorder %s23, 0
    %p88 = por %p86, %p87
    %s89 = ssub.s32 %s25, %s32
    %p90 = scmp.eq.s32.totalorder %s89, 0
    %s92 = sadd.s32 %s91, 1
    %s93 = scalar_select %p90, %s91, %s92
    %p96 = pneg %p90
    %p97 = scmp.eq.s32.totalorder %s17, 1
    %p98 = por %p96, %p97
    %p99 = scmp.ne.s32.totalorder %s91, %s94
    %p100 = scmp.eq.s32.totalorder %s17, 0
    %p101 = por %p99, %p100
    %p102 = scmp.ne.s32.totalorder %s91, %s94
    %p103 = scmp.eq.s32.totalorder %s22, 1
    %p104 = por %p102, %p103
    %p105 = scmp.ne.s32.totalorder %s94, %s95
    %p106 = scmp.eq.s32.totalorder %s22, 0
    %p107 = por %p105, %p106
    %p108 = scmp.ne.s32.totalorder %s94, %s95
    %p109 = scmp.eq.s32.totalorder %s23, 1
    %p110 = por %p108, %p109
    %p112 = scmp.ne.s32.totalorder %s95, %s111
    %p113 = scmp.eq.s32.totalorder %s23, 0
    %p114 = por %p112, %p113
    %s115 = ssub.s32 %s25, %s32
    %p116 = scmp.eq.s32.totalorder %s115, 0
    %s118 = sadd.s32 %s117, 1
    %s119 = scalar_select %p116, %s117, %s118
    %p122 = pneg %p116
    %p123 = scmp.eq.s32.totalorder %s17, 1
    %p124 = por %p122, %p123
    %p125 = scmp.ne.s32.totalorder %s117, %s120
    %p126 = scmp.eq.s32.totalorder %s17, 0
    %p127 = por %p125, %p126
    %p128 = scmp.ne.s32.totalorder %s117, %s120
    %p129 = scmp.eq.s32.totalorder %s22, 1
    %p130 = por %p128, %p129
    %p131 = scmp.ne.s32.totalorder %s120, %s121
    %p132 = scmp.eq.s32.totalorder %s22, 0
    %p133 = por %p131, %p132
    %p134 = scmp.ne.s32.totalorder %s120, %s121
    %p135 = scmp.eq.s32.totalorder %s23, 1
    %p136 = por %p134, %p135
    %p138 = scmp.ne.s32.totalorder %s121, %s137
    %p139 = scmp.eq.s32.totalorder %s23, 0
    %p140 = por %p138, %p139
    %s141 = ssub.s32 %s25, %s32
    %p142 = scmp.eq.s32.totalorder %s141, 0
    %s144 = sadd.s32 %s143, 1
    %s145 = scalar_select %p142, %s143, %s144
    %p148 = pneg %p142
    %p149 = scmp.eq.s32.totalorder %s17, 1
    %p150 = por %p148, %p149
    %p151 = scmp.ne.s32.totalorder %s143, %s146
    %p152 = scmp.eq.s32.totalorder %s17, 0
    %p153 = por %p151, %p152
    %p154 = scmp.ne.s32.totalorder %s143, %s146
    %p155 = scmp.eq.s32.totalorder %s22, 1
    %p156 = por %p154, %p155
    %p157 = scmp.ne.s32.totalorder %s146, %s147
    %p158 = scmp.eq.s32.totalorder %s22, 0
    %p159 = por %p157, %p158
    %p160 = scmp.ne.s32.totalorder %s146, %s147
    %p161 = scmp.eq.s32.totalorder %s23, 1
    %p162 = por %p160, %p161
    %p164 = scmp.ne.s32.totalorder %s147, %s163
    %p165 = scmp.eq.s32.totalorder %s23, 0
    %p166 = por %p164, %p165
    %s167 = ssub.s32 %s25, %s32
    %p168 = scmp.eq.s32.totalorder %s167, 0
    %s170 = sadd.s32 %s169, 1
    %s171 = scalar_select %p168, %s169, %s170
    %p174 = pneg %p168
    %p175 = scmp.eq.s32.totalorder %s17, 1
    %p176 = por %p174, %p175
    %p177 = scmp.ne.s32.totalorder %s169, %s172
    %p178 = scmp.eq.s32.totalorder %s17, 0
    %p179 = por %p177, %p178
    %p180 = scmp.ne.s32.totalorder %s169, %s172
    %p181 = scmp.eq.s32.totalorder %s22, 1
    %p182 = por %p180, %p181
    %p183 = scmp.ne.s32.totalorder %s172, %s173
    %p184 = scmp.eq.s32.totalorder %s22, 0
    %p185 = por %p183, %p184
    %p186 = scmp.ne.s32.totalorder %s172, %s173
    %p187 = scmp.eq.s32.totalorder %s23, 1
    %p188 = por %p186, %p187
    %p190 = scmp.ne.s32.totalorder %s173, %s189
    %p191 = scmp.eq.s32.totalorder %s23, 0
    %p192 = por %p190, %p191
    %s193 = ssub.s32 %s25, %s32
    %s194 = ssub.s32 %s24, %s36
    %s195 = sor.u32 %s193, %s194
    %p196 = scmp.eq.s32.totalorder %s195, 0
    %s198 = sadd.s32 %s197, 1
    %s199 = scalar_select %p196, %s197, %s198
    %p202 = pneg %p196
    %p203 = scmp.eq.s32.totalorder %s17, 1
    %p204 = por %p202, %p203
    %p205 = scmp.ne.s32.totalorder %s197, %s200
    %p206 = scmp.eq.s32.totalorder %s17, 0
    %p207 = por %p205, %p206
    %p208 = scmp.ne.s32.totalorder %s197, %s200
    %p209 = scmp.eq.s32.totalorder %s22, 1
    %p210 = por %p208, %p209
    %p211 = scmp.ne.s32.totalorder %s200, %s201
    %p212 = scmp.eq.s32.totalorder %s22, 0
    %p213 = por %p211, %p212
    %p214 = scmp.ne.s32.totalorder %s200, %s201
    %p215 = scmp.eq.s32.totalorder %s23, 1
    %p216 = por %p214, %p215
    %p218 = scmp.ne.s32.totalorder %s201, %s217
    %p219 = scmp.eq.s32.totalorder %s23, 0
    %p220 = por %p218, %p219
    %s221 = ssub.s32 %s25, %s32
    %s222 = ssub.s32 %s24, %s36
    %s223 = sor.u32 %s221, %s222
    %p224 = scmp.eq.s32.totalorder %s223, 0
    %s226 = sadd.s32 %s225, 1
    %s227 = scalar_select %p224, %s225, %s226
    %p230 = pneg %p224
    %p231 = scmp.eq.s32.totalorder %s17, 1
    %p232 = por %p230, %p231
    %p233 = scmp.ne.s32.totalorder %s225, %s228
    %p234 = scmp.eq.s32.totalorder %s17, 0
    %p235 = por %p233, %p234
    %p236 = scmp.ne.s32.totalorder %s225, %s228
    %p237 = scmp.eq.s32.totalorder %s22, 1
    %p238 = por %p236, %p237
    %p239 = scmp.ne.s32.totalorder %s228, %s229
    %p240 = scmp.eq.s32.totalorder %s22, 0
    %p241 = por %p239, %p240
    %p242 = scmp.ne.s32.totalorder %s228, %s229
    %p243 = scmp.eq.s32.totalorder %s23, 1
    %p244 = por %p242, %p243
    %p246 = scmp.ne.s32.totalorder %s229, %s245
    %p247 = scmp.eq.s32.totalorder %s23, 0
    %p248 = por %p246, %p247
    %s249 = ssub.s32 %s25, %s32
    %s250 = ssub.s32 %s24, %s36
    %s251 = sor.u32 %s249, %s250
    %p252 = scmp.eq.s32.totalorder %s251, 0
    %s254 = sadd.s32 %s253, 1
    %s255 = scalar_select %p252, %s253, %s254
    %p258 = pneg %p252
    %p259 = scmp.eq.s32.totalorder %s17, 1
    %p260 = por %p258, %p259
    %p261 = scmp.ne.s32.totalorder %s253, %s256
    %p262 = scmp.eq.s32.totalorder %s17, 0
    %p263 = por %p261, %p262
    %p264 = scmp.ne.s32.totalorder %s253, %s256
    %p265 = scmp.eq.s32.totalorder %s22, 1
    %p266 = por %p264, %p265
    %p267 = scmp.ne.s32.totalorder %s256, %s257
    %p268 = scmp.eq.s32.totalorder %s22, 0
    %p269 = por %p267, %p268
    %p270 = scmp.ne.s32.totalorder %s256, %s257
    %p271 = scmp.eq.s32.totalorder %s23, 1
    %p272 = por %p270, %p271
    %p274 = scmp.ne.s32.totalorder %s257, %s273
    %p275 = scmp.eq.s32.totalorder %s23, 0
    %p276 = por %p274, %p275
    %p277 = scmp.le.s32.totalorder 1, %s17
    %p278 = scmp.lt.s32.totalorder %s17, 3
    %p279 = pnand %p277, %p278
    %p280 = pneg %p279
    // Predicated region
    $region9: #{gat_forward.6} parent=5 // pred_check
      _
    $region10: #{gat_forward.6} parent=5 // pred_check_branch
      %282 = sbr.rel (%p279) target = $region12
    $region11: #{gat_forward.6} parent=5 // pred_region
      %s283 = ssub.s32 %s17, 1
      // Predicated region
      $region13: #{gat_forward.6} parent=11 // pred_check
        %p284 = pneg %p107
      $region14: #{gat_forward.6} parent=11 // pred_check_branch
        %286 = sbr.rel (%p284) target = $region16
      $region15: #{gat_forward.6} parent=11 // pred_region
        %p287 = scmp.lt.s32.totalorder %s27, 0
        %s288 = scalar_select %p287, %s27, 0
        %s289 = smul.addr %s288, 8
        %s290 = smul.addr %s289, 4
        %s291 = scalar_lea.vmem %s2, %s290
      $region16: #{gat_forward.6} parent=11 // pred_fallthru
        _
      // Predicated region
      $region17: #{gat_forward.6} parent=11 // pred_check
        %p292 = pneg %p133
      $region18: #{gat_forward.6} parent=11 // pred_check_branch
        %294 = sbr.rel (%p292) target = $region20
      $region19: #{gat_forward.6} parent=11 // pred_region
        %p295 = scmp.lt.s32.totalorder %s27, 0
        %s296 = scalar_select %p295, %s27, 0
        %s297 = smul.addr %s296, 8
        %s298 = smul.addr %s297, 8
        %s299 = scalar_lea.vmem %s3, %s298
      $region20: #{gat_forward.6} parent=11 // pred_fallthru
        _
      // Predicated region
      $region21: #{gat_forward.6} parent=11 // pred_check
        %p300 = pneg %p159
      $region22: #{gat_forward.6} parent=11 // pred_check_branch
        %302 = sbr.rel (%p300) target = $region24
      $region23: #{gat_forward.6} parent=11 // pred_region
        %p303 = scmp.lt.s32.totalorder %s27, 0
        %s304 = scalar_select %p303, %s27, 0
        %s305 = scalar_lea.vmem %s4, %s304
      $region24: #{gat_forward.6} parent=11 // pred_fallthru
        _
      // Predicated region
      $region25: #{gat_forward.6} parent=11 // pred_check
        %p306 = pneg %p185
      $region26: #{gat_forward.6} parent=11 // pred_check_branch
        %308 = sbr.rel (%p306) target = $region28
      $region27: #{gat_forward.6} parent=11 // pred_region
        %p309 = scmp.lt.s32.totalorder %s27, 0
        %s310 = scalar_select %p309, %s27, 0
        %s311 = scalar_lea.vmem [#allocation2], %s310
      $region28: #{gat_forward.6} parent=11 // pred_fallthru
        _
    $region12: #{gat_forward.6} parent=5 // pred_fallthru
      _
    %p312 = scmp.lt.s32.totalorder %s17, 2
    // Predicated region
    $region29: #{gat_forward.6} parent=5 // pred_check
      %p313 = pneg %p312
    $region30: #{gat_forward.6} parent=5 // pred_check_branch
      %315 = sbr.rel (%p313) target = $region32
    $region31: #{gat_forward.6} parent=5 // pred_region
      // Predicated region
      $region33: #{gat_forward.6} parent=31 // pred_check
        %p316 = pneg %p49
      $region34: #{gat_forward.6} parent=31 // pred_check_branch
        %318 = sbr.rel (%p316) target = $region36
      $region35: #{gat_forward.6} parent=31 // pred_region
        %s319 = smul.u32 16, %s24
        %p320 = scmp.lt.s32.totalorder %s319, 31
        %s321 = scalar_select %p320, %s319, 31
        %s322 = smul.addr %s321, 8
        %s323 = scalar_lea.vmem %s0, %s322
        %s324 = smul.u32 16, %s24
      $region36: #{gat_forward.6} parent=31 // pred_fallthru
        _
      // Predicated region
      $region37: #{gat_forward.6} parent=31 // pred_check
        %p325 = pneg %p75
      $region38: #{gat_forward.6} parent=31 // pred_check_branch
        %327 = sbr.rel (%p325) target = $region40
      $region39: #{gat_forward.6} parent=31 // pred_region
        %s328 = smul.u32 16, %s24
        %p329 = scmp.lt.s32.totalorder %s328, 31
        %s330 = scalar_select %p329, %s328, 31
        %s331 = smul.addr %s330, 8
        %s332 = scalar_lea.vmem %s1, %s331
        %s333 = smul.u32 16, %s24
      $region40: #{gat_forward.6} parent=31 // pred_fallthru
        _
    $region32: #{gat_forward.6} parent=5 // pred_fallthru
      _
    %p334 = scmp.le.s32.totalorder 1, %s17
    %p335 = scmp.lt.s32.totalorder %s17, 3
    %p336 = pnand %p334, %p335
    %p337 = pneg %p336
    // Predicated region
    $region41: #{gat_forward.6} parent=5 // pred_check
      _
    $region42: #{gat_forward.6} parent=5 // pred_check_branch
      %339 = sbr.rel (%p336) target = $region44
    $region43: #{gat_forward.6} parent=5 // pred_region
      %s340 = ssub.s32 %s17, 1
      %s341 = smul.u32 16, %s26
      %p342 = scmp.lt.s32.totalorder %s341, 31
      %s343 = scalar_select %p342, %s341, 31
      %s344 = smul.addr %s343, 8
      %s345 = scalar_lea.vmem %s0, %s344
      %p346 = pneg %p55
      %p347 = pneg %p52
      %s348 = smul.u32 16, %s26
      %p349 = scmp.lt.s32.totalorder %s348, 31
      %s350 = scalar_select %p349, %s348, 31
      %s351 = smul.addr %s350, 8
      %s352 = scalar_lea.vmem %s1, %s351
      %p353 = pneg %p81
      %p354 = pneg %p78
      %p355 = scmp.lt.s32.totalorder %s27, 0
      %s356 = scalar_select %p355, %s27, 0
      %s357 = smul.addr %s356, 8
      %s358 = smul.addr %s357, 4
      %s359 = scalar_lea.vmem %s2, %s358
      %p360 = pneg %p107
      %p361 = pneg %p104
      %p362 = scmp.lt.s32.totalorder %s27, 0
      %s363 = scalar_select %p362, %s27, 0
      %s364 = smul.addr %s363, 8
      %s365 = smul.addr %s364, 8
      %s366 = scalar_lea.vmem %s3, %s365
      %p367 = pneg %p133
      %p368 = pneg %p130
      %p369 = scmp.lt.s32.totalorder %s27, 0
      %s370 = scalar_select %p369, %s27, 0
      %s371 = scalar_lea.vmem %s4, %s370
      %p372 = pneg %p159
      %p373 = pneg %p156
      %p374 = scmp.lt.s32.totalorder %s27, 0
      %s375 = scalar_select %p374, %s27, 0
      %s376 = scalar_lea.vmem [#allocation2], %s375
      %p377 = pneg %p185
      %p378 = pneg %p182
      %p379 = pneg %p213
      %p380 = pneg %p210
      %s381 = smul.u32 16, %s26
      %p382 = scmp.lt.s32.totalorder %s27, 0
      %s383 = scalar_select %p382, %s27, 0
      %p384 = scmp.lt.s32.totalorder %s381, 31
      %s385 = scalar_select %p384, %s381, 31
      %s386 = smul.addr %s383, 32
      %s387 = sadd.s32 %s385, %s386
      %s388 = smul.addr %s387, 4
      %s389 = scalar_lea.vmem %s6, %s388
      %p390 = pneg %p241
      %p391 = pneg %p238
      %s392 = smul.u32 16, %s26
      %p393 = scmp.lt.s32.totalorder %s27, 0
      %s394 = scalar_select %p393, %s27, 0
      %p395 = scmp.lt.s32.totalorder %s392, 31
      %s396 = scalar_select %p395, %s392, 31
      %s397 = smul.addr %s394, 32
      %s398 = sadd.s32 %s396, %s397
      %s399 = smul.addr %s398, 8
      %s400 = scalar_lea.vmem %s7, %s399
      %p401 = pneg %p269
      %p402 = pneg %p266
      %p403 = scmp.lt.s32.totalorder %s27, 0
      %s404 = scalar_select %p403, %s27, 0
      %p405 = scmp.lt.s32.totalorder %s26, 1
      %s406 = scalar_select %p405, %s26, 1
      %s407 = smul.addr %s404, 2
      %s408 = sadd.s32 %s406, %s407
      %s409 = scalar_lea.vmem %s8, %s408
      %s410 = smul.u32 16, %s26
      %p411 = scmp.lt.s32.totalorder %s410, 31
      %s412 = scalar_select %p411, %s410, 31
      %s413 = smul.addr %s412, 8
      %s414 = scalar_lea.vmem %s0, %s413
      %s415 = smul.u32 16, %s26
      %s416 = smul.u32 16, %s26
      %p417 = scmp.lt.s32.totalorder %s416, 31
      %s418 = scalar_select %p417, %s416, 31
      %s419 = smul.addr %s418, 8
      %s420 = scalar_lea.vmem %s1, %s419
      %s421 = smul.u32 16, %s26
      %p422 = scmp.lt.s32.totalorder %s27, 0
      %s423 = scalar_select %p422, %s27, 0
      %s424 = smul.addr %s423, 8
      %s425 = smul.addr %s424, 4
      %s426 = scalar_lea.vmem %s2, %s425
      %p427 = scmp.lt.s32.totalorder %s27, 0
      %s428 = scalar_select %p427, %s27, 0
      %s429 = smul.addr %s428, 8
      %s430 = smul.addr %s429, 8
      %s431 = scalar_lea.vmem %s3, %s430
      %p432 = scmp.lt.s32.totalorder %s27, 0
      %s433 = scalar_select %p432, %s27, 0
      %s434 = scalar_lea.vmem %s4, %s433
      %p435 = scmp.lt.s32.totalorder %s27, 0
      %s436 = scalar_select %p435, %s27, 0
      %s437 = scalar_lea.vmem [#allocation2], %s436
      %s438 = smul.u32 16, %s26
      %p439 = scmp.lt.s32.totalorder %s27, 0
      %s440 = scalar_select %p439, %s27, 0
      %p441 = scmp.lt.s32.totalorder %s438, 31
      %s442 = scalar_select %p441, %s438, 31
      %s443 = smul.addr %s440, 32
      %s444 = sadd.s32 %s442, %s443
      %s445 = smul.addr %s444, 4
      %s446 = scalar_lea.vmem %s6, %s445
      %s447 = smul.u32 16, %s26
      %s448 = smul.u32 16, %s26
      %p449 = scmp.lt.s32.totalorder %s27, 0
      %s450 = scalar_select %p449, %s27, 0
      %p451 = scmp.lt.s32.totalorder %s448, 31
      %s452 = scalar_select %p451, %s448, 31
      %s453 = smul.addr %s450, 32
      %s454 = sadd.s32 %s452, %s453
      %s455 = smul.addr %s454, 8
      %s456 = scalar_lea.vmem %s7, %s455
      %s457 = smul.u32 16, %s26
      %p458 = scmp.lt.s32.totalorder %s27, 0
      %s459 = scalar_select %p458, %s27, 0
      %p460 = scmp.lt.s32.totalorder %s26, 1
      %s461 = scalar_select %p460, %s26, 1
      %s462 = smul.addr %s459, 2
      %s463 = sadd.s32 %s461, %s462
      %s464 = scalar_lea.vmem %s8, %s463
      %v466 = vld [vmem:[%s414] sm:$0xff]
      %v467 = vld [vmem:[%s414 + $0x8] sm:$0xff]
      %v468 = vld [vmem:[%s414 + $0x10] sm:$0xff]
      %v469 = vld [vmem:[%s414 + $0x18] sm:$0xff]
      %v470 = vld [vmem:[%s414 + $0x20] sm:$0xff]
      %v471 = vld [vmem:[%s414 + $0x28] sm:$0xff]
      %v472 = vld [vmem:[%s414 + $0x30] sm:$0xff]
      %v473 = vld [vmem:[%s414 + $0x38] sm:$0xff]
      %v474 = vld [vmem:[%s414 + $0x40] sm:$0xff]
      %v475 = vld [vmem:[%s414 + $0x48] sm:$0xff]
      %v476 = vld [vmem:[%s414 + $0x50] sm:$0xff]
      %v477 = vld [vmem:[%s414 + $0x58] sm:$0xff]
      %v478 = vld [vmem:[%s414 + $0x60] sm:$0xff]
      %v479 = vld [vmem:[%s414 + $0x68] sm:$0xff]
      %v480 = vld [vmem:[%s414 + $0x70] sm:$0xff]
      %v481 = vld [vmem:[%s414 + $0x78] sm:$0xff]
      %v482 = vpack.c.bf16 %v467, %v466
      %v483 = vpack.c.bf16 %v469, %v468
      %v484 = vpack.c.bf16 %v471, %v470
      %v485 = vpack.c.bf16 %v473, %v472
      %v486 = vpack.c.bf16 %v475, %v474
      %v487 = vpack.c.bf16 %v477, %v476
      %v488 = vpack.c.bf16 %v479, %v478
      %v489 = vpack.c.bf16 %v481, %v480
      %v490 = vld [vmem:[%s426] sm:$0xf]
      %v491 = vld [vmem:[%s426 + $0x4] sm:$0xf]
      %v492 = vld [vmem:[%s426 + $0x8] sm:$0xf]
      %v493 = vld [vmem:[%s426 + $0xc] sm:$0xf]
      %v494 = vld [vmem:[%s426 + $0x10] sm:$0xf]
      %v495 = vld [vmem:[%s426 + $0x14] sm:$0xf]
      %v496 = vld [vmem:[%s426 + $0x18] sm:$0xf]
      %v497 = vld [vmem:[%s426 + $0x1c] sm:$0xf]
      %v506 = vunpack.c.l.b16 %v490
      %v507 = vunpack.c.l.b16 %v491
      %v508 = vunpack.c.l.b16 %v492
      %v509 = vunpack.c.l.b16 %v493
      %v510 = vunpack.c.l.b16 %v494
      %v511 = vunpack.c.l.b16 %v495
      %v512 = vunpack.c.l.b16 %v496
      %v513 = vunpack.c.l.b16 %v497
      %v514 = vpack.c.b16 %v507, %v506
      %v515 = vpack.c.b16 %v509, %v508
      %v516 = vpack.c.b16 %v511, %v510
      %v517 = vpack.c.b16 %v513, %v512
      %vm522 = vcmask 523264
      %v524 = vsel %vm522, %v482, 0
      %v527 = vsel %vm522, %v483, 0
      %v530 = vsel %vm522, %v484, 0
      %v533 = vsel %vm522, %v485, 0
      %v536 = vsel %vm522, %v486, 0
      %v539 = vsel %vm522, %v487, 0
      %v542 = vsel %vm522, %v488, 0
      %v545 = vsel %vm522, %v489, 0
      %547 = vmatprep.subr.bf16.mxu0 0
      %548 = vmatpush1.bf16.msra.mxu0 %v514
      %549 = vmatprep.subr.bf16.mxu0 0
      %550 = vmatpush1.bf16.msra.mxu0 %v515
      %551 = vmatprep.subr.bf16.mxu0 0
      %552 = vmatpush1.bf16.msra.mxu0 %v516
      %553 = vmatprep.subr.bf16.mxu0 0
      %554 = vmatpush1.bf16.msra.mxu0 %v517
      %555 = vmatprep.subr.bf16.mxu0 0
      %556 = vmatpush1.bf16.msra.mxu0 0
      %557 = vmatprep.subr.bf16.mxu0 0
      %558 = vmatpush1.bf16.msra.mxu0 0
      %559 = vmatprep.subr.bf16.mxu0 0
      %560 = vmatpush1.bf16.msra.mxu0 0
      %561 = vmatprep.subr.bf16.mxu0 0
      %562 = vmatpush1.bf16.msra.mxu0 0
      %563 = vmatprep.subr.bf16.mxu0 0
      %564 = vmatpush1.bf16.msra.mxu0 0
      %565 = vmatprep.subr.bf16.mxu0 0
      %566 = vmatpush1.bf16.msra.mxu0 0
      %567 = vmatprep.subr.bf16.mxu0 0
      %568 = vmatpush1.bf16.msra.mxu0 0
      %569 = vmatprep.subr.bf16.mxu0 0
      %570 = vmatpush1.bf16.msra.mxu0 0
      %571 = vmatprep.subr.bf16.mxu0 0
      %572 = vmatpush1.bf16.msra.mxu0 0
      %573 = vmatprep.subr.bf16.mxu0 0
      %574 = vmatpush1.bf16.msra.mxu0 0
      %575 = vmatprep.subr.bf16.mxu0 0
      %576 = vmatpush1.bf16.msra.mxu0 0
      %577 = vmatprep.subr.bf16.mxu0 0
      %578 = vmatpush1.bf16.msra.mxu0 0
      %579 = vmatprep.mubr.bf16.mxu0 0
      %580 = vmatmul.mubr.bf16.gmra.mrb[0].mxu0 %v524
      %v581 = vpop.f32.mrb[0].mxu0
      %v582 = vadd.f32 0.0, %v581
      %v583 = vpop.f32.mrb[0].mxu0
      %v584 = vpop.f32.mrb[0].mxu0
      %v585 = vadd.f32 0.0, %v584
      %v586 = vpop.f32.mrb[0].mxu0
      %587 = vmatprep.mubr.bf16.mxu0 0
      %588 = vmatmul.mubr.bf16.gmra.mrb[0].mxu0 %v527
      %v589 = vpop.f32.mrb[0].mxu0
      %v590 = vadd.f32 0.0, %v589
      %v591 = vpop.f32.mrb[0].mxu0
      %v592 = vpop.f32.mrb[0].mxu0
      %v593 = vadd.f32 0.0, %v592
      %v594 = vpop.f32.mrb[0].mxu0
      %595 = vmatprep.mubr.bf16.mxu0 0
      %596 = vmatmul.mubr.bf16.gmra.mrb[0].mxu0 %v530
      %v597 = vpop.f32.mrb[0].mxu0
      %v598 = vadd.f32 0.0, %v597
      %v599 = vpop.f32.mrb[0].mxu0
      %v600 = vpop.f32.mrb[0].mxu0
      %v601 = vadd.f32 0.0, %v600
      %v602 = vpop.f32.mrb[0].mxu0
      %603 = vmatprep.mubr.bf16.mxu0 0
      %604 = vmatmul.mubr.bf16.gmra.mrb[0].mxu0 %v533
      %v605 = vpop.f32.mrb[0].mxu0
      %v606 = vadd.f32 0.0, %v605
      %v607 = vpop.f32.mrb[0].mxu0
      %v608 = vpop.f32.mrb[0].mxu0
      %v609 = vadd.f32 0.0, %v608
      %v610 = vpop.f32.mrb[0].mxu0
      %611 = vmatprep.mubr.bf16.mxu0 0
      %612 = vmatmul.mubr.bf16.gmra.mrb[0].mxu0 %v536
      %v613 = vpop.f32.mrb[0].mxu0
      %v614 = vadd.f32 0.0, %v613
      %v615 = vpop.f32.mrb[0].mxu0
      %v616 = vpop.f32.mrb[0].mxu0
      %v617 = vadd.f32 0.0, %v616
      %v618 = vpop.f32.mrb[0].mxu0
      %619 = vmatprep.mubr.bf16.mxu0 0
      %620 = vmatmul.mubr.bf16.gmra.mrb[0].mxu0 %v539
      %v621 = vpop.f32.mrb[0].mxu0
      %v622 = vadd.f32 0.0, %v621
      %v623 = vpop.f32.mrb[0].mxu0
      %v624 = vpop.f32.mrb[0].mxu0
      %v625 = vadd.f32 0.0, %v624
      %v626 = vpop.f32.mrb[0].mxu0
      %627 = vmatprep.mubr.bf16.mxu0 0
      %628 = vmatmul.mubr.bf16.gmra.mrb[0].mxu0 %v542
      %v629 = vpop.f32.mrb[0].mxu0
      %v630 = vadd.f32 0.0, %v629
      %v631 = vpop.f32.mrb[0].mxu0
      %v632 = vpop.f32.mrb[0].mxu0
      %v633 = vadd.f32 0.0, %v632
      %v634 = vpop.f32.mrb[0].mxu0
      %635 = vmatprep.mubr.bf16.mxu0 0
      %636 = vmatmul.mubr.bf16.gmra.mrb[0].mxu0 %v545
      %v637 = vpop.f32.mrb[0].mxu0
      %v638 = vadd.f32 0.0, %v637
      %v639 = vpop.f32.mrb[0].mxu0
      %v640 = vpop.f32.mrb[0].mxu0
      %v641 = vadd.f32 0.0, %v640
      %v642 = vpop.f32.mrb[0].mxu0
      %643 = vdwg.mxu0
      %v644 = vpack.c.bf16 %v585, %v582
      %v645 = vpack.c.bf16 %v593, %v590
      %v646 = vpack.c.bf16 %v601, %v598
      %v647 = vpack.c.bf16 %v609, %v606
      %v648 = vpack.c.bf16 %v617, %v614
      %v649 = vpack.c.bf16 %v625, %v622
      %v650 = vpack.c.bf16 %v633, %v630
      %v651 = vpack.c.bf16 %v641, %v638
      %v660 = vunpack.c.l.b16 %v644
      %v661 = vunpack.c.h.b16 %v644
      %v662 = vunpack.c.l.b16 %v645
      %v663 = vunpack.c.h.b16 %v645
      %v664 = vunpack.c.l.b16 %v646
      %v665 = vunpack.c.h.b16 %v646
      %v666 = vunpack.c.l.b16 %v647
      %v667 = vunpack.c.h.b16 %v647
      %v668 = vunpack.c.l.b16 %v648
      %v669 = vunpack.c.h.b16 %v648
      %v670 = vunpack.c.l.b16 %v649
      %v671 = vunpack.c.h.b16 %v649
      %v672 = vunpack.c.l.b16 %v650
      %v673 = vunpack.c.h.b16 %v650
      %v674 = vunpack.c.l.b16 %v651
      %v675 = vunpack.c.h.b16 %v651
      %v676 = vpack.c.b16 %v660, %v660
      %v677 = vpack.c.b16 %v661, %v661
      %v678 = vpack.c.b16 %v662, %v662
      %v679 = vpack.c.b16 %v663, %v663
      %v680 = vpack.c.b16 %v664, %v664
      %v681 = vpack.c.b16 %v665, %v665
      %v682 = vpack.c.b16 %v666, %v666
      %v683 = vpack.c.b16 %v667, %v667
      %v684 = vpack.c.b16 %v668, %v668
      %v685 = vpack.c.b16 %v669, %v669
      %v686 = vpack.c.b16 %v670, %v670
      %v687 = vpack.c.b16 %v671, %v671
      %v688 = vpack.c.b16 %v672, %v672
      %v689 = vpack.c.b16 %v673, %v673
      %v690 = vpack.c.b16 %v674, %v674
      %v691 = vpack.c.b16 %v675, %v675
      %vm708 = vcmask 60416
      %709 = vst.msk [vmem:[%s446] sm:$0xf] %vm708, %v676
      %710 = vst.msk [vmem:[%s446 + $0x4] sm:$0xf] %vm708, %v677
      %711 = vst.msk [vmem:[%s446 + $0x8] sm:$0xf] %vm708, %v678
      %712 = vst.msk [vmem:[%s446 + $0xc] sm:$0xf] %vm708, %v679
      %713 = vst.msk [vmem:[%s446 + $0x10] sm:$0xf] %vm708, %v680
      %714 = vst.msk [vmem:[%s446 + $0x14] sm:$0xf] %vm708, %v681
      %715 = vst.msk [vmem:[%s446 + $0x18] sm:$0xf] %vm708, %v682
      %716 = vst.msk [vmem:[%s446 + $0x1c] sm:$0xf] %vm708, %v683
      %717 = vst.msk [vmem:[%s446 + $0x20] sm:$0xf] %vm708, %v684
      %718 = vst.msk [vmem:[%s446 + $0x24] sm:$0xf] %vm708, %v685
      %719 = vst.msk [vmem:[%s446 + $0x28] sm:$0xf] %vm708, %v686
      %720 = vst.msk [vmem:[%s446 + $0x2c] sm:$0xf] %vm708, %v687
      %721 = vst.msk [vmem:[%s446 + $0x30] sm:$0xf] %vm708, %v688
      %722 = vst.msk [vmem:[%s446 + $0x34] sm:$0xf] %vm708, %v689
      %723 = vst.msk [vmem:[%s446 + $0x38] sm:$0xf] %vm708, %v690
      %724 = vst.msk [vmem:[%s446 + $0x3c] sm:$0xf] %vm708, %v691
      %v725 = vld [vmem:[%s431] sm:$0xff]
      %v726 = vld [vmem:[%s431 + $0x8] sm:$0xff]
      %v727 = vld [vmem:[%s431 + $0x10] sm:$0xff]
      %v728 = vld [vmem:[%s431 + $0x18] sm:$0xff]
      %v729 = vld [vmem:[%s431 + $0x20] sm:$0xff]
      %v730 = vld [vmem:[%s431 + $0x28] sm:$0xff]
      %v731 = vld [vmem:[%s431 + $0x30] sm:$0xff]
      %v732 = vld [vmem:[%s431 + $0x38] sm:$0xff]
      %v733 = vld [vmem:[%s420] sm:$0xff]
      %v734 = vld [vmem:[%s420 + $0x8] sm:$0xff]
      %v735 = vld [vmem:[%s420 + $0x10] sm:$0xff]
      %v736 = vld [vmem:[%s420 + $0x18] sm:$0xff]
      %v737 = vld [vmem:[%s420 + $0x20] sm:$0xff]
      %v738 = vld [vmem:[%s420 + $0x28] sm:$0xff]
      %v739 = vld [vmem:[%s420 + $0x30] sm:$0xff]
      %v740 = vld [vmem:[%s420 + $0x38] sm:$0xff]
      %v741 = vld [vmem:[%s420 + $0x40] sm:$0xff]
      %v742 = vld [vmem:[%s420 + $0x48] sm:$0xff]
      %v743 = vld [vmem:[%s420 + $0x50] sm:$0xff]
      %v744 = vld [vmem:[%s420 + $0x58] sm:$0xff]
      %v745 = vld [vmem:[%s420 + $0x60] sm:$0xff]
      %v746 = vld [vmem:[%s420 + $0x68] sm:$0xff]
      %v747 = vld [vmem:[%s420 + $0x70] sm:$0xff]
      %v748 = vld [vmem:[%s420 + $0x78] sm:$0xff]
      %v749 = vld [vmem:[%s437] sm:$0x1]
      %v751 = vlaneseq
      %v752 = vshrl.u32 %v751, 7
      %v753 = vsub.s32 0, %v752
      %v754 = vrot.slane %v749, %v753
      %v756 = vmul.f32 %v733, %v754
      %v757 = vmul.f32 %v734, %v754
      %v758 = vmul.f32 %v735, %v754
      %v759 = vmul.f32 %v736, %v754
      %v760 = vmul.f32 %v737, %v754
      %v761 = vmul.f32 %v738, %v754
      %v762 = vmul.f32 %v739, %v754
      %v763 = vmul.f32 %v740, %v754
      %v764 = vmul.f32 %v741, %v754
      %v765 = vmul.f32 %v742, %v754
      %v766 = vmul.f32 %v743, %v754
      %v767 = vmul.f32 %v744, %v754
      %v768 = vmul.f32 %v745, %v754
      %v769 = vmul.f32 %v746, %v754
      %v770 = vmul.f32 %v747, %v754
      %v771 = vmul.f32 %v748, %v754
      %v772 = vadd.f32 %v756, 0.0
      %v773 = vadd.f32 %v757, 0.0
      %v774 = vadd.f32 %v758, 0.0
      %v775 = vadd.f32 %v759, 0.0
      %v776 = vadd.f32 %v760, 0.0
      %v777 = vadd.f32 %v761, 0.0
      %v778 = vadd.f32 %v762, 0.0
      %v779 = vadd.f32 %v763, 0.0
      %v780 = vadd.f32 %v764, 0.0
      %v781 = vadd.f32 %v765, 0.0
      %v782 = vadd.f32 %v766, 0.0
      %v783 = vadd.f32 %v767, 0.0
      %v784 = vadd.f32 %v768, 0.0
      %v785 = vadd.f32 %v769, 0.0
      %v786 = vadd.f32 %v770, 0.0
      %v787 = vadd.f32 %v771, 0.0
      %v789 = vsel %vm522, %v466, 0
      %v792 = vsel %vm522, %v467, 0
      %v795 = vsel %vm522, %v468, 0
      %v798 = vsel %vm522, %v469, 0
      %v801 = vsel %vm522, %v470, 0
      %v804 = vsel %vm522, %v471, 0
      %v807 = vsel %vm522, %v472, 0
      %v810 = vsel %vm522, %v473, 0
      %v813 = vsel %vm522, %v474, 0
      %v816 = vsel %vm522, %v475, 0
      %v819 = vsel %vm522, %v476, 0
      %v822 = vsel %vm522, %v477, 0
      %v825 = vsel %vm522, %v478, 0
      %v828 = vsel %vm522, %v479, 0
      %v831 = vsel %vm522, %v480, 0
      %v834 = vsel %vm522, %v481, 0
      %836 = vmatprep.subr.mxu0 0.0
      %837 = vmatpush1.msra.mxu0 %v725
      %838 = vmatprep.subr.mxu0 0.0
      %839 = vmatpush1.msra.mxu0 %v726
      %840 = vmatprep.subr.mxu0 0.0
      %841 = vmatpush1.msra.mxu0 %v727
      %842 = vmatprep.subr.mxu0 0.0
      %843 = vmatpush1.msra.mxu0 %v728
      %844 = vmatprep.subr.mxu0 0.0
      %845 = vmatpush1.msra.mxu0 %v729
      %846 = vmatprep.subr.mxu0 0.0
      %847 = vmatpush1.msra.mxu0 %v730
      %848 = vmatprep.subr.mxu0 0.0
      %849 = vmatpush1.msra.mxu0 %v731
      %850 = vmatprep.subr.mxu0 0.0
      %851 = vmatpush1.msra.mxu0 %v732
      %852 = vmatprep.subr.mxu0 0.0
      %853 = vmatpush1.msra.mxu0 0.0
      %854 = vmatprep.subr.mxu0 0.0
      %855 = vmatpush1.msra.mxu0 0.0
      %856 = vmatprep.subr.mxu0 0.0
      %857 = vmatpush1.msra.mxu0 0.0
      %858 = vmatprep.subr.mxu0 0.0
      %859 = vmatpush1.msra.mxu0 0.0
      %860 = vmatprep.subr.mxu0 0.0
      %861 = vmatpush1.msra.mxu0 0.0
      %862 = vmatprep.subr.mxu0 0.0
      %863 = vmatpush1.msra.mxu0 0.0
      %864 = vmatprep.subr.mxu0 0.0
      %865 = vmatpush1.msra.mxu0 0.0
      %866 = vmatprep.subr.mxu0 0.0
      %867 = vmatpush1.msra.mxu0 0.0
      %868 = vmatprep.subr.mxu0 0.0
      %869 = vmatpush1.msra.mxu0 0.0
      %870 = vmatprep.subr.mxu0 0.0
      %871 = vmatpush1.msra.mxu0 0.0
      %872 = vmatprep.subr.mxu0 0.0
      %873 = vmatpush1.msra.mxu0 0.0
      %874 = vmatprep.subr.mxu0 0.0
      %875 = vmatpush1.msra.mxu0 0.0
      %876 = vmatprep.subr.mxu0 0.0
      %877 = vmatpush1.msra.mxu0 0.0
      %878 = vmatprep.subr.mxu0 0.0
      %879 = vmatpush1.msra.mxu0 0.0
      %880 = vmatprep.subr.mxu0 0.0
      %881 = vmatpush1.msra.mxu0 0.0
      %882 = vmatprep.subr.mxu0 0.0
      %883 = vmatpush1.msra.mxu0 0.0
      %884 = vmatprep.subr.mxu0 0.0
      %885 = vmatpush1.msra.mxu0 0.0
      %886 = vmatprep.subr.mxu0 0.0
      %887 = vmatpush1.msra.mxu0 0.0
      %888 = vmatprep.subr.mxu0 0.0
      %889 = vmatpush1.msra.mxu0 0.0
      %890 = vmatprep.subr.mxu0 0.0
      %891 = vmatpush1.msra.mxu0 0.0
      %892 = vmatprep.subr.mxu0 0.0
      %893 = vmatpush1.msra.mxu0 0.0
      %894 = vmatprep.subr.mxu0 0.0
      %895 = vmatpush1.msra.mxu0 0.0
      %896 = vmatprep.subr.mxu0 0.0
      %897 = vmatpush1.msra.mxu0 0.0
      %898 = vmatprep.subr.mxu0 0.0
      %899 = vmatpush1.msra.mxu0 0.0
      %900 = vmatprep.mubr.f32.mxu0 0.0
      %901 = vmatmul.mubr.f32.gmra.mrb[0].mxu0 %v789
      %v902 = vpop.f32.mrb[0].mxu0
      %v903 = vadd.f32 %v772, %v902
      %v904 = vpop.f32.mrb[0].mxu0
      %905 = vmatprep.mubr.f32.mxu0 0.0
      %906 = vmatmul.mubr.f32.gmra.mrb[0].mxu0 %v792
      %v907 = vpop.f32.mrb[0].mxu0
      %v908 = vadd.f32 %v773, %v907
      %v909 = vpop.f32.mrb[0].mxu0
      %910 = vmatprep.mubr.f32.mxu0 0.0
      %911 = vmatmul.mubr.f32.gmra.mrb[0].mxu0 %v795
      %v912 = vpop.f32.mrb[0].mxu0
      %v913 = vadd.f32 %v774, %v912
      %v914 = vpop.f32.mrb[0].mxu0
      %915 = vmatprep.mubr.f32.mxu0 0.0
      %916 = vmatmul.mubr.f32.gmra.mrb[0].mxu0 %v798
      %v917 = vpop.f32.mrb[0].mxu0
      %v918 = vadd.f32 %v775, %v917
      %v919 = vpop.f32.mrb[0].mxu0
      %920 = vmatprep.mubr.f32.mxu0 0.0
      %921 = vmatmul.mubr.f32.gmra.mrb[0].mxu0 %v801
      %v922 = vpop.f32.mrb[0].mxu0
      %v923 = vadd.f32 %v776, %v922
      %v924 = vpop.f32.mrb[0].mxu0
      %925 = vmatprep.mubr.f32.mxu0 0.0
      %926 = vmatmul.mubr.f32.gmra.mrb[0].mxu0 %v804
      %v927 = vpop.f32.mrb[0].mxu0
      %v928 = vadd.f32 %v777, %v927
      %v929 = vpop.f32.mrb[0].mxu0
      %930 = vmatprep.mubr.f32.mxu0 0.0
      %931 = vmatmul.mubr.f32.gmra.mrb[0].mxu0 %v807
      %v932 = vpop.f32.mrb[0].mxu0
      %v933 = vadd.f32 %v778, %v932
      %v934 = vpop.f32.mrb[0].mxu0
      %935 = vmatprep.mubr.f32.mxu0 0.0
      %936 = vmatmul.mubr.f32.gmra.mrb[0].mxu0 %v810
      %v937 = vpop.f32.mrb[0].mxu0
      %v938 = vadd.f32 %v779, %v937
      %v939 = vpop.f32.mrb[0].mxu0
      %940 = vmatprep.mubr.f32.mxu0 0.0
      %941 = vmatmul.mubr.f32.gmra.mrb[0].mxu0 %v813
      %v942 = vpop.f32.mrb[0].mxu0
      %v943 = vadd.f32 %v780, %v942
      %v944 = vpop.f32.mrb[0].mxu0
      %945 = vmatprep.mubr.f32.mxu0 0.0
      %946 = vmatmul.mubr.f32.gmra.mrb[0].mxu0 %v816
      %v947 = vpop.f32.mrb[0].mxu0
      %v948 = vadd.f32 %v781, %v947
      %v949 = vpop.f32.mrb[0].mxu0
      %950 = vmatprep.mubr.f32.mxu0 0.0
      %951 = vmatmul.mubr.f32.gmra.mrb[0].mxu0 %v819
      %v952 = vpop.f32.mrb[0].mxu0
      %v953 = vadd.f32 %v782, %v952
      %v954 = vpop.f32.mrb[0].mxu0
      %955 = vmatprep.mubr.f32.mxu0 0.0
      %956 = vmatmul.mubr.f32.gmra.mrb[0].mxu0 %v822
      %v957 = vpop.f32.mrb[0].mxu0
      %v958 = vadd.f32 %v783, %v957
      %v959 = vpop.f32.mrb[0].mxu0
      %960 = vmatprep.mubr.f32.mxu0 0.0
      %961 = vmatmul.mubr.f32.gmra.mrb[0].mxu0 %v825
      %v962 = vpop.f32.mrb[0].mxu0
      %v963 = vadd.f32 %v784, %v962
      %v964 = vpop.f32.mrb[0].mxu0
      %965 = vmatprep.mubr.f32.mxu0 0.0
      %966 = vmatmul.mubr.f32.gmra.mrb[0].mxu0 %v828
      %v967 = vpop.f32.mrb[0].mxu0
      %v968 = vadd.f32 %v785, %v967
      %v969 = vpop.f32.mrb[0].mxu0
      %970 = vmatprep.mubr.f32.mxu0 0.0
      %971 = vmatmul.mubr.f32.gmra.mrb[0].mxu0 %v831
      %v972 = vpop.f32.mrb[0].mxu0
      %v973 = vadd.f32 %v786, %v972
      %v974 = vpop.f32.mrb[0].mxu0
      %975 = vmatprep.mubr.f32.mxu0 0.0
      %976 = vmatmul.mubr.f32.gmra.mrb[0].mxu0 %v834
      %v977 = vpop.f32.mrb[0].mxu0
      %v978 = vadd.f32 %v787, %v977
      %v979 = vpop.f32.mrb[0].mxu0
      %980 = vdwg.mxu0
      %vm981 = vcmask 7168
      %982 = vst.msk [vmem:[%s456] sm:$0xff] %vm981, %v903
      %983 = vst.msk [vmem:[%s456 + $0x8] sm:$0xff] %vm981, %v908
      %984 = vst.msk [vmem:[%s456 + $0x10] sm:$0xff] %vm981, %v913
      %985 = vst.msk [vmem:[%s456 + $0x18] sm:$0xff] %vm981, %v918
      %986 = vst.msk [vmem:[%s456 + $0x20] sm:$0xff] %vm981, %v923
      %987 = vst.msk [vmem:[%s456 + $0x28] sm:$0xff] %vm981, %v928
      %988 = vst.msk [vmem:[%s456 + $0x30] sm:$0xff] %vm981, %v933
      %989 = vst.msk [vmem:[%s456 + $0x38] sm:$0xff] %vm981, %v938
      %990 = vst.msk [vmem:[%s456 + $0x40] sm:$0xff] %vm981, %v943
      %991 = vst.msk [vmem:[%s456 + $0x48] sm:$0xff] %vm981, %v948
      %992 = vst.msk [vmem:[%s456 + $0x50] sm:$0xff] %vm981, %v953
      %993 = vst.msk [vmem:[%s456 + $0x58] sm:$0xff] %vm981, %v958
      %994 = vst.msk [vmem:[%s456 + $0x60] sm:$0xff] %vm981, %v963
      %995 = vst.msk [vmem:[%s456 + $0x68] sm:$0xff] %vm981, %v968
      %996 = vst.msk [vmem:[%s456 + $0x70] sm:$0xff] %vm981, %v973
      %997 = vst.msk [vmem:[%s456 + $0x78] sm:$0xff] %vm981, %v978
      %v998 = vld [vmem:[%s434] sm:$0x1]
      %v1000 = vsel %vm522, %v998, 0
      %1002 = vmatprep.subr.mxu0 0.0
      %1003 = vmatpush1.xpose.msra.mxu0 %v789
      %1004 = vmatprep.subr.mxu0 0.0
      %1005 = vmatpush1.xpose.msra.mxu0 %v792
      %1006 = vmatprep.subr.mxu0 0.0
      %1007 = vmatpush1.xpose.msra.mxu0 %v795
      %1008 = vmatprep.subr.mxu0 0.0
      %1009 = vmatpush1.xpose.msra.mxu0 %v798
      %1010 = vmatprep.subr.mxu0 0.0
      %1011 = vmatpush1.xpose.msra.mxu0 %v801
      %1012 = vmatprep.subr.mxu0 0.0
      %1013 = vmatpush1.xpose.msra.mxu0 %v804
      %1014 = vmatprep.subr.mxu0 0.0
      %1015 = vmatpush1.xpose.msra.mxu0 %v807
      %1016 = vmatprep.subr.mxu0 0.0
      %1017 = vmatpush1.xpose.msra.mxu0 %v810
      %1018 = vmatprep.subr.mxu0 0.0
      %1019 = vmatpush1.xpose.msra.mxu0 %v813
      %1020 = vmatprep.subr.mxu0 0.0
      %1021 = vmatpush1.xpose.msra.mxu0 %v816
      %1022 = vmatprep.subr.mxu0 0.0
      %1023 = vmatpush1.xpose.msra.mxu0 %v819
      %1024 = vmatprep.subr.mxu0 0.0
      %1025 = vmatpush1.xpose.msra.mxu0 %v822
      %1026 = vmatprep.subr.mxu0 0.0
      %1027 = vmatpush1.xpose.msra.mxu0 %v825
      %1028 = vmatprep.subr.mxu0 0.0
      %1029 = vmatpush1.xpose.msra.mxu0 %v828
      %1030 = vmatprep.subr.mxu0 0.0
      %1031 = vmatpush1.xpose.msra.mxu0 %v831
      %1032 = vmatprep.subr.mxu0 0.0
      %1033 = vmatpush1.xpose.msra.mxu0 %v834
      %1034 = vmatprep.subr.mxu0 0.0
      %1035 = vmatpush1.xpose.msra.mxu0 0.0
      %1036 = vmatprep.subr.mxu0 0.0
      %1037 = vmatpush1.xpose.msra.mxu0 0.0
      %1038 = vmatprep.subr.mxu0 0.0
      %1039 = vmatpush1.xpose.msra.mxu0 0.0
      %1040 = vmatprep.subr.mxu0 0.0
      %1041 = vmatpush1.xpose.msra.mxu0 0.0
      %1042 = vmatprep.subr.mxu0 0.0
      %1043 = vmatpush1.xpose.msra.mxu0 0.0
      %1044 = vmatprep.subr.mxu0 0.0
      %1045 = vmatpush1.xpose.msra.mxu0 0.0
      %1046 = vmatprep.subr.mxu0 0.0
      %1047 = vmatpush1.xpose.msra.mxu0 0.0
      %1048 = vmatprep.subr.mxu0 0.0
      %1049 = vmatpush1.xpose.msra.mxu0 0.0
      %1050 = vmatprep.subr.mxu0 0.0
      %1051 = vmatpush1.xpose.msra.mxu0 0.0
      %1052 = vmatprep.subr.mxu0 0.0
      %1053 = vmatpush1.xpose.msra.mxu0 0.0
      %1054 = vmatprep.subr.mxu0 0.0
      %1055 = vmatpush1.xpose.msra.mxu0 0.0
      %1056 = vmatprep.subr.mxu0 0.0
      %1057 = vmatpush1.xpose.msra.mxu0 0.0
      %1058 = vmatprep.subr.mxu0 0.0
      %1059 = vmatpush1.xpose.msra.mxu0 0.0
      %1060 = vmatprep.subr.mxu0 0.0
      %1061 = vmatpush1.xpose.msra.mxu0 0.0
      %1062 = vmatprep.subr.mxu0 0.0
      %1063 = vmatpush1.xpose.msra.mxu0 0.0
      %1064 = vmatprep.subr.mxu0 0.0
      %1065 = vmatpush1.xpose.msra.mxu0 0.0
      %1066 = vmatprep.mubr.f32.mxu0 0.0
      %1067 = vmatmul.mubr.f32.gmra.mrb[0].mxu0 %v1000
      %v1068 = vpop.f32.mrb[0].mxu0
      %v1069 = vadd.f32 0.0, %v1068
      %v1070 = vpop.f32.mrb[0].mxu0
      %1071 = vdwg.mxu0
      %1072 = vst [vmem:[%s464] sm:$0x1] %v1069
      %s1073 = smul.u32 16, %s26
      %p1074 = scmp.lt.s32.totalorder %s27, 0
      %s1075 = scalar_select %p1074, %s27, 0
      %p1076 = scmp.lt.s32.totalorder %s1073, 31
      %s1077 = scalar_select %p1076, %s1073, 31
      %s1078 = smul.addr %s1075, 32
      %s1079 = sadd.s32 %s1077, %s1078
      %s1080 = smul.addr %s1079, 4
      %s1081 = scalar_lea.vmem %s6, %s1080
      %s1082 = smul.u32 16, %s26
      %p1083 = scmp.lt.s32.totalorder %s27, 0
      %s1084 = scalar_select %p1083, %s27, 0
      %p1085 = scmp.lt.s32.totalorder %s1082, 31
      %s1086 = scalar_select %p1085, %s1082, 31
      %s1087 = smul.addr %s1084, 32
      %s1088 = sadd.s32 %s1086, %s1087
      %s1089 = smul.addr %s1088, 8
      %s1090 = scalar_lea.vmem %s7, %s1089
      %p1091 = scmp.lt.s32.totalorder %s27, 0
      %s1092 = scalar_select %p1091, %s27, 0
      %p1093 = scmp.lt.s32.totalorder %s26, 1
      %s1094 = scalar_select %p1093, %s26, 1
      %s1095 = smul.addr %s1092, 2
      %s1096 = sadd.s32 %s1094, %s1095
      %s1097 = scalar_lea.vmem %s8, %s1096
      // Predicated region
      $region45: #{gat_forward.6} parent=43 // pred_check
        %p1098 = pneg %p210
      $region46: #{gat_forward.6} parent=43 // pred_check_branch
        %1100 = sbr.rel (%p1098) target = $region48
      $region47: #{gat_forward.6} parent=43 // pred_region
        %s1101 = smul.u32 16, %s26
      $region48: #{gat_forward.6} parent=43 // pred_fallthru
        _
      // Predicated region
      $region49: #{gat_forward.6} parent=43 // pred_check
        %p1102 = pneg %p238
      $region50: #{gat_forward.6} parent=43 // pred_check_branch
        %1104 = sbr.rel (%p1102) target = $region52
      $region51: #{gat_forward.6} parent=43 // pred_region
        %s1105 = smul.u32 16, %s26
      $region52: #{gat_forward.6} parent=43 // pred_fallthru
        _
      // Predicated region
      $region53: #{gat_forward.6} parent=43 // pred_check
        %p1106 = pneg %p266
      $region54: #{gat_forward.6} parent=43 // pred_check_branch
        %1108 = sbr.rel (%p1106) target = $region56
      $region55: #{gat_forward.6} parent=43 // pred_region
        _
      $region56: #{gat_forward.6} parent=43 // pred_fallthru
        _
    $region44: #{gat_forward.6} parent=5 // pred_fallthru
      _
    %p1109 = scmp.le.s32.totalorder 2, %s17
    // Predicated region
    $region57: #{gat_forward.6} parent=5 // pred_check
      %p1110 = pneg %p1109
    $region58: #{gat_forward.6} parent=5 // pred_check_branch
      %1112 = sbr.rel (%p1110) target = $region60
    $region59: #{gat_forward.6} parent=5 // pred_region
      %s1113 = ssub.s32 %s17, 2
      // Predicated region
      $region61: #{gat_forward.6} parent=59 // pred_check
        %p1114 = pneg %p216
      $region62: #{gat_forward.6} parent=59 // pred_check_branch
        %1116 = sbr.rel (%p1114) target = $region64
      $region63: #{gat_forward.6} parent=59 // pred_region
        %s1117 = smul.u32 16, %s28
        %p1118 = scmp.lt.s32.totalorder %s29, 0
        %s1119 = scalar_select %p1118, %s29, 0
        %p1120 = scmp.lt.s32.totalorder %s1117, 31
        %s1121 = scalar_select %p1120, %s1117, 31
        %s1122 = smul.addr %s1119, 32
        %s1123 = sadd.s32 %s1121, %s1122
        %s1124 = smul.addr %s1123, 4
        %s1125 = scalar_lea.vmem %s6, %s1124
      $region64: #{gat_forward.6} parent=59 // pred_fallthru
        _
      // Predicated region
      $region65: #{gat_forward.6} parent=59 // pred_check
        %p1126 = pneg %p244
      $region66: #{gat_forward.6} parent=59 // pred_check_branch
        %1128 = sbr.rel (%p1126) target = $region68
      $region67: #{gat_forward.6} parent=59 // pred_region
        %s1129 = smul.u32 16, %s28
        %p1130 = scmp.lt.s32.totalorder %s29, 0
        %s1131 = scalar_select %p1130, %s29, 0
        %p1132 = scmp.lt.s32.totalorder %s1129, 31
        %s1133 = scalar_select %p1132, %s1129, 31
        %s1134 = smul.addr %s1131, 32
        %s1135 = sadd.s32 %s1133, %s1134
        %s1136 = smul.addr %s1135, 8
        %s1137 = scalar_lea.vmem %s7, %s1136
      $region68: #{gat_forward.6} parent=59 // pred_fallthru
        _
      // Predicated region
      $region69: #{gat_forward.6} parent=59 // pred_check
        %p1138 = pneg %p272
      $region70: #{gat_forward.6} parent=59 // pred_check_branch
        %1140 = sbr.rel (%p1138) target = $region72
      $region71: #{gat_forward.6} parent=59 // pred_region
        %p1141 = scmp.lt.s32.totalorder %s29, 0
        %s1142 = scalar_select %p1141, %s29, 0
        %p1143 = scmp.lt.s32.totalorder %s28, 1
        %s1144 = scalar_select %p1143, %s28, 1
        %s1145 = smul.addr %s1142, 2
        %s1146 = sadd.s32 %s1144, %s1145
        %s1147 = scalar_lea.vmem %s8, %s1146
      $region72: #{gat_forward.6} parent=59 // pred_fallthru
        _
    $region60: #{gat_forward.6} parent=5 // pred_fallthru
      _
  $region6: #{gat_forward.6} parent=0 // loop_footer
    %s21 = sadd.s32 1, %s17
  $region7: #{gat_forward.6} parent=0 // loop_footer_branch
    %16 = sbr.rel target = $region3
  $region8: #{gat_forward.6} parent=0 // loop_exit
    _

// kernel: gat_forward.7
$region0: #{gat_forward.7}
  #allocation0 [shape = 'u32[]', space=smem, size = 0x4, offset = 0x4, fixed_abs, tag = 'smem constant byte address 0x4 - core index']
  #allocation1 [shape = 'u32[144,128]{1,0:T(1,128)}', space=vmem, size = 0x12000, scoped, tag = 'internal scratch']
  %s0 = inlined_call_operand.vmem [shape: f32[1,256,1], index: 0, kind: input, shape index: {}]
  %s1 = inlined_call_operand.vmem [shape: f32[1,1,256], index: 1, kind: input, shape index: {}]
  %s2 = inlined_call_operand.vmem [shape: s8[256,256], index: 2, kind: input, shape index: {}]
  %s3 = inlined_call_operand.vmem [shape: bf16[1,256,8], index: 3, kind: input, shape index: {}]
  %s4 = inlined_call_operand.vmem [shape: f32[1,256,8], index: 4, kind: output, shape index: {}]
  %s5 = sld [smem:[#allocation0]]
  $region49: #{gat_forward.7} parent=0
    _
  %s7 = ssub.s32 1, %s5
  %s8 = scalar_select 0, %s7, %s5
  loop: start=0, step=1, limit=4
  $region2: #{gat_forward.7} parent=0 // loop_pre_header
    _
  $region3: #{gat_forward.7} parent=0 // loop_header
    %s10 = sphi 0, %s14
    %p11 = scmp.ge.s32.totalorder %s10, 4
    %s17 = sphi 0, %s29
    %s18 = sphi 0, %s25
    %s19 = sphi 0, %s17
    %s20 = sphi 0, %s18
    %s21 = sphi 0, %s19
    %s22 = sphi 0, %s20
    %s34 = sphi 0, %s36
    %s37 = sphi 0, %s34
    %s38 = sphi 0, %s37
    %s54 = sphi 0, %s38
    %s60 = sphi 0, %s62
    %s63 = sphi 0, %s60
    %s64 = sphi 0, %s63
    %s80 = sphi 0, %s64
    %s86 = sphi 0, %s88
    %s89 = sphi 0, %s86
    %s90 = sphi 0, %s89
    %s106 = sphi 0, %s90
    %s112 = sphi 0, %s114
    %s115 = sphi 0, %s112
    %s116 = sphi 0, %s115
    %s132 = sphi 0, %s116
    %s140 = sphi 0, %s142
    %s143 = sphi 0, %s140
    %s144 = sphi 0, %s143
    %s160 = sphi 0, %s144
  $region4: #{gat_forward.7} parent=0 // loop_header_branch
    %13 = sbr.rel (%p11) target = $region8
  $region5: #{gat_forward.7} parent=0 // loop_body
    %s15 = ssub.s32 %s10, 1
    %s16 = ssub.s32 %s10, 2
    %s23 = sadd.s32 1, %s18
    %p24 = scmp.ge.s32.totalorder %s23, 1
    %s25 = scalar_select %p24, 0, %s23
    %s26 = sadd.s32 1, %s17
    %s27 = scalar_select %p24, %s26, %s17
    %p28 = scmp.ge.s32.totalorder %s27, 2
    %s29 = scalar_select %p28, 0, %s27
    %s30 = ssub.s32 %s18, %s25
    %s31 = ssub.s32 %s17, %s29
    %s32 = sor.u32 %s30, %s31
    %p33 = scmp.eq.s32.totalorder %s32, 0
    %s35 = sadd.s32 %s34, 1
    %s36 = scalar_select %p33, %s34, %s35
    %p39 = pneg %p33
    %p40 = scmp.eq.s32.totalorder %s10, 1
    %p41 = por %p39, %p40
    %p42 = scmp.ne.s32.totalorder %s34, %s37
    %p43 = scmp.eq.s32.totalorder %s10, 0
    %p44 = por %p42, %p43
    %p45 = scmp.ne.s32.totalorder %s34, %s37
    %p46 = scmp.eq.s32.totalorder %s15, 1
    %p47 = por %p45, %p46
    %p48 = scmp.ne.s32.totalorder %s37, %s38
    %p49 = scmp.eq.s32.totalorder %s15, 0
    %p50 = por %p48, %p49
    %p51 = scmp.ne.s32.totalorder %s37, %s38
    %p52 = scmp.eq.s32.totalorder %s16, 1
    %p53 = por %p51, %p52
    %p55 = scmp.ne.s32.totalorder %s38, %s54
    %p56 = scmp.eq.s32.totalorder %s16, 0
    %p57 = por %p55, %p56
    %s58 = ssub.s32 %s18, %s25
    %p59 = scmp.eq.s32.totalorder %s58, 0
    %s61 = sadd.s32 %s60, 1
    %s62 = scalar_select %p59, %s60, %s61
    %p65 = pneg %p59
    %p66 = scmp.eq.s32.totalorder %s10, 1
    %p67 = por %p65, %p66
    %p68 = scmp.ne.s32.totalorder %s60, %s63
    %p69 = scmp.eq.s32.totalorder %s10, 0
    %p70 = por %p68, %p69
    %p71 = scmp.ne.s32.totalorder %s60, %s63
    %p72 = scmp.eq.s32.totalorder %s15, 1
    %p73 = por %p71, %p72
    %p74 = scmp.ne.s32.totalorder %s63, %s64
    %p75 = scmp.eq.s32.totalorder %s15, 0
    %p76 = por %p74, %p75
    %p77 = scmp.ne.s32.totalorder %s63, %s64
    %p78 = scmp.eq.s32.totalorder %s16, 1
    %p79 = por %p77, %p78
    %p81 = scmp.ne.s32.totalorder %s64, %s80
    %p82 = scmp.eq.s32.totalorder %s16, 0
    %p83 = por %p81, %p82
    %s84 = ssub.s32 %s17, %s29
    %p85 = scmp.eq.s32.totalorder %s84, 0
    %s87 = sadd.s32 %s86, 1
    %s88 = scalar_select %p85, %s86, %s87
    %p91 = pneg %p85
    %p92 = scmp.eq.s32.totalorder %s10, 1
    %p93 = por %p91, %p92
    %p94 = scmp.ne.s32.totalorder %s86, %s89
    %p95 = scmp.eq.s32.totalorder %s10, 0
    %p96 = por %p94, %p95
    %p97 = scmp.ne.s32.totalorder %s86, %s89
    %p98 = scmp.eq.s32.totalorder %s15, 1
    %p99 = por %p97, %p98
    %p100 = scmp.ne.s32.totalorder %s89, %s90
    %p101 = scmp.eq.s32.totalorder %s15, 0
    %p102 = por %p100, %p101
    %p103 = scmp.ne.s32.totalorder %s89, %s90
    %p104 = scmp.eq.s32.totalorder %s16, 1
    %p105 = por %p103, %p104
    %p107 = scmp.ne.s32.totalorder %s90, %s106
    %p108 = scmp.eq.s32.totalorder %s16, 0
    %p109 = por %p107, %p108
    %s110 = ssub.s32 %s18, %s25
    %p111 = scmp.eq.s32.totalorder %s110, 0
    %s113 = sadd.s32 %s112, 1
    %s114 = scalar_select %p111, %s112, %s113
    %p117 = pneg %p111
    %p118 = scmp.eq.s32.totalorder %s10, 1
    %p119 = por %p117, %p118
    %p120 = scmp.ne.s32.totalorder %s112, %s115
    %p121 = scmp.eq.s32.totalorder %s10, 0
    %p122 = por %p120, %p121
    %p123 = scmp.ne.s32.totalorder %s112, %s115
    %p124 = scmp.eq.s32.totalorder %s15, 1
    %p125 = por %p123, %p124
    %p126 = scmp.ne.s32.totalorder %s115, %s116
    %p127 = scmp.eq.s32.totalorder %s15, 0
    %p128 = por %p126, %p127
    %p129 = scmp.ne.s32.totalorder %s115, %s116
    %p130 = scmp.eq.s32.totalorder %s16, 1
    %p131 = por %p129, %p130
    %p133 = scmp.ne.s32.totalorder %s116, %s132
    %p134 = scmp.eq.s32.totalorder %s16, 0
    %p135 = por %p133, %p134
    %s136 = ssub.s32 %s18, %s25
    %s137 = ssub.s32 %s17, %s29
    %s138 = sor.u32 %s136, %s137
    %p139 = scmp.eq.s32.totalorder %s138, 0
    %s141 = sadd.s32 %s140, 1
    %s142 = scalar_select %p139, %s140, %s141
    %p145 = pneg %p139
    %p146 = scmp.eq.s32.totalorder %s10, 1
    %p147 = por %p145, %p146
    %p148 = scmp.ne.s32.totalorder %s140, %s143
    %p149 = scmp.eq.s32.totalorder %s10, 0
    %p150 = por %p148, %p149
    %p151 = scmp.ne.s32.totalorder %s140, %s143
    %p152 = scmp.eq.s32.totalorder %s15, 1
    %p153 = por %p151, %p152
    %p154 = scmp.ne.s32.totalorder %s143, %s144
    %p155 = scmp.eq.s32.totalorder %s15, 0
    %p156 = por %p154, %p155
    %p157 = scmp.ne.s32.totalorder %s143, %s144
    %p158 = scmp.eq.s32.totalorder %s16, 1
    %p159 = por %p157, %p158
    %p161 = scmp.ne.s32.totalorder %s144, %s160
    %p162 = scmp.eq.s32.totalorder %s16, 0
    %p163 = por %p161, %p162
    %p164 = scmp.le.s32.totalorder 1, %s10
    %p165 = scmp.lt.s32.totalorder %s10, 3
    %p166 = pnand %p164, %p165
    %p167 = pneg %p166
    // Predicated region
    $region9: #{gat_forward.7} parent=5 // pred_check
      _
    $region10: #{gat_forward.7} parent=5 // pred_check_branch
      %169 = sbr.rel (%p166) target = $region12
    $region11: #{gat_forward.7} parent=5 // pred_region
      %s170 = ssub.s32 %s10, 1
      // Predicated region
      $region13: #{gat_forward.7} parent=11 // pred_check
        %p171 = pneg %p76
      $region14: #{gat_forward.7} parent=11 // pred_check_branch
        %173 = sbr.rel (%p171) target = $region16
      $region15: #{gat_forward.7} parent=11 // pred_region
        %p174 = scmp.lt.s32.totalorder %s20, 0
        %s175 = scalar_select %p174, %s20, 0
        %s176 = smul.addr %s175, 2
        %s177 = scalar_lea.vmem %s1, %s176
      $region16: #{gat_forward.7} parent=11 // pred_fallthru
        _
      // Predicated region
      $region17: #{gat_forward.7} parent=11 // pred_check
        %p178 = pneg %p128
      $region18: #{gat_forward.7} parent=11 // pred_check_branch
        %180 = sbr.rel (%p178) target = $region20
      $region19: #{gat_forward.7} parent=11 // pred_region
        %p181 = scmp.lt.s32.totalorder %s20, 0
        %s182 = scalar_select %p181, %s20, 0
        %s183 = smul.addr %s182, 32
        %s184 = smul.addr %s183, 4
        %s185 = scalar_lea.vmem %s3, %s184
      $region20: #{gat_forward.7} parent=11 // pred_fallthru
        _
    $region12: #{gat_forward.7} parent=5 // pred_fallthru
      _
    %p186 = scmp.lt.s32.totalorder %s10, 2
    // Predicated region
    $region21: #{gat_forward.7} parent=5 // pred_check
      %p187 = pneg %p186
    $region22: #{gat_forward.7} parent=5 // pred_check_branch
      %189 = sbr.rel (%p187) target = $region24
    $region23: #{gat_forward.7} parent=5 // pred_region
      // Predicated region
      $region25: #{gat_forward.7} parent=23 // pred_check
        %p190 = pneg %p44
      $region26: #{gat_forward.7} parent=23 // pred_check_branch
        %192 = sbr.rel (%p190) target = $region28
      $region27: #{gat_forward.7} parent=23 // pred_region
        %s193 = smul.u32 16, %s17
        %p194 = scmp.lt.s32.totalorder %s18, 0
        %s195 = scalar_select %p194, %s18, 0
        %p196 = scmp.lt.s32.totalorder %s193, 31
        %s197 = scalar_select %p196, %s193, 31
        %s198 = smul.addr %s195, 32
        %s199 = sadd.s32 %s197, %s198
        %s200 = smul.addr %s199, 8
        %s201 = scalar_lea.vmem %s0, %s200
        %s202 = smul.u32 16, %s17
      $region28: #{gat_forward.7} parent=23 // pred_fallthru
        _
      // Predicated region
      $region29: #{gat_forward.7} parent=23 // pred_check
        %p203 = pneg %p96
      $region30: #{gat_forward.7} parent=23 // pred_check_branch
        %205 = sbr.rel (%p203) target = $region32
      $region31: #{gat_forward.7} parent=23 // pred_region
        %s206 = smul.u32 4, %s17
        %p207 = scmp.lt.s32.totalorder %s206, 7
        %s208 = scalar_select %p207, %s206, 7
        %s209 = smul.addr %s208, 2
        %s210 = smul.addr %s209, 8
        %s211 = scalar_lea.vmem %s2, %s210
        %s212 = smul.u32 4, %s17
      $region32: #{gat_forward.7} parent=23 // pred_fallthru
        _
    $region24: #{gat_forward.7} parent=5 // pred_fallthru
      _
    %p213 = scmp.le.s32.totalorder 1, %s10
    %p214 = scmp.lt.s32.totalorder %s10, 3
    %p215 = pnand %p213, %p214
    %p216 = pneg %p215
    // Predicated region
    $region33: #{gat_forward.7} parent=5 // pred_check
      _
    $region34: #{gat_forward.7} parent=5 // pred_check_branch
      %218 = sbr.rel (%p215) target = $region36
    $region35: #{gat_forward.7} parent=5 // pred_region
      %s219 = ssub.s32 %s10, 1
      %s220 = smul.u32 16, %s19
      %p221 = scmp.lt.s32.totalorder %s20, 0
      %s222 = scalar_select %p221, %s20, 0
      %p223 = scmp.lt.s32.totalorder %s220, 31
      %s224 = scalar_select %p223, %s220, 31
      %s225 = smul.addr %s222, 32
      %s226 = sadd.s32 %s224, %s225
      %s227 = smul.addr %s226, 8
      %s228 = scalar_lea.vmem %s0, %s227
      %p229 = pneg %p50
      %p230 = pneg %p47
      %p231 = scmp.lt.s32.totalorder %s20, 0
      %s232 = scalar_select %p231, %s20, 0
      %s233 = smul.addr %s232, 2
      %s234 = scalar_lea.vmem %s1, %s233
      %p235 = pneg %p76
      %p236 = pneg %p73
      %s237 = smul.u32 4, %s19
      %p238 = scmp.lt.s32.totalorder %s237, 7
      %s239 = scalar_select %p238, %s237, 7
      %s240 = smul.addr %s239, 2
      %s241 = smul.addr %s240, 8
      %s242 = scalar_lea.vmem %s2, %s241
      %p243 = pneg %p102
      %p244 = pneg %p99
      %p245 = scmp.lt.s32.totalorder %s20, 0
      %s246 = scalar_select %p245, %s20, 0
      %s247 = smul.addr %s246, 32
      %s248 = smul.addr %s247, 4
      %s249 = scalar_lea.vmem %s3, %s248
      %p250 = pneg %p128
      %p251 = pneg %p125
      %p252 = pneg %p156
      %p253 = pneg %p153
      %s254 = smul.u32 16, %s19
      %p255 = scmp.lt.s32.totalorder %s20, 0
      %s256 = scalar_select %p255, %s20, 0
      %p257 = scmp.lt.s32.totalorder %s254, 31
      %s258 = scalar_select %p257, %s254, 31
      %s259 = smul.addr %s256, 32
      %s260 = sadd.s32 %s258, %s259
      %s261 = smul.addr %s260, 8
      %s262 = scalar_lea.vmem %s4, %s261
      %s263 = smul.u32 16, %s19
      %p264 = scmp.lt.s32.totalorder %s20, 0
      %s265 = scalar_select %p264, %s20, 0
      %p266 = scmp.lt.s32.totalorder %s263, 31
      %s267 = scalar_select %p266, %s263, 31
      %s268 = smul.addr %s265, 32
      %s269 = sadd.s32 %s267, %s268
      %s270 = smul.addr %s269, 8
      %s271 = scalar_lea.vmem %s0, %s270
      %s272 = smul.u32 16, %s19
      %p273 = scmp.lt.s32.totalorder %s20, 0
      %s274 = scalar_select %p273, %s20, 0
      %s275 = smul.addr %s274, 2
      %s276 = scalar_lea.vmem %s1, %s275
      %s277 = smul.u32 4, %s19
      %p278 = scmp.lt.s32.totalorder %s277, 7
      %s279 = scalar_select %p278, %s277, 7
      %s280 = smul.addr %s279, 2
      %s281 = smul.addr %s280, 8
      %s282 = scalar_lea.vmem %s2, %s281
      %s283 = smul.u32 4, %s19
      %p284 = scmp.lt.s32.totalorder %s20, 0
      %s285 = scalar_select %p284, %s20, 0
      %s286 = smul.addr %s285, 32
      %s287 = smul.addr %s286, 4
      %s288 = scalar_lea.vmem %s3, %s287
      %s289 = smul.u32 16, %s19
      %p290 = scmp.lt.s32.totalorder %s20, 0
      %s291 = scalar_select %p290, %s20, 0
      %p292 = scmp.lt.s32.totalorder %s289, 31
      %s293 = scalar_select %p292, %s289, 31
      %s294 = smul.addr %s291, 32
      %s295 = sadd.s32 %s293, %s294
      %s296 = smul.addr %s295, 8
      %s297 = scalar_lea.vmem %s4, %s296
      %s298 = smul.u32 16, %s19
      %v302 = vld [vmem:[%s271] sm:$0xff]
      %v303 = vld [vmem:[%s271 + $0x8] sm:$0xff]
      %v304 = vld [vmem:[%s271 + $0x10] sm:$0xff]
      %v305 = vld [vmem:[%s271 + $0x18] sm:$0xff]
      %v306 = vld [vmem:[%s271 + $0x20] sm:$0xff]
      %v307 = vld [vmem:[%s271 + $0x28] sm:$0xff]
      %v308 = vld [vmem:[%s271 + $0x30] sm:$0xff]
      %v309 = vld [vmem:[%s271 + $0x38] sm:$0xff]
      %v310 = vld [vmem:[%s271 + $0x40] sm:$0xff]
      %v311 = vld [vmem:[%s271 + $0x48] sm:$0xff]
      %v312 = vld [vmem:[%s271 + $0x50] sm:$0xff]
      %v313 = vld [vmem:[%s271 + $0x58] sm:$0xff]
      %v314 = vld [vmem:[%s271 + $0x60] sm:$0xff]
      %v315 = vld [vmem:[%s271 + $0x68] sm:$0xff]
      %v316 = vld [vmem:[%s271 + $0x70] sm:$0xff]
      %v317 = vld [vmem:[%s271 + $0x78] sm:$0xff]
      %v318 = vld [vmem:[%s276] sm:$0x3]
      %320 = vset.pattern.permute.xlu0 0
      %321 = vperm.xlu0 %320, %v302
      %v322 = vpop.permute.xlu0 %321
      %325 = vset.pattern.permute.xlu0 0
      %326 = vperm.xlu0 %325, %v303
      %v327 = vpop.permute.xlu0 %326
      %330 = vset.pattern.permute.xlu0 0
      %331 = vperm.xlu0 %330, %v304
      %v332 = vpop.permute.xlu0 %331
      %335 = vset.pattern.permute.xlu0 0
      %336 = vperm.xlu0 %335, %v305
      %v337 = vpop.permute.xlu0 %336
      %340 = vset.pattern.permute.xlu0 0
      %341 = vperm.xlu0 %340, %v306
      %v342 = vpop.permute.xlu0 %341
      %345 = vset.pattern.permute.xlu0 0
      %346 = vperm.xlu0 %345, %v307
      %v347 = vpop.permute.xlu0 %346
      %350 = vset.pattern.permute.xlu0 0
      %351 = vperm.xlu0 %350, %v308
      %v352 = vpop.permute.xlu0 %351
      %355 = vset.pattern.permute.xlu0 0
      %356 = vperm.xlu0 %355, %v309
      %v357 = vpop.permute.xlu0 %356
      %360 = vset.pattern.permute.xlu0 0
      %361 = vperm.xlu0 %360, %v310
      %v362 = vpop.permute.xlu0 %361
      %365 = vset.pattern.permute.xlu0 0
      %366 = vperm.xlu0 %365, %v311
      %v367 = vpop.permute.xlu0 %366
      %370 = vset.pattern.permute.xlu0 0
      %371 = vperm.xlu0 %370, %v312
      %v372 = vpop.permute.xlu0 %371
      %375 = vset.pattern.permute.xlu0 0
      %376 = vperm.xlu0 %375, %v313
      %v377 = vpop.permute.xlu0 %376
      %380 = vset.pattern.permute.xlu0 0
      %381 = vperm.xlu0 %380, %v314
      %v382 = vpop.permute.xlu0 %381
      %385 = vset.pattern.permute.xlu0 0
      %386 = vperm.xlu0 %385, %v315
      %v387 = vpop.permute.xlu0 %386
      %390 = vset.pattern.permute.xlu0 0
      %391 = vperm.xlu0 %390, %v316
      %v392 = vpop.permute.xlu0 %391
      %395 = vset.pattern.permute.xlu0 0
      %396 = vperm.xlu0 %395, %v317
      %v397 = vpop.permute.xlu0 %396
      %v400 = vlaneseq
      %v401 = vshrl.u32 %v400, 7
      %v402 = vsub.s32 0, %v401
      %v403 = vrot.slane %v318, %v402
      %v404 = vlaneseq
      %v405 = vshrl.u32 %v404, 7
      %v406 = vsub.s32 1, %v405
      %v407 = vrot.slane %v318, %v406
      %v410 = vadd.f32 %v322, %v403
      %v411 = vadd.f32 %v322, %v407
      %v412 = vadd.f32 %v327, %v403
      %v413 = vadd.f32 %v327, %v407
      %v414 = vadd.f32 %v332, %v403
      %v415 = vadd.f32 %v332, %v407
      %v416 = vadd.f32 %v337, %v403
      %v417 = vadd.f32 %v337, %v407
      %v418 = vadd.f32 %v342, %v403
      %v419 = vadd.f32 %v342, %v407
      %v420 = vadd.f32 %v347, %v403
      %v421 = vadd.f32 %v347, %v407
      %v422 = vadd.f32 %v352, %v403
      %v423 = vadd.f32 %v352, %v407
      %v424 = vadd.f32 %v357, %v403
      %v425 = vadd.f32 %v357, %v407
      %v426 = vadd.f32 %v362, %v403
      %v427 = vadd.f32 %v362, %v407
      %v428 = vadd.f32 %v367, %v403
      %v429 = vadd.f32 %v367, %v407
      %v430 = vadd.f32 %v372, %v403
      %v431 = vadd.f32 %v372, %v407
      %v432 = vadd.f32 %v377, %v403
      %v433 = vadd.f32 %v377, %v407
      %v434 = vadd.f32 %v382, %v403
      %v435 = vadd.f32 %v382, %v407
      %v436 = vadd.f32 %v387, %v403
      %v437 = vadd.f32 %v387, %v407
      %v438 = vadd.f32 %v392, %v403
      %v439 = vadd.f32 %v392, %v407
      %v440 = vadd.f32 %v397, %v403
      %v441 = vadd.f32 %v397, %v407
      %v442 = vmul.f32 %v410, 0.2
      %v443 = vmul.f32 %v411, 0.2
      %v444 = vmul.f32 %v412, 0.2
      %v445 = vmul.f32 %v413, 0.2
      %v446 = vmul.f32 %v414, 0.2
      %v447 = vmul.f32 %v415, 0.2
      %v448 = vmul.f32 %v416, 0.2
      %v449 = vmul.f32 %v417, 0.2
      %v450 = vmul.f32 %v418, 0.2
      %v451 = vmul.f32 %v419, 0.2
      %v452 = vmul.f32 %v420, 0.2
      %v453 = vmul.f32 %v421, 0.2
      %v454 = vmul.f32 %v422, 0.2
      %v455 = vmul.f32 %v423, 0.2
      %v456 = vmul.f32 %v424, 0.2
      %v457 = vmul.f32 %v425, 0.2
      %v458 = vmul.f32 %v426, 0.2
      %v459 = vmul.f32 %v427, 0.2
      %v460 = vmul.f32 %v428, 0.2
      %v461 = vmul.f32 %v429, 0.2
      %v462 = vmul.f32 %v430, 0.2
      %v463 = vmul.f32 %v431, 0.2
      %v464 = vmul.f32 %v432, 0.2
      %v465 = vmul.f32 %v433, 0.2
      %v466 = vmul.f32 %v434, 0.2
      %v467 = vmul.f32 %v435, 0.2
      %v468 = vmul.f32 %v436, 0.2
      %v469 = vmul.f32 %v437, 0.2
      %v470 = vmul.f32 %v438, 0.2
      %v471 = vmul.f32 %v439, 0.2
      %v472 = vmul.f32 %v440, 0.2
      %v473 = vmul.f32 %v441, 0.2
      %v474 = vmax.f32 %v410, %v442
      %v475 = vmax.f32 %v411, %v443
      %v476 = vmax.f32 %v412, %v444
      %v477 = vmax.f32 %v413, %v445
      %v478 = vmax.f32 %v414, %v446
      %v479 = vmax.f32 %v415, %v447
      %v480 = vmax.f32 %v416, %v448
      %v481 = vmax.f32 %v417, %v449
      %v482 = vmax.f32 %v418, %v450
      %v483 = vmax.f32 %v419, %v451
      %v484 = vmax.f32 %v420, %v452
      %v485 = vmax.f32 %v421, %v453
      %v486 = vmax.f32 %v422, %v454
      %v487 = vmax.f32 %v423, %v455
      %v488 = vmax.f32 %v424, %v456
      %v489 = vmax.f32 %v425, %v457
      %v490 = vmax.f32 %v426, %v458
      %v491 = vmax.f32 %v427, %v459
      %v492 = vmax.f32 %v428, %v460
      %v493 = vmax.f32 %v429, %v461
      %v494 = vmax.f32 %v430, %v462
      %v495 = vmax.f32 %v431, %v463
      %v496 = vmax.f32 %v432, %v464
      %v497 = vmax.f32 %v433, %v465
      %v498 = vmax.f32 %v434, %v466
      %v499 = vmax.f32 %v435, %v467
      %v500 = vmax.f32 %v436, %v468
      %v501 = vmax.f32 %v437, %v469
      %v502 = vmax.f32 %v438, %v470
      %v503 = vmax.f32 %v439, %v471
      %v504 = vmax.f32 %v440, %v472
      %v505 = vmax.f32 %v441, %v473
      %v506 = vld [vmem:[%s282] sm:$0xff]
      %v507 = vld [vmem:[%s282 + $0x8] sm:$0xff]
      %v508 = vld [vmem:[%s282 + $0x10] sm:$0xff]
      %v509 = vld [vmem:[%s282 + $0x18] sm:$0xff]
      %v510 = vld [vmem:[%s282 + $0x20] sm:$0xff]
      %v511 = vld [vmem:[%s282 + $0x28] sm:$0xff]
      %v512 = vld [vmem:[%s282 + $0x30] sm:$0xff]
      %v513 = vld [vmem:[%s282 + $0x38] sm:$0xff]
      %vm514 = vnez %v506
      %vm515 = vnez %v507
      %vm516 = vnez %v508
      %vm517 = vnez %v509
      %vm518 = vnez %v510
      %vm519 = vnez %v511
      %vm520 = vnez %v512
      %vm521 = vnez %v513
      %v522 = vsel %vm514, 16843009, 0
      %v523 = vsel %vm515, 16843009, 0
      %v524 = vsel %vm516, 16843009, 0
      %v525 = vsel %vm517, 16843009, 0
      %v526 = vsel %vm518, 16843009, 0
      %v527 = vsel %vm519, 16843009, 0
      %v528 = vsel %vm520, 16843009, 0
      %v529 = vsel %vm521, 16843009, 0
      %v530 = vunpack.c.0.s8 %v522
      %v531 = vunpack.c.0.s8 %v523
      %v532 = vunpack.c.1.s8 %v522
      %v533 = vunpack.c.1.s8 %v523
      %v534 = vunpack.c.2.s8 %v522
      %v535 = vunpack.c.2.s8 %v523
      %v536 = vunpack.c.3.s8 %v522
      %v537 = vunpack.c.3.s8 %v523
      %v538 = vunpack.c.0.s8 %v524
      %v539 = vunpack.c.0.s8 %v525
      %v540 = vunpack.c.1.s8 %v524
      %v541 = vunpack.c.1.s8 %v525
      %v542 = vunpack.c.2.s8 %v524
      %v543 = vunpack.c.2.s8 %v525
      %v544 = vunpack.c.3.s8 %v524
      %v545 = vunpack.c.3.s8 %v525
      %v546 = vunpack.c.0.s8 %v526
      %v547 = vunpack.c.0.s8 %v527
      %v548 = vunpack.c.1.s8 %v526
      %v549 = vunpack.c.1.s8 %v527
      %v550 = vunpack.c.2.s8 %v526
      %v551 = vunpack.c.2.s8 %v527
      %v552 = vunpack.c.3.s8 %v526
      %v553 = vunpack.c.3.s8 %v527
      %v554 = vunpack.c.0.s8 %v528
      %v555 = vunpack.c.0.s8 %v529
      %v556 = vunpack.c.1.s8 %v528
      %v557 = vunpack.c.1.s8 %v529
      %v558 = vunpack.c.2.s8 %v528
      %v559 = vunpack.c.2.s8 %v529
      %v560 = vunpack.c.3.s8 %v528
      %v561 = vunpack.c.3.s8 %v529
      %v562 = vpack.c.b16 %v531, %v530
      %v563 = vpack.c.b8 %v562, %v562
      %v564 = vpack.c.b16 %v533, %v532
      %v565 = vpack.c.b8 %v564, %v564
      %v566 = vpack.c.b16 %v535, %v534
      %v567 = vpack.c.b8 %v566, %v566
      %v568 = vpack.c.b16 %v537, %v536
      %v569 = vpack.c.b8 %v568, %v568
      %v570 = vpack.c.b16 %v539, %v538
      %v571 = vpack.c.b8 %v570, %v570
      %v572 = vpack.c.b16 %v541, %v540
      %v573 = vpack.c.b8 %v572, %v572
      %v574 = vpack.c.b16 %v543, %v542
      %v575 = vpack.c.b8 %v574, %v574
      %v576 = vpack.c.b16 %v545, %v544
      %v577 = vpack.c.b8 %v576, %v576
      %v578 = vpack.c.b16 %v547, %v546
      %v579 = vpack.c.b8 %v578, %v578
      %v580 = vpack.c.b16 %v549, %v548
      %v581 = vpack.c.b8 %v580, %v580
      %v582 = vpack.c.b16 %v551, %v550
      %v583 = vpack.c.b8 %v582, %v582
      %v584 = vpack.c.b16 %v553, %v552
      %v585 = vpack.c.b8 %v584, %v584
      %v586 = vpack.c.b16 %v555, %v554
      %v587 = vpack.c.b8 %v586, %v586
      %v588 = vpack.c.b16 %v557, %v556
      %v589 = vpack.c.b8 %v588, %v588
      %v590 = vpack.c.b16 %v559, %v558
      %v591 = vpack.c.b8 %v590, %v590
      %v592 = vpack.c.b16 %v561, %v560
      %v593 = vpack.c.b8 %v592, %v592
      %vm594 = vnez %v563
      %vm595 = vnez %v565
      %vm596 = vnez %v567
      %vm597 = vnez %v569
      %vm598 = vnez %v571
      %vm599 = vnez %v573
      %vm600 = vnez %v575
      %vm601 = vnez %v577
      %vm602 = vnez %v579
      %vm603 = vnez %v581
      %vm604 = vnez %v583
      %vm605 = vnez %v585
      %vm606 = vnez %v587
      %vm607 = vnez %v589
      %vm608 = vnez %v591
      %vm609 = vnez %v593
      %v610 = vsel %vm594, 16843009, 0
      %v611 = vsel %vm595, 16843009, 0
      %v612 = vsel %vm596, 16843009, 0
      %v613 = vsel %vm597, 16843009, 0
      %v614 = vsel %vm598, 16843009, 0
      %v615 = vsel %vm599, 16843009, 0
      %v616 = vsel %vm600, 16843009, 0
      %v617 = vsel %vm601, 16843009, 0
      %v618 = vsel %vm602, 16843009, 0
      %v619 = vsel %vm603, 16843009, 0
      %v620 = vsel %vm604, 16843009, 0
      %v621 = vsel %vm605, 16843009, 0
      %v622 = vsel %vm606, 16843009, 0
      %v623 = vsel %vm607, 16843009, 0
      %v624 = vsel %vm608, 16843009, 0
      %v625 = vsel %vm609, 16843009, 0
      %v626 = vunpack.c.0.s8 %v610
      %v627 = vunpack.c.1.s8 %v610
      %v628 = vunpack.c.0.s8 %v611
      %v629 = vunpack.c.1.s8 %v611
      %v630 = vunpack.c.0.s8 %v612
      %v631 = vunpack.c.1.s8 %v612
      %v632 = vunpack.c.0.s8 %v613
      %v633 = vunpack.c.1.s8 %v613
      %v634 = vunpack.c.0.s8 %v614
      %v635 = vunpack.c.1.s8 %v614
      %v636 = vunpack.c.0.s8 %v615
      %v637 = vunpack.c.1.s8 %v615
      %v638 = vunpack.c.0.s8 %v616
      %v639 = vunpack.c.1.s8 %v616
      %v640 = vunpack.c.0.s8 %v617
      %v641 = vunpack.c.1.s8 %v617
      %v642 = vunpack.c.0.s8 %v618
      %v643 = vunpack.c.1.s8 %v618
      %v644 = vunpack.c.0.s8 %v619
      %v645 = vunpack.c.1.s8 %v619
      %v646 = vunpack.c.0.s8 %v620
      %v647 = vunpack.c.1.s8 %v620
      %v648 = vunpack.c.0.s8 %v621
      %v649 = vunpack.c.1.s8 %v621
      %v650 = vunpack.c.0.s8 %v622
      %v651 = vunpack.c.1.s8 %v622
      %v652 = vunpack.c.0.s8 %v623
      %v653 = vunpack.c.1.s8 %v623
      %v654 = vunpack.c.0.s8 %v624
      %v655 = vunpack.c.1.s8 %v624
      %v656 = vunpack.c.0.s8 %v625
      %v657 = vunpack.c.1.s8 %v625
      %vm658 = vcmp.ne.s32.totalorder %v626, 0
      %vm659 = vcmp.ne.s32.totalorder %v627, 0
      %vm660 = vcmp.ne.s32.totalorder %v628, 0
      %vm661 = vcmp.ne.s32.totalorder %v629, 0
      %vm662 = vcmp.ne.s32.totalorder %v630, 0
      %vm663 = vcmp.ne.s32.totalorder %v631, 0
      %vm664 = vcmp.ne.s32.totalorder %v632, 0
      %vm665 = vcmp.ne.s32.totalorder %v633, 0
      %vm666 = vcmp.ne.s32.totalorder %v634, 0
      %vm667 = vcmp.ne.s32.totalorder %v635, 0
      %vm668 = vcmp.ne.s32.totalorder %v636, 0
      %vm669 = vcmp.ne.s32.totalorder %v637, 0
      %vm670 = vcmp.ne.s32.totalorder %v638, 0
      %vm671 = vcmp.ne.s32.totalorder %v639, 0
      %vm672 = vcmp.ne.s32.totalorder %v640, 0
      %vm673 = vcmp.ne.s32.totalorder %v641, 0
      %vm674 = vcmp.ne.s32.totalorder %v642, 0
      %vm675 = vcmp.ne.s32.totalorder %v643, 0
      %vm676 = vcmp.ne.s32.totalorder %v644, 0
      %vm677 = vcmp.ne.s32.totalorder %v645, 0
      %vm678 = vcmp.ne.s32.totalorder %v646, 0
      %vm679 = vcmp.ne.s32.totalorder %v647, 0
      %vm680 = vcmp.ne.s32.totalorder %v648, 0
      %vm681 = vcmp.ne.s32.totalorder %v649, 0
      %vm682 = vcmp.ne.s32.totalorder %v650, 0
      %vm683 = vcmp.ne.s32.totalorder %v651, 0
      %vm684 = vcmp.ne.s32.totalorder %v652, 0
      %vm685 = vcmp.ne.s32.totalorder %v653, 0
      %vm686 = vcmp.ne.s32.totalorder %v654, 0
      %vm687 = vcmp.ne.s32.totalorder %v655, 0
      %vm688 = vcmp.ne.s32.totalorder %v656, 0
      %vm689 = vcmp.ne.s32.totalorder %v657, 0
      %v690 = vsel %vm658, %v474, -9e+15
      %v691 = vsel %vm659, %v475, -9e+15
      %v692 = vsel %vm660, %v476, -9e+15
      %v693 = vsel %vm661, %v477, -9e+15
      %v694 = vsel %vm662, %v478, -9e+15
      %v695 = vsel %vm663, %v479, -9e+15
      %v696 = vsel %vm664, %v480, -9e+15
      %v697 = vsel %vm665, %v481, -9e+15
      %v698 = vsel %vm666, %v482, -9e+15
      %v699 = vsel %vm667, %v483, -9e+15
      %v700 = vsel %vm668, %v484, -9e+15
      %v701 = vsel %vm669, %v485, -9e+15
      %v702 = vsel %vm670, %v486, -9e+15
      %v703 = vsel %vm671, %v487, -9e+15
      %v704 = vsel %vm672, %v488, -9e+15
      %v705 = vsel %vm673, %v489, -9e+15
      %v706 = vsel %vm674, %v490, -9e+15
      %v707 = vsel %vm675, %v491, -9e+15
      %v708 = vsel %vm676, %v492, -9e+15
      %v709 = vsel %vm677, %v493, -9e+15
      %v710 = vsel %vm678, %v494, -9e+15
      %v711 = vsel %vm679, %v495, -9e+15
      %v712 = vsel %vm680, %v496, -9e+15
      %v713 = vsel %vm681, %v497, -9e+15
      %v714 = vsel %vm682, %v498, -9e+15
      %v715 = vsel %vm683, %v499, -9e+15
      %v716 = vsel %vm684, %v500, -9e+15
      %v717 = vsel %vm685, %v501, -9e+15
      %v718 = vsel %vm686, %v502, -9e+15
      %v719 = vsel %vm687, %v503, -9e+15
      %v720 = vsel %vm688, %v504, -9e+15
      %v721 = vsel %vm689, %v505, -9e+15
      %v722 = vmax.f32 %v690, %v691
      %723 = vmax.xlane.f32.xlu0 %v722
      %v724 = vpop.xlane.xlu0 %723
      %v725 = vmax.f32 %v692, %v693
      %726 = vmax.xlane.f32.xlu0 %v725
      %v727 = vpop.xlane.xlu0 %726
      %v728 = vmax.f32 %v694, %v695
      %729 = vmax.xlane.f32.xlu0 %v728
      %v730 = vpop.xlane.xlu0 %729
      %v731 = vmax.f32 %v696, %v697
      %732 = vmax.xlane.f32.xlu0 %v731
      %v733 = vpop.xlane.xlu0 %732
      %v734 = vmax.f32 %v698, %v699
      %735 = vmax.xlane.f32.xlu0 %v734
      %v736 = vpop.xlane.xlu0 %735
      %v737 = vmax.f32 %v700, %v701
      %738 = vmax.xlane.f32.xlu0 %v737
      %v739 = vpop.xlane.xlu0 %738
      %v740 = vmax.f32 %v702, %v703
      %741 = vmax.xlane.f32.xlu0 %v740
      %v742 = vpop.xlane.xlu0 %741
      %v743 = vmax.f32 %v704, %v705
      %744 = vmax.xlane.f32.xlu0 %v743
      %v745 = vpop.xlane.xlu0 %744
      %v746 = vmax.f32 %v706, %v707
      %747 = vmax.xlane.f32.xlu0 %v746
      %v748 = vpop.xlane.xlu0 %747
      %v749 = vmax.f32 %v708, %v709
      %750 = vmax.xlane.f32.xlu0 %v749
      %v751 = vpop.xlane.xlu0 %750
      %v752 = vmax.f32 %v710, %v711
      %753 = vmax.xlane.f32.xlu0 %v752
      %v754 = vpop.xlane.xlu0 %753
      %v755 = vmax.f32 %v712, %v713
      %756 = vmax.xlane.f32.xlu0 %v755
      %v757 = vpop.xlane.xlu0 %756
      %v758 = vmax.f32 %v714, %v715
      %759 = vmax.xlane.f32.xlu0 %v758
      %v760 = vpop.xlane.xlu0 %759
      %v761 = vmax.f32 %v716, %v717
      %762 = vmax.xlane.f32.xlu0 %v761
      %v763 = vpop.xlane.xlu0 %762
      %v764 = vmax.f32 %v718, %v719
      %765 = vmax.xlane.f32.xlu0 %v764
      %v766 = vpop.xlane.xlu0 %765
      %v767 = vmax.f32 %v720, %v721
      %768 = vmax.xlane.f32.xlu0 %v767
      %v769 = vpop.xlane.xlu0 %768
      %v770 = vsub.f32 %v690, %v724
      %v771 = vsub.f32 %v691, %v724
      %v772 = vsub.f32 %v692, %v727
      %v773 = vsub.f32 %v693, %v727
      %v774 = vsub.f32 %v694, %v730
      %v775 = vsub.f32 %v695, %v730
      %v776 = vsub.f32 %v696, %v733
      %v777 = vsub.f32 %v697, %v733
      %v778 = vsub.f32 %v698, %v736
      %v779 = vsub.f32 %v699, %v736
      %v780 = vsub.f32 %v700, %v739
      %v781 = vsub.f32 %v701, %v739
      %v782 = vsub.f32 %v702, %v742
      %v783 = vsub.f32 %v703, %v742
      %v784 = vsub.f32 %v704, %v745
      %v785 = vsub.f32 %v705, %v745
      %v786 = vsub.f32 %v706, %v748
      %v787 = vsub.f32 %v707, %v748
      %v788 = vsub.f32 %v708, %v751
      %v789 = vsub.f32 %v709, %v751
      %v790 = vsub.f32 %v710, %v754
      %v791 = vsub.f32 %v711, %v754
      %v792 = vsub.f32 %v712, %v757
      %v793 = vsub.f32 %v713, %v757
      %v794 = vsub.f32 %v714, %v760
      %v795 = vsub.f32 %v715, %v760
      %v796 = vsub.f32 %v716, %v763
      %v797 = vsub.f32 %v717, %v763
      %v798 = vsub.f32 %v718, %v766
      %v799 = vsub.f32 %v719, %v766
      %v800 = vsub.f32 %v720, %v769
      %v801 = vsub.f32 %v721, %v769
      %v802 = vmul.f32 %v770, 1.442695
      %v803 = vpow.pop %v802
      %v804 = vmul.f32 %v771, 1.442695
      %v805 = vpow.pop %v804
      %v806 = vmul.f32 %v772, 1.442695
      %v807 = vpow.pop %v806
      %v808 = vmul.f32 %v773, 1.442695
      %v809 = vpow.pop %v808
      %v810 = vmul.f32 %v774, 1.442695
      %v811 = vpow.pop %v810
      %v812 = vmul.f32 %v775, 1.442695
      %v813 = vpow.pop %v812
      %v814 = vmul.f32 %v776, 1.442695
      %v815 = vpow.pop %v814
      %v816 = vmul.f32 %v777, 1.442695
      %v817 = vpow.pop %v816
      %v818 = vmul.f32 %v778, 1.442695
      %v819 = vpow.pop %v818
      %v820 = vmul.f32 %v779, 1.442695
      %v821 = vpow.pop %v820
      %v822 = vmul.f32 %v780, 1.442695
      %v823 = vpow.pop %v822
      %v824 = vmul.f32 %v781, 1.442695
      %v825 = vpow.pop %v824
      %v826 = vmul.f32 %v782, 1.442695
      %v827 = vpow.pop %v826
      %v828 = vmul.f32 %v783, 1.442695
      %v829 = vpow.pop %v828
      %v830 = vmul.f32 %v784, 1.442695
      %v831 = vpow.pop %v830
      %v832 = vmul.f32 %v785, 1.442695
      %v833 = vpow.pop %v832
      %v834 = vmul.f32 %v786, 1.442695
      %v835 = vpow.pop %v834
      %v836 = vmul.f32 %v787, 1.442695
      %v837 = vpow.pop %v836
      %v838 = vmul.f32 %v788, 1.442695
      %v839 = vpow.pop %v838
      %v840 = vmul.f32 %v789, 1.442695
      %v841 = vpow.pop %v840
      %v842 = vmul.f32 %v790, 1.442695
      %v843 = vpow.pop %v842
      %v844 = vmul.f32 %v791, 1.442695
      %v845 = vpow.pop %v844
      %v846 = vmul.f32 %v792, 1.442695
      %v847 = vpow.pop %v846
      %v848 = vmul.f32 %v793, 1.442695
      %v849 = vpow.pop %v848
      %v850 = vmul.f32 %v794, 1.442695
      %v851 = vpow.pop %v850
      %v852 = vmul.f32 %v795, 1.442695
      %v853 = vpow.pop %v852
      %v854 = vmul.f32 %v796, 1.442695
      %v855 = vpow.pop %v854
      %v856 = vmul.f32 %v797, 1.442695
      %v857 = vpow.pop %v856
      %v858 = vmul.f32 %v798, 1.442695
      %v859 = vpow.pop %v858
      %v860 = vmul.f32 %v799, 1.442695
      %v861 = vpow.pop %v860
      %v862 = vmul.f32 %v800, 1.442695
      %v863 = vpow.pop %v862
      %v864 = vmul.f32 %v801, 1.442695
      %v865 = vpow.pop %v864
      %v866 = vadd.f32 %v803, %v805
      %867 = vadd.xlane.f32.xlu0 %v866
      %v868 = vpop.xlane.xlu0 %867
      %v869 = vadd.f32 %v807, %v809
      %870 = vadd.xlane.f32.xlu0 %v869
      %v871 = vpop.xlane.xlu0 %870
      %v872 = vadd.f32 %v811, %v813
      %873 = vadd.xlane.f32.xlu0 %v872
      %v874 = vpop.xlane.xlu0 %873
      %v875 = vadd.f32 %v815, %v817
      %876 = vadd.xlane.f32.xlu0 %v875
      %v877 = vpop.xlane.xlu0 %876
      %v878 = vadd.f32 %v819, %v821
      %879 = vadd.xlane.f32.xlu0 %v878
      %v880 = vpop.xlane.xlu0 %879
      %v881 = vadd.f32 %v823, %v825
      %882 = vadd.xlane.f32.xlu0 %v881
      %v883 = vpop.xlane.xlu0 %882
      %v884 = vadd.f32 %v827, %v829
      %885 = vadd.xlane.f32.xlu0 %v884
      %v886 = vpop.xlane.xlu0 %885
      %v887 = vadd.f32 %v831, %v833
      %888 = vadd.xlane.f32.xlu0 %v887
      %v889 = vpop.xlane.xlu0 %888
      %v890 = vadd.f32 %v835, %v837
      %891 = vadd.xlane.f32.xlu0 %v890
      %v892 = vpop.xlane.xlu0 %891
      %v893 = vadd.f32 %v839, %v841
      %894 = vadd.xlane.f32.xlu0 %v893
      %v895 = vpop.xlane.xlu0 %894
      %v896 = vadd.f32 %v843, %v845
      %897 = vadd.xlane.f32.xlu0 %v896
      %v898 = vpop.xlane.xlu0 %897
      %v899 = vadd.f32 %v847, %v849
      %900 = vadd.xlane.f32.xlu0 %v899
      %v901 = vpop.xlane.xlu0 %900
      %v902 = vadd.f32 %v851, %v853
      %903 = vadd.xlane.f32.xlu0 %v902
      %v904 = vpop.xlane.xlu0 %903
      %v905 = vadd.f32 %v855, %v857
      %906 = vadd.xlane.f32.xlu0 %v905
      %v907 = vpop.xlane.xlu0 %906
      %v908 = vadd.f32 %v859, %v861
      %909 = vadd.xlane.f32.xlu0 %v908
      %v910 = vpop.xlane.xlu0 %909
      %v911 = vadd.f32 %v863, %v865
      %912 = vadd.xlane.f32.xlu0 %v911
      %v913 = vpop.xlane.xlu0 %912
      %v914 = vrcp.pop %v868
      %v915 = vrcp.pop %v871
      %v916 = vrcp.pop %v874
      %v917 = vrcp.pop %v877
      %v918 = vrcp.pop %v880
      %v919 = vrcp.pop %v883
      %v920 = vrcp.pop %v886
      %v921 = vrcp.pop %v889
      %v922 = vrcp.pop %v892
      %v923 = vrcp.pop %v895
      %v924 = vrcp.pop %v898
      %v925 = vrcp.pop %v901
      %v926 = vrcp.pop %v904
      %v927 = vrcp.pop %v907
      %v928 = vrcp.pop %v910
      %v929 = vrcp.pop %v913
      %v930 = vmul.f32 %v803, %v914
      %v931 = vmul.f32 %v805, %v914
      %v932 = vmul.f32 %v807, %v915
      %v933 = vmul.f32 %v809, %v915
      %v934 = vmul.f32 %v811, %v916
      %v935 = vmul.f32 %v813, %v916
      %v936 = vmul.f32 %v815, %v917
      %v937 = vmul.f32 %v817, %v917
      %v938 = vmul.f32 %v819, %v918
      %v939 = vmul.f32 %v821, %v918
      %v940 = vmul.f32 %v823, %v919
      %v941 = vmul.f32 %v825, %v919
      %v942 = vmul.f32 %v827, %v920
      %v943 = vmul.f32 %v829, %v920
      %v944 = vmul.f32 %v831, %v921
      %v945 = vmul.f32 %v833, %v921
      %v946 = vmul.f32 %v835, %v922
      %v947 = vmul.f32 %v837, %v922
      %v948 = vmul.f32 %v839, %v923
      %v949 = vmul.f32 %v841, %v923
      %v950 = vmul.f32 %v843, %v924
      %v951 = vmul.f32 %v845, %v924
      %v952 = vmul.f32 %v847, %v925
      %v953 = vmul.f32 %v849, %v925
      %v954 = vmul.f32 %v851, %v926
      %v955 = vmul.f32 %v853, %v926
      %v956 = vmul.f32 %v855, %v927
      %v957 = vmul.f32 %v857, %v927
      %v958 = vmul.f32 %v859, %v928
      %v959 = vmul.f32 %v861, %v928
      %v960 = vmul.f32 %v863, %v929
      %v961 = vmul.f32 %v865, %v929
      %v962 = vpack.c.bf16 %v932, %v930
      %v963 = vpack.c.bf16 %v933, %v931
      %v964 = vpack.c.bf16 %v936, %v934
      %v965 = vpack.c.bf16 %v937, %v935
      %v966 = vpack.c.bf16 %v940, %v938
      %v967 = vpack.c.bf16 %v941, %v939
      %v968 = vpack.c.bf16 %v944, %v942
      %v969 = vpack.c.bf16 %v945, %v943
      %v970 = vpack.c.bf16 %v948, %v946
      %v971 = vpack.c.bf16 %v949, %v947
      %v972 = vpack.c.bf16 %v952, %v950
      %v973 = vpack.c.bf16 %v953, %v951
      %v974 = vpack.c.bf16 %v956, %v954
      %v975 = vpack.c.bf16 %v957, %v955
      %v976 = vpack.c.bf16 %v960, %v958
      %v977 = vpack.c.bf16 %v961, %v959
      %v978 = vld [vmem:[%s288] sm:$0xf]
      %v979 = vld [vmem:[%s288 + $0x4] sm:$0xf]
      %v980 = vld [vmem:[%s288 + $0x8] sm:$0xf]
      %v981 = vld [vmem:[%s288 + $0xc] sm:$0xf]
      %v982 = vld [vmem:[%s288 + $0x10] sm:$0xf]
      %v983 = vld [vmem:[%s288 + $0x14] sm:$0xf]
      %v984 = vld [vmem:[%s288 + $0x18] sm:$0xf]
      %v985 = vld [vmem:[%s288 + $0x1c] sm:$0xf]
      %v986 = vld [vmem:[%s288 + $0x20] sm:$0xf]
      %v987 = vld [vmem:[%s288 + $0x24] sm:$0xf]
      %v988 = vld [vmem:[%s288 + $0x28] sm:$0xf]
      %v989 = vld [vmem:[%s288 + $0x2c] sm:$0xf]
      %v990 = vld [vmem:[%s288 + $0x30] sm:$0xf]
      %v991 = vld [vmem:[%s288 + $0x34] sm:$0xf]
      %v992 = vld [vmem:[%s288 + $0x38] sm:$0xf]
      %v993 = vld [vmem:[%s288 + $0x3c] sm:$0xf]
      %v994 = vld [vmem:[%s288 + $0x40] sm:$0xf]
      %v995 = vld [vmem:[%s288 + $0x44] sm:$0xf]
      %v996 = vld [vmem:[%s288 + $0x48] sm:$0xf]
      %v997 = vld [vmem:[%s288 + $0x4c] sm:$0xf]
      %v998 = vld [vmem:[%s288 + $0x50] sm:$0xf]
      %v999 = vld [vmem:[%s288 + $0x54] sm:$0xf]
      %v1000 = vld [vmem:[%s288 + $0x58] sm:$0xf]
      %v1001 = vld [vmem:[%s288 + $0x5c] sm:$0xf]
      %v1002 = vld [vmem:[%s288 + $0x60] sm:$0xf]
      %v1003 = vld [vmem:[%s288 + $0x64] sm:$0xf]
      %v1004 = vld [vmem:[%s288 + $0x68] sm:$0xf]
      %v1005 = vld [vmem:[%s288 + $0x6c] sm:$0xf]
      %v1006 = vld [vmem:[%s288 + $0x70] sm:$0xf]
      %v1007 = vld [vmem:[%s288 + $0x74] sm:$0xf]
      %v1008 = vld [vmem:[%s288 + $0x78] sm:$0xf]
      %v1009 = vld [vmem:[%s288 + $0x7c] sm:$0xf]
      %v1042 = vunpack.c.l.b16 %v978
      %v1043 = vunpack.c.l.b16 %v979
      %v1044 = vunpack.c.l.b16 %v980
      %v1045 = vunpack.c.l.b16 %v981
      %v1046 = vunpack.c.l.b16 %v982
      %v1047 = vunpack.c.l.b16 %v983
      %v1048 = vunpack.c.l.b16 %v984
      %v1049 = vunpack.c.l.b16 %v985
      %v1050 = vunpack.c.l.b16 %v986
      %v1051 = vunpack.c.l.b16 %v987
      %v1052 = vunpack.c.l.b16 %v988
      %v1053 = vunpack.c.l.b16 %v989
      %v1054 = vunpack.c.l.b16 %v990
      %v1055 = vunpack.c.l.b16 %v991
      %v1056 = vunpack.c.l.b16 %v992
      %v1057 = vunpack.c.l.b16 %v993
      %v1058 = vunpack.c.l.b16 %v994
      %v1059 = vunpack.c.l.b16 %v995
      %v1060 = vunpack.c.l.b16 %v996
      %v1061 = vunpack.c.l.b16 %v997
      %v1062 = vunpack.c.l.b16 %v998
      %v1063 = vunpack.c.l.b16 %v999
      %v1064 = vunpack.c.l.b16 %v1000
      %v1065 = vunpack.c.l.b16 %v1001
      %v1066 = vunpack.c.l.b16 %v1002
      %v1067 = vunpack.c.l.b16 %v1003
      %v1068 = vunpack.c.l.b16 %v1004
      %v1069 = vunpack.c.l.b16 %v1005
      %v1070 = vunpack.c.l.b16 %v1006
      %v1071 = vunpack.c.l.b16 %v1007
      %v1072 = vunpack.c.l.b16 %v1008
      %v1073 = vunpack.c.l.b16 %v1009
      %v1074 = vpack.c.b16 %v1043, %v1042
      %v1075 = vpack.c.b16 %v1045, %v1044
      %v1076 = vpack.c.b16 %v1047, %v1046
      %v1077 = vpack.c.b16 %v1049, %v1048
      %v1078 = vpack.c.b16 %v1051, %v1050
      %v1079 = vpack.c.b16 %v1053, %v1052
      %v1080 = vpack.c.b16 %v1055, %v1054
      %v1081 = vpack.c.b16 %v1057, %v1056
      %v1082 = vpack.c.b16 %v1059, %v1058
      %v1083 = vpack.c.b16 %v1061, %v1060
      %v1084 = vpack.c.b16 %v1063, %v1062
      %v1085 = vpack.c.b16 %v1065, %v1064
      %v1086 = vpack.c.b16 %v1067, %v1066
      %v1087 = vpack.c.b16 %v1069, %v1068
      %v1088 = vpack.c.b16 %v1071, %v1070
      %v1089 = vpack.c.b16 %v1073, %v1072
      %1106 = vmatprep.subr.bf16.mxu0 0
      %1107 = vmatpush1.bf16.msra.mxu0 %v1074
      %1108 = vmatprep.subr.bf16.mxu0 0
      %1109 = vmatpush1.bf16.msra.mxu0 %v1075
      %1110 = vmatprep.subr.bf16.mxu0 0
      %1111 = vmatpush1.bf16.msra.mxu0 %v1076
      %1112 = vmatprep.subr.bf16.mxu0 0
      %1113 = vmatpush1.bf16.msra.mxu0 %v1077
      %1114 = vmatprep.subr.bf16.mxu0 0
      %1115 = vmatpush1.bf16.msra.mxu0 %v1078
      %1116 = vmatprep.subr.bf16.mxu0 0
      %1117 = vmatpush1.bf16.msra.mxu0 %v1079
      %1118 = vmatprep.subr.bf16.mxu0 0
      %1119 = vmatpush1.bf16.msra.mxu0 %v1080
      %1120 = vmatprep.subr.bf16.mxu0 0
      %1121 = vmatpush1.bf16.msra.mxu0 %v1081
      %1122 = vmatprep.subr.bf16.mxu0 0
      %1123 = vmatpush1.bf16.msra.mxu0 %v1082
      %1124 = vmatprep.subr.bf16.mxu0 0
      %1125 = vmatpush1.bf16.msra.mxu0 %v1083
      %1126 = vmatprep.subr.bf16.mxu0 0
      %1127 = vmatpush1.bf16.msra.mxu0 %v1084
      %1128 = vmatprep.subr.bf16.mxu0 0
      %1129 = vmatpush1.bf16.msra.mxu0 %v1085
      %1130 = vmatprep.subr.bf16.mxu0 0
      %1131 = vmatpush1.bf16.msra.mxu0 %v1086
      %1132 = vmatprep.subr.bf16.mxu0 0
      %1133 = vmatpush1.bf16.msra.mxu0 %v1087
      %1134 = vmatprep.subr.bf16.mxu0 0
      %1135 = vmatpush1.bf16.msra.mxu0 %v1088
      %1136 = vmatprep.subr.bf16.mxu0 0
      %1137 = vmatpush1.bf16.msra.mxu0 %v1089
      %1138 = vmatprep.mubr.bf16.mxu0 %v963
      %1139 = vmatmul.mubr.bf16.gmra.mrb[0].mxu0 %v962
      %v1140 = vpop.f32.mrb[0].mxu0
      %v1141 = vadd.f32 0.0, %v1140
      %v1142 = vpop.f32.mrb[0].mxu0
      %v1143 = vpop.f32.mrb[0].mxu0
      %v1144 = vadd.f32 0.0, %v1143
      %v1145 = vpop.f32.mrb[0].mxu0
      %1146 = vmatprep.mubr.bf16.mxu0 %v965
      %1147 = vmatmul.mubr.bf16.gmra.mrb[0].mxu0 %v964
      %v1148 = vpop.f32.mrb[0].mxu0
      %v1149 = vadd.f32 0.0, %v1148
      %v1150 = vpop.f32.mrb[0].mxu0
      %v1151 = vpop.f32.mrb[0].mxu0
      %v1152 = vadd.f32 0.0, %v1151
      %v1153 = vpop.f32.mrb[0].mxu0
      %1154 = vmatprep.mubr.bf16.mxu0 %v967
      %1155 = vmatmul.mubr.bf16.gmra.mrb[0].mxu0 %v966
      %v1156 = vpop.f32.mrb[0].mxu0
      %v1157 = vadd.f32 0.0, %v1156
      %v1158 = vpop.f32.mrb[0].mxu0
      %v1159 = vpop.f32.mrb[0].mxu0
      %v1160 = vadd.f32 0.0, %v1159
      %v1161 = vpop.f32.mrb[0].mxu0
      %1162 = vmatprep.mubr.bf16.mxu0 %v969
      %1163 = vmatmul.mubr.bf16.gmra.mrb[0].mxu0 %v968
      %v1164 = vpop.f32.mrb[0].mxu0
      %v1165 = vadd.f32 0.0, %v1164
      %v1166 = vpop.f32.mrb[0].mxu0
      %v1167 = vpop.f32.mrb[0].mxu0
      %v1168 = vadd.f32 0.0, %v1167
      %v1169 = vpop.f32.mrb[0].mxu0
      %1170 = vmatprep.mubr.bf16.mxu0 %v971
      %1171 = vmatmul.mubr.bf16.gmra.mrb[0].mxu0 %v970
      %v1172 = vpop.f32.mrb[0].mxu0
      %v1173 = vadd.f32 0.0, %v1172
      %v1174 = vpop.f32.mrb[0].mxu0
      %v1175 = vpop.f32.mrb[0].mxu0
      %v1176 = vadd.f32 0.0, %v1175
      %v1177 = vpop.f32.mrb[0].mxu0
      %1178 = vmatprep.mubr.bf16.mxu0 %v973
      %1179 = vmatmul.mubr.bf16.gmra.mrb[0].mxu0 %v972
      %v1180 = vpop.f32.mrb[0].mxu0
      %v1181 = vadd.f32 0.0, %v1180
      %v1182 = vpop.f32.mrb[0].mxu0
      %v1183 = vpop.f32.mrb[0].mxu0
      %v1184 = vadd.f32 0.0, %v1183
      %v1185 = vpop.f32.mrb[0].mxu0
      %1186 = vmatprep.mubr.bf16.mxu0 %v975
      %1187 = vmatmul.mubr.bf16.gmra.mrb[0].mxu0 %v974
      %v1188 = vpop.f32.mrb[0].mxu0
      %v1189 = vadd.f32 0.0, %v1188
      %v1190 = vpop.f32.mrb[0].mxu0
      %v1191 = vpop.f32.mrb[0].mxu0
      %v1192 = vadd.f32 0.0, %v1191
      %v1193 = vpop.f32.mrb[0].mxu0
      %1194 = vmatprep.mubr.bf16.mxu0 %v977
      %1195 = vmatmul.mubr.bf16.gmra.mrb[0].mxu0 %v976
      %v1196 = vpop.f32.mrb[0].mxu0
      %v1197 = vadd.f32 0.0, %v1196
      %v1198 = vpop.f32.mrb[0].mxu0
      %v1199 = vpop.f32.mrb[0].mxu0
      %v1200 = vadd.f32 0.0, %v1199
      %v1201 = vpop.f32.mrb[0].mxu0
      %1202 = vdwg.mxu0
      %vm1203 = vcmp.gt.f32.partialorder %v1141, 0.0
      %vm1204 = vcmp.gt.f32.partialorder %v1144, 0.0
      %vm1205 = vcmp.gt.f32.partialorder %v1149, 0.0
      %vm1206 = vcmp.gt.f32.partialorder %v1152, 0.0
      %vm1207 = vcmp.gt.f32.partialorder %v1157, 0.0
      %vm1208 = vcmp.gt.f32.partialorder %v1160, 0.0
      %vm1209 = vcmp.gt.f32.partialorder %v1165, 0.0
      %vm1210 = vcmp.gt.f32.partialorder %v1168, 0.0
      %vm1211 = vcmp.gt.f32.partialorder %v1173, 0.0
      %vm1212 = vcmp.gt.f32.partialorder %v1176, 0.0
      %vm1213 = vcmp.gt.f32.partialorder %v1181, 0.0
      %vm1214 = vcmp.gt.f32.partialorder %v1184, 0.0
      %vm1215 = vcmp.gt.f32.partialorder %v1189, 0.0
      %vm1216 = vcmp.gt.f32.partialorder %v1192, 0.0
      %vm1217 = vcmp.gt.f32.partialorder %v1197, 0.0
      %vm1218 = vcmp.gt.f32.partialorder %v1200, 0.0
      %v1219 = vmul.f32 %v1141, 1.442695
      %v1220 = vpow.pop %v1219
      %v1221 = vmul.f32 %v1144, 1.442695
      %v1222 = vpow.pop %v1221
      %v1223 = vmul.f32 %v1149, 1.442695
      %v1224 = vpow.pop %v1223
      %v1225 = vmul.f32 %v1152, 1.442695
      %v1226 = vpow.pop %v1225
      %v1227 = vmul.f32 %v1157, 1.442695
      %v1228 = vpow.pop %v1227
      %v1229 = vmul.f32 %v1160, 1.442695
      %v1230 = vpow.pop %v1229
      %v1231 = vmul.f32 %v1165, 1.442695
      %v1232 = vpow.pop %v1231
      %v1233 = vmul.f32 %v1168, 1.442695
      %v1234 = vpow.pop %v1233
      %v1235 = vmul.f32 %v1173, 1.442695
      %v1236 = vpow.pop %v1235
      %v1237 = vmul.f32 %v1176, 1.442695
      %v1238 = vpow.pop %v1237
      %v1239 = vmul.f32 %v1181, 1.442695
      %v1240 = vpow.pop %v1239
      %v1241 = vmul.f32 %v1184, 1.442695
      %v1242 = vpow.pop %v1241
      %v1243 = vmul.f32 %v1189, 1.442695
      %v1244 = vpow.pop %v1243
      %v1245 = vmul.f32 %v1192, 1.442695
      %v1246 = vpow.pop %v1245
      %v1247 = vmul.f32 %v1197, 1.442695
      %v1248 = vpow.pop %v1247
      %v1249 = vmul.f32 %v1200, 1.442695
      %v1250 = vpow.pop %v1249
      %v1251 = vsub.f32 %v1220, 1.0
      %v1252 = vsub.f32 %v1222, 1.0
      %v1253 = vsub.f32 %v1224, 1.0
      %v1254 = vsub.f32 %v1226, 1.0
      %v1255 = vsub.f32 %v1228, 1.0
      %v1256 = vsub.f32 %v1230, 1.0
      %v1257 = vsub.f32 %v1232, 1.0
      %v1258 = vsub.f32 %v1234, 1.0
      %v1259 = vsub.f32 %v1236, 1.0
      %v1260 = vsub.f32 %v1238, 1.0
      %v1261 = vsub.f32 %v1240, 1.0
      %v1262 = vsub.f32 %v1242, 1.0
      %v1263 = vsub.f32 %v1244, 1.0
      %v1264 = vsub.f32 %v1246, 1.0
      %v1265 = vsub.f32 %v1248, 1.0
      %v1266 = vsub.f32 %v1250, 1.0
      %v1267 = vsel %vm1203, %v1141, %v1251
      %v1268 = vsel %vm1204, %v1144, %v1252
      %v1269 = vsel %vm1205, %v1149, %v1253
      %v1270 = vsel %vm1206, %v1152, %v1254
      %v1271 = vsel %vm1207, %v1157, %v1255
      %v1272 = vsel %vm1208, %v1160, %v1256
      %v1273 = vsel %vm1209, %v1165, %v1257
      %v1274 = vsel %vm1210, %v1168, %v1258
      %v1275 = vsel %vm1211, %v1173, %v1259
      %v1276 = vsel %vm1212, %v1176, %v1260
      %v1277 = vsel %vm1213, %v1181, %v1261
      %v1278 = vsel %vm1214, %v1184, %v1262
      %v1279 = vsel %vm1215, %v1189, %v1263
      %v1280 = vsel %vm1216, %v1192, %v1264
      %v1281 = vsel %vm1217, %v1197, %v1265
      %v1282 = vsel %vm1218, %v1200, %v1266
      %vm1283 = vcmask 64512
      %1284 = vst.msk [vmem:[%s297] sm:$0xff] %vm1283, %v1267
      %1285 = vst.msk [vmem:[%s297 + $0x8] sm:$0xff] %vm1283, %v1268
      %1286 = vst.msk [vmem:[%s297 + $0x10] sm:$0xff] %vm1283, %v1269
      %1287 = vst.msk [vmem:[%s297 + $0x18] sm:$0xff] %vm1283, %v1270
      %1288 = vst.msk [vmem:[%s297 + $0x20] sm:$0xff] %vm1283, %v1271
      %1289 = vst.msk [vmem:[%s297 + $0x28] sm:$0xff] %vm1283, %v1272
      %1290 = vst.msk [vmem:[%s297 + $0x30] sm:$0xff] %vm1283, %v1273
      %1291 = vst.msk [vmem:[%s297 + $0x38] sm:$0xff] %vm1283, %v1274
      %1292 = vst.msk [vmem:[%s297 + $0x40] sm:$0xff] %vm1283, %v1275
      %1293 = vst.msk [vmem:[%s297 + $0x48] sm:$0xff] %vm1283, %v1276
      %1294 = vst.msk [vmem:[%s297 + $0x50] sm:$0xff] %vm1283, %v1277
      %1295 = vst.msk [vmem:[%s297 + $0x58] sm:$0xff] %vm1283, %v1278
      %1296 = vst.msk [vmem:[%s297 + $0x60] sm:$0xff] %vm1283, %v1279
      %1297 = vst.msk [vmem:[%s297 + $0x68] sm:$0xff] %vm1283, %v1280
      %1298 = vst.msk [vmem:[%s297 + $0x70] sm:$0xff] %vm1283, %v1281
      %1299 = vst.msk [vmem:[%s297 + $0x78] sm:$0xff] %vm1283, %v1282
      %s1300 = smul.u32 16, %s19
      %p1301 = scmp.lt.s32.totalorder %s20, 0
      %s1302 = scalar_select %p1301, %s20, 0
      %p1303 = scmp.lt.s32.totalorder %s1300, 31
      %s1304 = scalar_select %p1303, %s1300, 31
      %s1305 = smul.addr %s1302, 32
      %s1306 = sadd.s32 %s1304, %s1305
      %s1307 = smul.addr %s1306, 8
      %s1308 = scalar_lea.vmem %s4, %s1307
      // Predicated region
      $region37: #{gat_forward.7} parent=35 // pred_check
        %p1309 = pneg %p153
      $region38: #{gat_forward.7} parent=35 // pred_check_branch
        %1311 = sbr.rel (%p1309) target = $region40
      $region39: #{gat_forward.7} parent=35 // pred_region
        %s1312 = smul.u32 16, %s19
      $region40: #{gat_forward.7} parent=35 // pred_fallthru
        _
    $region36: #{gat_forward.7} parent=5 // pred_fallthru
      _
    %p1313 = scmp.le.s32.totalorder 2, %s10
    // Predicated region
    $region41: #{gat_forward.7} parent=5 // pred_check
      %p1314 = pneg %p1313
    $region42: #{gat_forward.7} parent=5 // pred_check_branch
      %1316 = sbr.rel (%p1314) target = $region44
    $region43: #{gat_forward.7} parent=5 // pred_region
      %s1317 = ssub.s32 %s10, 2
      // Predicated region
      $region45: #{gat_forward.7} parent=43 // pred_check
        %p1318 = pneg %p159
      $region46: #{gat_forward.7} parent=43 // pred_check_branch
        %1320 = sbr.rel (%p1318) target = $region48
      $region47: #{gat_forward.7} parent=43 // pred_region
        %s1321 = smul.u32 16, %s21
        %p1322 = scmp.lt.s32.totalorder %s22, 0
        %s1323 = scalar_select %p1322, %s22, 0
        %p1324 = scmp.lt.s32.totalorder %s1321, 31
        %s1325 = scalar_select %p1324, %s1321, 31
        %s1326 = smul.addr %s1323, 32
        %s1327 = sadd.s32 %s1325, %s1326
        %s1328 = smul.addr %s1327, 8
        %s1329 = scalar_lea.vmem %s4, %s1328
      $region48: #{gat_forward.7} parent=43 // pred_fallthru
        _
    $region44: #{gat_forward.7} parent=5 // pred_fallthru
      _
  $region6: #{gat_forward.7} parent=0 // loop_footer
    %s14 = sadd.s32 1, %s10
  $region7: #{gat_forward.7} parent=0 // loop_footer_branch
    %9 = sbr.rel target = $region3
  $region8: #{gat_forward.7} parent=0 // loop_exit
    _

</llo_original>
